<compile_context>
chip_gen: v5e
topology: v5e:2x2
jax: 0.10.0
libtpu: 0.0.40
codegen_flags: <defaults>
</compile_context>

<pallas_src>
import functools

import jax
import jax.numpy as jnp
import numpy as np
from jax.experimental import pallas as pl
from jax.experimental.pallas import tpu as pltpu

DILATIONS = (1, 6, 12, 18)
KVOL = 27          # 3*3*3 kernel volume
LANE = 128
MAX_TILE_P = 2048  # grid-step-count cap; the VMEM budget may lower it further


# --------------------------------------------------------------------------- kernel
def aspp_kernel(taps_ref, w_ref, b_ref, out_ref):
    """One (batch, spatial-tile) step:  out = b_eff + W_fused @ taps.

    taps_ref: (TC, tile_p) bf16   im2col taps of the zero-padded input (TC = 27*n_dil*C)
    w_ref   : (C, TC)      bf16   fused (dilated-conv x 1x1-conv) weights (resident)
    b_ref   : (C, 1)       f32    per-batch effective bias (incl. GAP branch)
    out_ref : (C, tile_p)  f32
    """
    out_ref[...] = (
        jnp.dot(w_ref[...], taps_ref[...], preferred_element_type=jnp.float32)
        + b_ref[...]
    ).astype(out_ref.dtype)


# --------------------------------------------------------------------------- helpers
def _round_up(v, m):
    return (v + m - 1) // m * m


def _vmem_capacity_bytes():
    try:
        return int(pltpu.get_tpu_info().vmem_capacity_bytes)
    except Exception:
        return 64 << 20  # conservative (v7x per-TensorCore)


def _plan_vmem(p_pad, tc, c):
    """Pick (tile_p, vmem_limit) from this generation's physical VMEM.

    Charges everything resident: single-buffered bf16 fused weights, f32 bias, and the
    double-buffered bf16 taps / f32 out blocks.  Raises (instead of silently clamping
    the vmem limit below what is needed) when the resident weights leave no room for
    even a minimal 128-wide spatial tile.
    """
    cap = _vmem_capacity_bytes()
    budget = (cap * 3) // 4                       # headroom for Mosaic internal scratch
    resident = tc * c * 2 + 4 * c * 4             # bf16 w_big (single-buffered) + f32 bias
    per_col = 2 * (tc * 2) + 2 * (c * 4)          # 2x taps (bf16) + 2x out (f32) per column
    avail = budget - resident
    if avail < per_col * LANE:
        # TODO(synk): K-split over dilation groups (reduction grid axis) instead of raising.
        raise ValueError(
            f"ASPP fused weight ({resident / 2**20:.1f} MiB) too large for "
            f"{cap / 2**20:.0f} MiB VMEM; K-splitting not implemented.")
    max_cols = min(avail // per_col, MAX_TILE_P, p_pad)
    tile_p = LANE
    k = LANE
    while k <= max_cols:                          # largest multiple of 128 dividing p_pad
        if p_pad % k == 0:
            tile_p = k
        k += LANE
    needed = resident + per_col * tile_p + (2 << 20)
    if needed > cap:                              # defensive; unreachable by construction
        raise ValueError("VMEM plan exceeds physical capacity; reduce tile size.")
    vmem_limit = int(min(max(needed, 16 << 20), cap))
    return tile_p, vmem_limit


def _build_taps(x, dilations, p_pad):
    """im2col: shifted, spatially-flattened bf16 copies of x, zero-padded per dilation.

    Returns (N, 27*n_dil*C, p_pad); row (g*27 + t)*C + i holds channel i of tap
    t = kd*9 + kh*3 + kw of dilation group g (matches the fused-weight column order)."""
    N, C, D, H, W = x.shape
    P = D * H * W
    xb = x.astype(jnp.bfloat16)
    taps = []
    for d in dilations:                       # per-dilation padding (not maxd for all)
        xp = jnp.pad(xb, ((0, 0), (0, 0), (d, d), (d, d), (d, d)))
        for kd in range(3):
            for kh in range(3):
                for kw in range(3):
                    sl = xp[:, :, kd * d:kd * d + D, kh * d:kh * d + H, kw * d:kw * d + W]
                    taps.append(sl.reshape(N, C, P))
    t = jnp.concatenate(taps, axis=1)         # (N, TC, P), written once
    if p_pad > P:                             # at most 127 zero columns
        t = jnp.pad(t, ((0, 0), (0, 0), (0, p_pad - P)))
    return t


def _fuse_params(conv_ws, conv_bs, w1, b1, gap, dilations):
    """Fold the 1x1x1 conv (and the GAP branch) into the dilated-conv weights."""
    C = conv_ws[0].shape[0]
    n_dil = len(dilations)
    hi = jax.lax.Precision.HIGHEST

    cols = []
    b_eff = b1.astype(jnp.float32)
    for g in range(n_dil):
        w1g = w1[:, (g + 1) * C:(g + 2) * C]                            # (C_out, C_mid)
        wt = jnp.transpose(conv_ws[g], (2, 3, 4, 0, 1)).reshape(KVOL, C, C)
        fused = jnp.einsum('om,tmi->toi', w1g, wt, precision=hi)        # (27, C, C)
        cols.append(jnp.transpose(fused, (1, 0, 2)).reshape(C, KVOL * C))
        b_eff = b_eff + jnp.einsum('om,m->o', w1g, conv_bs[g], precision=hi)
    w_big = jnp.concatenate(cols, axis=1)                                # (C, 27*n_dil*C)

    # GAP branch: trilinear upsample of a 1x1x1 volume is a pure broadcast, so through the
    # 1x1x1 conv it only contributes a per-batch (C,) bias.
    bias_n = b_eff[None, :] + jnp.einsum('om,nm->no', w1[:, :C], gap, precision=hi)
    return w_big.astype(jnp.bfloat16), bias_n[:, :, None].astype(jnp.float32)


# --------------------------------------------------------------------------- wrapper
@functools.partial(jax.jit, static_argnames=("dilations",))
def aspp_pallas(x, conv_ws, conv_bs, w1, b1, dilations=DILATIONS):
    N, C, D, H, W = x.shape
    P = D * H * W
    n_dil = len(dilations)
    TC = KVOL * n_dil * C

    p_pad = _round_up(P, LANE)                 # pad only to the lane width, not to tile_p
    tile_p, vmem_limit = _plan_vmem(p_pad, TC, C)

    gap = jnp.mean(x, axis=(2, 3, 4))                                   # (N, C)
    w_big, bias_n = _fuse_params(conv_ws, conv_bs, w1, b1, gap, dilations)
    taps = _build_taps(x, dilations, p_pad)                             # (N, TC, p_pad) bf16

    out = pl.pallas_call(
        aspp_kernel,
        out_shape=jax.ShapeDtypeStruct((N, C, p_pad), jnp.float32),
        grid=(N, p_pad // tile_p),
        in_specs=[
            pl.BlockSpec((None, TC, tile_p), lambda n, p: (n, 0, p)),
            # Grid-invariant fused weight: keep a single resident VMEM buffer.
            pl.BlockSpec((C, TC), lambda n, p: (0, 0), pipeline_mode=pl.Buffered(1)),
            pl.BlockSpec((None, C, 1), lambda n, p: (n, 0, 0)),
        ],
        out_specs=pl.BlockSpec((None, C, tile_p), lambda n, p: (n, 0, p)),
        compiler_params=pltpu.CompilerParams(
            dimension_semantics=("parallel", "parallel"),
            vmem_limit_bytes=vmem_limit),
    )(taps, w_big, bias_n)

    return out[:, :, :P].reshape(N, C, D, H, W)


# --------------------------------------------------------------------------- reference
def aspp_reference(x, conv_ws, conv_bs, w1, b1, dilations=DILATIONS):
    """Pure-JAX f32 reference matching the PyTorch forward pass (NCDHW)."""
    N, C, D, H, W = x.shape
    gap = jnp.mean(x, axis=(2, 3, 4), keepdims=True)
    feats = [jnp.broadcast_to(gap, x.shape)]   # trilinear upsample of 1x1x1 == broadcast
    for w, b, d in zip(conv_ws, conv_bs, dilations):
        y = jax.lax.conv_general_dilated(
            x, w, window_strides=(1, 1, 1), padding=[(d, d)] * 3,
            rhs_dilation=(d, d, d),
            dimension_numbers=('NCDHW', 'OIDHW', 'NCDHW'),
            precision=jax.lax.Precision.HIGHEST)
        feats.append(y + b.reshape(1, C, 1, 1, 1))
    cat = jnp.concatenate(feats, axis=1)       # (N, 5C, D, H, W)
    out = jnp.einsum('oc,ncdhw->nodhw', w1, cat, precision=jax.lax.Precision.HIGHEST)
    return out + b1.reshape(1, C, 1, 1, 1)


# --------------------------------------------------------------------------- main
if __name__ == "__main__":
    # P = 16*16*12 = 3072 (already 128-aligned, zero padding) -> two 1536-wide spatial
    # tiles per batch, exercising the multi-tile / multi-batch grid.
    N, C, D, H, W = 2, 4, 16, 16, 12
    key = jax.random.PRNGKey(0)
    k_x, *k_p = jax.random.split(key, 1 + 2 * len(DILATIONS) + 2)

    x = jax.random.normal(k_x, (N, C, D, H, W), jnp.float32)

    # Deterministic parameter init (PyTorch-style fan-in uniform bounds).
    conv_ws, conv_bs = [], []
    bound = 1.0 / np.sqrt(C * KVOL)
    for i in range(len(DILATIONS)):
        conv_ws.append(jax.random.uniform(k_p[2 * i], (C, C, 3, 3, 3), jnp.float32,
                                          -bound, bound))
        conv_bs.append(jax.random.uniform(k_p[2 * i + 1], (C,), jnp.float32,
                                          -bound, bound))
    bound1 = 1.0 / np.sqrt(C * (1 + len(DILATIONS)))
    w1 = jax.random.uniform(k_p[-2], (C, C * (1 + len(DILATIONS))), jnp.float32,
                            -bound1, bound1)
    b1 = jax.random.uniform(k_p[-1], (C,), jnp.float32, -bound1, bound1)

    out = aspp_pallas(x, conv_ws, conv_bs, w1, b1)
    jax.block_until_ready(out)

    ref = aspp_reference(x, conv_ws, conv_bs, w1, b1)
    # Loose tolerance to cover bf16 taps/weights (f32 accumulation) on the MXU.
    np.testing.assert_allclose(np.asarray(out), np.asarray(ref), rtol=2e-2, atol=2e-2)

    print("KERNEL_OK")
</pallas_src>

<mosaic_0001>
module attributes {stable_mosaic.version = 11 : i64} {
  func.func @aspp_kernel(%arg0: i32, %arg1: i32, %arg2: memref<1x432x1536xbf16, #tpu.memory_space<vmem>>, %arg3: memref<4x432xbf16, #tpu.memory_space<vmem>>, %arg4: memref<1x4x1xf32, #tpu.memory_space<vmem>>, %arg5: memref<1x4x1536xf32, #tpu.memory_space<vmem>>) attributes {dimension_semantics = [#tpu.dimension_semantics<parallel>, #tpu.dimension_semantics<parallel>], iteration_bounds = array<i64: 2, 2>, scalar_prefetch = 0 : i64, scratch_operands = 0 : i64, tpu.core_type = #tpu.core_type<tc>, window_params = [{transform_indices = @transform_0, window_bounds = array<i64: 1, 432, 1536>}, {pipeline_mode = #tpu.pipeline_mode<synchronous>, transform_indices = @transform_1, window_bounds = array<i64: 4, 432>}, {transform_indices = @transform_2, window_bounds = array<i64: 1, 4, 1>}, {transform_indices = @transform_3, window_bounds = array<i64: 1, 4, 1536>}]} {
    %c0 = arith.constant 0 : index
    %c0_0 = arith.constant 0 : index
    %0 = vector.load %arg3[%c0, %c0_0] : memref<4x432xbf16, #tpu.memory_space<vmem>>, vector<4x432xbf16>
    %c0_1 = arith.constant 0 : index
    %c0_2 = arith.constant 0 : index
    %c0_3 = arith.constant 0 : index
    %1 = vector.load %arg2[%c0_1, %c0_2, %c0_3] : memref<1x432x1536xbf16, #tpu.memory_space<vmem>>, vector<1x432x1536xbf16>
    %2 = vector.shape_cast %1 : vector<1x432x1536xbf16> to vector<432x1536xbf16>
    %cst = arith.constant dense<0.000000e+00> : vector<4x1536xf32>
    %3 = tpu.matmul %0, %2, %cst {dimension_numbers = #tpu.dot_dimension_numbers<[1], [0], [0], [1], [0, 0, 1, 1], [], []>} : vector<4x432xbf16>, vector<432x1536xbf16>, vector<4x1536xf32> -> vector<4x1536xf32>
    %c0_4 = arith.constant 0 : index
    %c0_5 = arith.constant 0 : index
    %c0_6 = arith.constant 0 : index
    %4 = vector.load %arg4[%c0_4, %c0_5, %c0_6] : memref<1x4x1xf32, #tpu.memory_space<vmem>>, vector<1x4x1xf32>
    %5 = vector.shape_cast %4 : vector<1x4x1xf32> to vector<4x1xf32>
    %6 = vector.broadcast %5 : vector<4x1xf32> to vector<4x1536xf32>
    %7 = arith.addf %3, %6 : vector<4x1536xf32>
    %c0_7 = arith.constant 0 : index
    %c0_8 = arith.constant 0 : index
    %c0_9 = arith.constant 0 : index
    %8 = vector.load %arg5[%c0_7, %c0_8, %c0_9] : memref<1x4x1536xf32, #tpu.memory_space<vmem>>, vector<1x4x1536xf32>
    %9 = vector.shape_cast %8 : vector<1x4x1536xf32> to vector<4x1536xf32>
    %10 = vector.shape_cast %7 : vector<4x1536xf32> to vector<1x4x1536xf32>
    tpu.vector_store %arg5[%c0_7, %c0_8, %c0_9], %10 {strides = array<i32>} : memref<1x4x1536xf32, #tpu.memory_space<vmem>>, vector<1x4x1536xf32>,
    return
  }
  func.func @transform_0(%arg0: i32, %arg1: i32) -> (i32, i32, i32) {
    %c0_i32 = arith.constant 0 : i32
    %c0_i32_0 = arith.constant 0 : i32
    return %arg0, %c0_i32, %arg1 : i32, i32, i32
  }
  func.func @transform_1(%arg0: i32, %arg1: i32) -> (i32, i32) {
    %c0_i32 = arith.constant 0 : i32
    %c0_i32_0 = arith.constant 0 : i32
    %c0_i32_1 = arith.constant 0 : i32
    return %c0_i32, %c0_i32_0 : i32, i32
  }
  func.func @transform_2(%arg0: i32, %arg1: i32) -> (i32, i32, i32) {
    %c0_i32 = arith.constant 0 : i32
    %c0_i32_0 = arith.constant 0 : i32
    %c0_i32_1 = arith.constant 0 : i32
    return %arg0, %c0_i32, %c0_i32_0 : i32, i32, i32
  }
  func.func @transform_3(%arg0: i32, %arg1: i32) -> (i32, i32, i32) {
    %c0_i32 = arith.constant 0 : i32
    %c0_i32_0 = arith.constant 0 : i32
    return %arg0, %c0_i32, %arg1 : i32, i32, i32
  }
}

</mosaic_0001>

<llo_original>
// kernel: aspp_pallas.1
$region0: #{aspp_pallas.1}
  #allocation0 [shape = 'u32[]', space=smem, size = 0x4, offset = 0x4, fixed_abs, tag = 'smem constant byte address 0x4 - core index']
  #allocation1 [shape = 'u32[72,128]{1,0:T(1,128)}', space=vmem, size = 0x9000, scoped, tag = 'internal scratch']
  %s0 = inlined_call_operand.vmem [shape: bf16[2,432,3072], index: 0, kind: input, shape index: {}]
  %s1 = inlined_call_operand.vmem [shape: bf16[4,432], index: 1, kind: input, shape index: {}]
  %s2 = inlined_call_operand.vmem [shape: f32[2,4,1], index: 2, kind: input, shape index: {}]
  %s3 = inlined_call_operand.vmem [shape: f32[2,4,3072], index: 3, kind: output, shape index: {}]
  %s4 = sld [smem:[#allocation0]]
  $region68: #{aspp_pallas.1} parent=0
    _
  %s6 = ssub.s32 1, %s4
  %s7 = scalar_select 0, %s6, %s4
  $region1: #{aspp_pallas.1} parent=0
    #allocation2 [shape = 'u8[2654208]{0}', space=vmem, size = 0x288000, scoped, tag = 'input window, operand 0']
    loop: start=0, step=1, limit=6
    $region2: #{aspp_pallas.1} parent=1 // loop_pre_header
      _
    $region3: #{aspp_pallas.1} parent=1 // loop_header
      %s9 = sphi 0, %s13
      %p10 = scmp.ge.s32.totalorder %s9, 6
      %s16 = sphi 0, %s28
      %s17 = sphi 0, %s24
      %s18 = sphi 0, %s16
      %s19 = sphi 0, %s17
      %s20 = sphi 0, %s18
      %s21 = sphi 0, %s19
      %s33 = sphi 0, %s35
      %s36 = sphi 0, %s33
      %s37 = sphi 0, %s36
      %s53 = sphi 0, %s37
      %s57 = sphi 0, %s57
      %s59 = sphi 0, %s57
      %s60 = sphi 0, %s59
      %s74 = sphi 0, %s60
      %s80 = sphi 0, %s82
      %s83 = sphi 0, %s80
      %s84 = sphi 0, %s83
      %s100 = sphi 0, %s84
      %s108 = sphi 0, %s110
      %s111 = sphi 0, %s108
      %s112 = sphi 0, %s111
      %s128 = sphi 0, %s112
    $region4: #{aspp_pallas.1} parent=1 // loop_header_branch
      %12 = sbr.rel (%p10) target = $region8
    $region5: #{aspp_pallas.1} parent=1 // loop_body
      %s14 = ssub.s32 %s9, 1
      %s15 = ssub.s32 %s9, 2
      %s22 = sadd.s32 1, %s17
      %p23 = scmp.ge.s32.totalorder %s22, 2
      %s24 = scalar_select %p23, 0, %s22
      %s25 = sadd.s32 1, %s16
      %s26 = scalar_select %p23, %s25, %s16
      %p27 = scmp.ge.s32.totalorder %s26, 2
      %s28 = scalar_select %p27, 0, %s26
      %s29 = ssub.s32 %s16, %s28
      %s30 = ssub.s32 %s17, %s24
      %s31 = sor.u32 %s29, %s30
      %p32 = scmp.eq.s32.totalorder %s31, 0
      %s34 = sadd.s32 %s33, 1
      %s35 = scalar_select %p32, %s33, %s34
      %p38 = pneg %p32
      %p39 = scmp.eq.s32.totalorder %s9, 3
      %p40 = por %p38, %p39
      %p41 = scmp.ne.s32.totalorder %s33, %s36
      %p42 = scmp.eq.s32.totalorder %s9, 0
      %p43 = por %p41, %p42
      %p44 = scmp.ne.s32.totalorder %s33, %s36
      %p45 = scmp.eq.s32.totalorder %s14, 3
      %p46 = por %p44, %p45
      %p47 = scmp.ne.s32.totalorder %s36, %s37
      %p48 = scmp.eq.s32.totalorder %s14, 0
      %p49 = por %p47, %p48
      %p50 = scmp.ne.s32.totalorder %s36, %s37
      %p51 = scmp.eq.s32.totalorder %s15, 3
      %p52 = por %p50, %p51
      %p54 = scmp.ne.s32.totalorder %s37, %s53
      %p55 = scmp.eq.s32.totalorder %s15, 0
      %p56 = por %p54, %p55
      %s58 = sadd.s32 %s57, 1
      %p61 = scmp.eq.s32.totalorder %s9, 3
      %p62 = scmp.ne.s32.totalorder %s57, %s59
      %p63 = scmp.eq.s32.totalorder %s9, 0
      %p64 = por %p62, %p63
      %p65 = scmp.ne.s32.totalorder %s57, %s59
      %p66 = scmp.eq.s32.totalorder %s14, 3
      %p67 = por %p65, %p66
      %p68 = scmp.ne.s32.totalorder %s59, %s60
      %p69 = scmp.eq.s32.totalorder %s14, 0
      %p70 = por %p68, %p69
      %p71 = scmp.ne.s32.totalorder %s59, %s60
      %p72 = scmp.eq.s32.totalorder %s15, 3
      %p73 = por %p71, %p72
      %p75 = scmp.ne.s32.totalorder %s60, %s74
      %p76 = scmp.eq.s32.totalorder %s15, 0
      %p77 = por %p75, %p76
      %s78 = ssub.s32 %s16, %s28
      %p79 = scmp.eq.s32.totalorder %s78, 0
      %s81 = sadd.s32 %s80, 1
      %s82 = scalar_select %p79, %s80, %s81
      %p85 = pneg %p79
      %p86 = scmp.eq.s32.totalorder %s9, 3
      %p87 = por %p85, %p86
      %p88 = scmp.ne.s32.totalorder %s80, %s83
      %p89 = scmp.eq.s32.totalorder %s9, 0
      %p90 = por %p88, %p89
      %p91 = scmp.ne.s32.totalorder %s80, %s83
      %p92 = scmp.eq.s32.totalorder %s14, 3
      %p93 = por %p91, %p92
      %p94 = scmp.ne.s32.totalorder %s83, %s84
      %p95 = scmp.eq.s32.totalorder %s14, 0
      %p96 = por %p94, %p95
      %p97 = scmp.ne.s32.totalorder %s83, %s84
      %p98 = scmp.eq.s32.totalorder %s15, 3
      %p99 = por %p97, %p98
      %p101 = scmp.ne.s32.totalorder %s84, %s100
      %p102 = scmp.eq.s32.totalorder %s15, 0
      %p103 = por %p101, %p102
      %s104 = ssub.s32 %s16, %s28
      %s105 = ssub.s32 %s17, %s24
      %s106 = sor.u32 %s104, %s105
      %p107 = scmp.eq.s32.totalorder %s106, 0
      %s109 = sadd.s32 %s108, 1
      %s110 = scalar_select %p107, %s108, %s109
      %p113 = pneg %p107
      %p114 = scmp.eq.s32.totalorder %s9, 3
      %p115 = por %p113, %p114
      %p116 = scmp.ne.s32.totalorder %s108, %s111
      %p117 = scmp.eq.s32.totalorder %s9, 0
      %p118 = por %p116, %p117
      %p119 = scmp.ne.s32.totalorder %s108, %s111
      %p120 = scmp.eq.s32.totalorder %s14, 3
      %p121 = por %p119, %p120
      %p122 = scmp.ne.s32.totalorder %s111, %s112
      %p123 = scmp.eq.s32.totalorder %s14, 0
      %p124 = por %p122, %p123
      %p125 = scmp.ne.s32.totalorder %s111, %s112
      %p126 = scmp.eq.s32.totalorder %s15, 3
      %p127 = por %p125, %p126
      %p129 = scmp.ne.s32.totalorder %s112, %s128
      %p130 = scmp.eq.s32.totalorder %s15, 0
      %p131 = por %p129, %p130
      %p132 = scmp.le.s32.totalorder 1, %s9
      %p133 = scmp.lt.s32.totalorder %s9, 5
      %p134 = pnand %p132, %p133
      %p135 = pneg %p134
      // Predicated region
      $region9: #{aspp_pallas.1} parent=5 // pred_check
        _
      $region10: #{aspp_pallas.1} parent=5 // pred_check_branch
        %137 = sbr.rel (%p134) target = $region12
      $region11: #{aspp_pallas.1} parent=5 // pred_region
        %s138 = ssub.s32 %s9, 1
        // Predicated region
        $region13: #{aspp_pallas.1} parent=11 // pred_check
          %p139 = pneg %p70
        $region14: #{aspp_pallas.1} parent=11 // pred_check_branch
          %141 = sbr.rel (%p139) target = $region16
        $region15: #{aspp_pallas.1} parent=11 // pred_region
          _
        $region16: #{aspp_pallas.1} parent=11 // pred_fallthru
          _
      $region12: #{aspp_pallas.1} parent=5 // pred_fallthru
        _
      %p142 = scmp.lt.s32.totalorder %s9, 4
      // Predicated region
      $region17: #{aspp_pallas.1} parent=5 // pred_check
        %p143 = pneg %p142
      $region18: #{aspp_pallas.1} parent=5 // pred_check_branch
        %145 = sbr.rel (%p143) target = $region20
      $region19: #{aspp_pallas.1} parent=5 // pred_region
        // Predicated region
        $region21: #{aspp_pallas.1} parent=19 // pred_check
          %p146 = pneg %p43
        $region22: #{aspp_pallas.1} parent=19 // pred_check_branch
          %148 = sbr.rel (%p146) target = $region24
        $region23: #{aspp_pallas.1} parent=19 // pred_region
          %s149 = sand.u32 %s33, 1
          %s150 = sand.u32 %s33, 1
          %s151 = smul.addr %s150, 2592
          %s152 = scalar_lea.vmem [#allocation2], %s151
          %s153 = smul.u32 12, %s17
          %s154 = smul.addr %s16, 1296
          %s155 = sadd.s32 %s153, %s154
          %s156 = smul.addr %s155, 4
          %s157 = scalar_lea.vmem %s0, %s156
          // Predicated region
          $region25: #{aspp_pallas.1} parent=23 // pred_check
            _
          $region26: #{aspp_pallas.1} parent=23 // pred_check_branch
            %159 = sbr.rel (0) target = $region28
          $region27: #{aspp_pallas.1} parent=23 // pred_region
            // Predicated region
            $region29: #{aspp_pallas.1} parent=27 // pred_check
              _
            $region30: #{aspp_pallas.1} parent=27 // pred_check_branch
              %161 = sbr.rel (0) target = $region32
            $region31: #{aspp_pallas.1} parent=27 // pred_region
              loop: start=0, step=1, limit=1
              $region33: #{aspp_pallas.1} parent=31 // loop_pre_header
                _
              $region34: #{aspp_pallas.1} parent=31 // loop_header
                %s163 = sphi 0, %s167
                %p164 = scmp.ge.s32.totalorder %s163, 1
                %s168 = sphi %s157, %s157
                %s169 = sphi %s152, %s152
              $region35: #{aspp_pallas.1} parent=31 // loop_header_branch
                %166 = sbr.rel (%p164) target = $region39
              $region36: #{aspp_pallas.1} parent=31 // loop_body
                %v170 = vld [vmem:[%s168] sm:$0xff]
                %171 = vst [vmem:[%s169] sm:$0xff] %v170
                %v172 = vld [vmem:[%s168 + $0x8] sm:$0xff]
                %173 = vst [vmem:[%s169 + $0x8] sm:$0xff] %v172
                %v174 = vld [vmem:[%s168 + $0x10] sm:$0xff]
                %175 = vst [vmem:[%s169 + $0x10] sm:$0xff] %v174
                %v176 = vld [vmem:[%s168 + $0x18] sm:$0xff]
                %177 = vst [vmem:[%s169 + $0x18] sm:$0xff] %v176
                %v178 = vld [vmem:[%s168 + $0x20] sm:$0xff]
                %179 = vst [vmem:[%s169 + $0x20] sm:$0xff] %v178
                %v180 = vld [vmem:[%s168 + $0x28] sm:$0xff]
                %181 = vst [vmem:[%s169 + $0x28] sm:$0xff] %v180
                %v182 = vld [vmem:[%s168 + $0x60] sm:$0xff]
                %183 = vst [vmem:[%s169 + $0x30] sm:$0xff] %v182
                %v184 = vld [vmem:[%s168 + $0x68] sm:$0xff]
                %185 = vst [vmem:[%s169 + $0x38] sm:$0xff] %v184
                %v186 = vld [vmem:[%s168 + $0x70] sm:$0xff]
                %187 = vst [vmem:[%s169 + $0x40] sm:$0xff] %v186
                %v188 = vld [vmem:[%s168 + $0x78] sm:$0xff]
                %189 = vst [vmem:[%s169 + $0x48] sm:$0xff] %v188
                %v190 = vld [vmem:[%s168 + $0x80] sm:$0xff]
                %191 = vst [vmem:[%s169 + $0x50] sm:$0xff] %v190
                %v192 = vld [vmem:[%s168 + $0x88] sm:$0xff]
                %193 = vst [vmem:[%s169 + $0x58] sm:$0xff] %v192
                %v194 = vld [vmem:[%s168 + $0xc0] sm:$0xff]
                %195 = vst [vmem:[%s169 + $0x60] sm:$0xff] %v194
                %v196 = vld [vmem:[%s168 + $0xc8] sm:$0xff]
                %197 = vst [vmem:[%s169 + $0x68] sm:$0xff] %v196
                %v198 = vld [vmem:[%s168 + $0xd0] sm:$0xff]
                %199 = vst [vmem:[%s169 + $0x70] sm:$0xff] %v198
                %v200 = vld [vmem:[%s168 + $0xd8] sm:$0xff]
                %201 = vst [vmem:[%s169 + $0x78] sm:$0xff] %v200
                %v202 = vld [vmem:[%s168 + $0xe0] sm:$0xff]
                %203 = vst [vmem:[%s169 + $0x80] sm:$0xff] %v202
                %v204 = vld [vmem:[%s168 + $0xe8] sm:$0xff]
                %205 = vst [vmem:[%s169 + $0x88] sm:$0xff] %v204
                %v206 = vld [vmem:[%s168 + $0x120] sm:$0xff]
                %207 = vst [vmem:[%s169 + $0x90] sm:$0xff] %v206
                %v208 = vld [vmem:[%s168 + $0x128] sm:$0xff]
                %209 = vst [vmem:[%s169 + $0x98] sm:$0xff] %v208
                %v210 = vld [vmem:[%s168 + $0x130] sm:$0xff]
                %211 = vst [vmem:[%s169 + $0xa0] sm:$0xff] %v210
                %v212 = vld [vmem:[%s168 + $0x138] sm:$0xff]
                %213 = vst [vmem:[%s169 + $0xa8] sm:$0xff] %v212
                %v214 = vld [vmem:[%s168 + $0x140] sm:$0xff]
                %215 = vst [vmem:[%s169 + $0xb0] sm:$0xff] %v214
                %v216 = vld [vmem:[%s168 + $0x148] sm:$0xff]
                %217 = vst [vmem:[%s169 + $0xb8] sm:$0xff] %v216
                %v218 = vld [vmem:[%s168 + $0x180] sm:$0xff]
                %219 = vst [vmem:[%s169 + $0xc0] sm:$0xff] %v218
                %v220 = vld [vmem:[%s168 + $0x188] sm:$0xff]
                %221 = vst [vmem:[%s169 + $0xc8] sm:$0xff] %v220
                %v222 = vld [vmem:[%s168 + $0x190] sm:$0xff]
                %223 = vst [vmem:[%s169 + $0xd0] sm:$0xff] %v222
                %v224 = vld [vmem:[%s168 + $0x198] sm:$0xff]
                %225 = vst [vmem:[%s169 + $0xd8] sm:$0xff] %v224
                %v226 = vld [vmem:[%s168 + $0x1a0] sm:$0xff]
                %227 = vst [vmem:[%s169 + $0xe0] sm:$0xff] %v226
                %v228 = vld [vmem:[%s168 + $0x1a8] sm:$0xff]
                %229 = vst [vmem:[%s169 + $0xe8] sm:$0xff] %v228
                %v230 = vld [vmem:[%s168 + $0x1e0] sm:$0xff]
                %231 = vst [vmem:[%s169 + $0xf0] sm:$0xff] %v230
                %v232 = vld [vmem:[%s168 + $0x1e8] sm:$0xff]
                %233 = vst [vmem:[%s169 + $0xf8] sm:$0xff] %v232
                %v234 = vld [vmem:[%s168 + $0x1f0] sm:$0xff]
                %235 = vst [vmem:[%s169 + $0x100] sm:$0xff] %v234
                %v236 = vld [vmem:[%s168 + $0x1f8] sm:$0xff]
                %237 = vst [vmem:[%s169 + $0x108] sm:$0xff] %v236
                %v238 = vld [vmem:[%s168 + $0x200] sm:$0xff]
                %239 = vst [vmem:[%s169 + $0x110] sm:$0xff] %v238
                %v240 = vld [vmem:[%s168 + $0x208] sm:$0xff]
                %241 = vst [vmem:[%s169 + $0x118] sm:$0xff] %v240
                %v242 = vld [vmem:[%s168 + $0x240] sm:$0xff]
                %243 = vst [vmem:[%s169 + $0x120] sm:$0xff] %v242
                %v244 = vld [vmem:[%s168 + $0x248] sm:$0xff]
                %245 = vst [vmem:[%s169 + $0x128] sm:$0xff] %v244
                %v246 = vld [vmem:[%s168 + $0x250] sm:$0xff]
                %247 = vst [vmem:[%s169 + $0x130] sm:$0xff] %v246
                %v248 = vld [vmem:[%s168 + $0x258] sm:$0xff]
                %249 = vst [vmem:[%s169 + $0x138] sm:$0xff] %v248
                %v250 = vld [vmem:[%s168 + $0x260] sm:$0xff]
                %251 = vst [vmem:[%s169 + $0x140] sm:$0xff] %v250
                %v252 = vld [vmem:[%s168 + $0x268] sm:$0xff]
                %253 = vst [vmem:[%s169 + $0x148] sm:$0xff] %v252
                %v254 = vld [vmem:[%s168 + $0x2a0] sm:$0xff]
                %255 = vst [vmem:[%s169 + $0x150] sm:$0xff] %v254
                %v256 = vld [vmem:[%s168 + $0x2a8] sm:$0xff]
                %257 = vst [vmem:[%s169 + $0x158] sm:$0xff] %v256
                %v258 = vld [vmem:[%s168 + $0x2b0] sm:$0xff]
                %259 = vst [vmem:[%s169 + $0x160] sm:$0xff] %v258
                %v260 = vld [vmem:[%s168 + $0x2b8] sm:$0xff]
                %261 = vst [vmem:[%s169 + $0x168] sm:$0xff] %v260
                %v262 = vld [vmem:[%s168 + $0x2c0] sm:$0xff]
                %263 = vst [vmem:[%s169 + $0x170] sm:$0xff] %v262
                %v264 = vld [vmem:[%s168 + $0x2c8] sm:$0xff]
                %265 = vst [vmem:[%s169 + $0x178] sm:$0xff] %v264
                %v266 = vld [vmem:[%s168 + $0x300] sm:$0xff]
                %267 = vst [vmem:[%s169 + $0x180] sm:$0xff] %v266
                %v268 = vld [vmem:[%s168 + $0x308] sm:$0xff]
                %269 = vst [vmem:[%s169 + $0x188] sm:$0xff] %v268
                %v270 = vld [vmem:[%s168 + $0x310] sm:$0xff]
                %271 = vst [vmem:[%s169 + $0x190] sm:$0xff] %v270
                %v272 = vld [vmem:[%s168 + $0x318] sm:$0xff]
                %273 = vst [vmem:[%s169 + $0x198] sm:$0xff] %v272
                %v274 = vld [vmem:[%s168 + $0x320] sm:$0xff]
                %275 = vst [vmem:[%s169 + $0x1a0] sm:$0xff] %v274
                %v276 = vld [vmem:[%s168 + $0x328] sm:$0xff]
                %277 = vst [vmem:[%s169 + $0x1a8] sm:$0xff] %v276
                %v278 = vld [vmem:[%s168 + $0x360] sm:$0xff]
                %279 = vst [vmem:[%s169 + $0x1b0] sm:$0xff] %v278
                %v280 = vld [vmem:[%s168 + $0x368] sm:$0xff]
                %281 = vst [vmem:[%s169 + $0x1b8] sm:$0xff] %v280
                %v282 = vld [vmem:[%s168 + $0x370] sm:$0xff]
                %283 = vst [vmem:[%s169 + $0x1c0] sm:$0xff] %v282
                %v284 = vld [vmem:[%s168 + $0x378] sm:$0xff]
                %285 = vst [vmem:[%s169 + $0x1c8] sm:$0xff] %v284
                %v286 = vld [vmem:[%s168 + $0x380] sm:$0xff]
                %287 = vst [vmem:[%s169 + $0x1d0] sm:$0xff] %v286
                %v288 = vld [vmem:[%s168 + $0x388] sm:$0xff]
                %289 = vst [vmem:[%s169 + $0x1d8] sm:$0xff] %v288
                %v290 = vld [vmem:[%s168 + $0x3c0] sm:$0xff]
                %291 = vst [vmem:[%s169 + $0x1e0] sm:$0xff] %v290
                %v292 = vld [vmem:[%s168 + $0x3c8] sm:$0xff]
                %293 = vst [vmem:[%s169 + $0x1e8] sm:$0xff] %v292
                %v294 = vld [vmem:[%s168 + $0x3d0] sm:$0xff]
                %295 = vst [vmem:[%s169 + $0x1f0] sm:$0xff] %v294
                %v296 = vld [vmem:[%s168 + $0x3d8] sm:$0xff]
                %297 = vst [vmem:[%s169 + $0x1f8] sm:$0xff] %v296
                %v298 = vld [vmem:[%s168 + $0x3e0] sm:$0xff]
                %299 = vst [vmem:[%s169 + $0x200] sm:$0xff] %v298
                %v300 = vld [vmem:[%s168 + $0x3e8] sm:$0xff]
                %301 = vst [vmem:[%s169 + $0x208] sm:$0xff] %v300
                %v302 = vld [vmem:[%s168 + $0x420] sm:$0xff]
                %303 = vst [vmem:[%s169 + $0x210] sm:$0xff] %v302
                %v304 = vld [vmem:[%s168 + $0x428] sm:$0xff]
                %305 = vst [vmem:[%s169 + $0x218] sm:$0xff] %v304
                %v306 = vld [vmem:[%s168 + $0x430] sm:$0xff]
                %307 = vst [vmem:[%s169 + $0x220] sm:$0xff] %v306
                %v308 = vld [vmem:[%s168 + $0x438] sm:$0xff]
                %309 = vst [vmem:[%s169 + $0x228] sm:$0xff] %v308
                %v310 = vld [vmem:[%s168 + $0x440] sm:$0xff]
                %311 = vst [vmem:[%s169 + $0x230] sm:$0xff] %v310
                %v312 = vld [vmem:[%s168 + $0x448] sm:$0xff]
                %313 = vst [vmem:[%s169 + $0x238] sm:$0xff] %v312
                %v314 = vld [vmem:[%s168 + $0x480] sm:$0xff]
                %315 = vst [vmem:[%s169 + $0x240] sm:$0xff] %v314
                %v316 = vld [vmem:[%s168 + $0x488] sm:$0xff]
                %317 = vst [vmem:[%s169 + $0x248] sm:$0xff] %v316
                %v318 = vld [vmem:[%s168 + $0x490] sm:$0xff]
                %319 = vst [vmem:[%s169 + $0x250] sm:$0xff] %v318
                %v320 = vld [vmem:[%s168 + $0x498] sm:$0xff]
                %321 = vst [vmem:[%s169 + $0x258] sm:$0xff] %v320
                %v322 = vld [vmem:[%s168 + $0x4a0] sm:$0xff]
                %323 = vst [vmem:[%s169 + $0x260] sm:$0xff] %v322
                %v324 = vld [vmem:[%s168 + $0x4a8] sm:$0xff]
                %325 = vst [vmem:[%s169 + $0x268] sm:$0xff] %v324
                %v326 = vld [vmem:[%s168 + $0x4e0] sm:$0xff]
                %327 = vst [vmem:[%s169 + $0x270] sm:$0xff] %v326
                %v328 = vld [vmem:[%s168 + $0x4e8] sm:$0xff]
                %329 = vst [vmem:[%s169 + $0x278] sm:$0xff] %v328
                %v330 = vld [vmem:[%s168 + $0x4f0] sm:$0xff]
                %331 = vst [vmem:[%s169 + $0x280] sm:$0xff] %v330
                %v332 = vld [vmem:[%s168 + $0x4f8] sm:$0xff]
                %333 = vst [vmem:[%s169 + $0x288] sm:$0xff] %v332
                %v334 = vld [vmem:[%s168 + $0x500] sm:$0xff]
                %335 = vst [vmem:[%s169 + $0x290] sm:$0xff] %v334
                %v336 = vld [vmem:[%s168 + $0x508] sm:$0xff]
                %337 = vst [vmem:[%s169 + $0x298] sm:$0xff] %v336
                %v338 = vld [vmem:[%s168 + $0x540] sm:$0xff]
                %339 = vst [vmem:[%s169 + $0x2a0] sm:$0xff] %v338
                %v340 = vld [vmem:[%s168 + $0x548] sm:$0xff]
                %341 = vst [vmem:[%s169 + $0x2a8] sm:$0xff] %v340
                %v342 = vld [vmem:[%s168 + $0x550] sm:$0xff]
                %343 = vst [vmem:[%s169 + $0x2b0] sm:$0xff] %v342
                %v344 = vld [vmem:[%s168 + $0x558] sm:$0xff]
                %345 = vst [vmem:[%s169 + $0x2b8] sm:$0xff] %v344
                %v346 = vld [vmem:[%s168 + $0x560] sm:$0xff]
                %347 = vst [vmem:[%s169 + $0x2c0] sm:$0xff] %v346
                %v348 = vld [vmem:[%s168 + $0x568] sm:$0xff]
                %349 = vst [vmem:[%s169 + $0x2c8] sm:$0xff] %v348
                %v350 = vld [vmem:[%s168 + $0x5a0] sm:$0xff]
                %351 = vst [vmem:[%s169 + $0x2d0] sm:$0xff] %v350
                %v352 = vld [vmem:[%s168 + $0x5a8] sm:$0xff]
                %353 = vst [vmem:[%s169 + $0x2d8] sm:$0xff] %v352
                %v354 = vld [vmem:[%s168 + $0x5b0] sm:$0xff]
                %355 = vst [vmem:[%s169 + $0x2e0] sm:$0xff] %v354
                %v356 = vld [vmem:[%s168 + $0x5b8] sm:$0xff]
                %357 = vst [vmem:[%s169 + $0x2e8] sm:$0xff] %v356
                %v358 = vld [vmem:[%s168 + $0x5c0] sm:$0xff]
                %359 = vst [vmem:[%s169 + $0x2f0] sm:$0xff] %v358
                %v360 = vld [vmem:[%s168 + $0x5c8] sm:$0xff]
                %361 = vst [vmem:[%s169 + $0x2f8] sm:$0xff] %v360
                %v362 = vld [vmem:[%s168 + $0x600] sm:$0xff]
                %363 = vst [vmem:[%s169 + $0x300] sm:$0xff] %v362
                %v364 = vld [vmem:[%s168 + $0x608] sm:$0xff]
                %365 = vst [vmem:[%s169 + $0x308] sm:$0xff] %v364
                %v366 = vld [vmem:[%s168 + $0x610] sm:$0xff]
                %367 = vst [vmem:[%s169 + $0x310] sm:$0xff] %v366
                %v368 = vld [vmem:[%s168 + $0x618] sm:$0xff]
                %369 = vst [vmem:[%s169 + $0x318] sm:$0xff] %v368
                %v370 = vld [vmem:[%s168 + $0x620] sm:$0xff]
                %371 = vst [vmem:[%s169 + $0x320] sm:$0xff] %v370
                %v372 = vld [vmem:[%s168 + $0x628] sm:$0xff]
                %373 = vst [vmem:[%s169 + $0x328] sm:$0xff] %v372
                %v374 = vld [vmem:[%s168 + $0x660] sm:$0xff]
                %375 = vst [vmem:[%s169 + $0x330] sm:$0xff] %v374
                %v376 = vld [vmem:[%s168 + $0x668] sm:$0xff]
                %377 = vst [vmem:[%s169 + $0x338] sm:$0xff] %v376
                %v378 = vld [vmem:[%s168 + $0x670] sm:$0xff]
                %379 = vst [vmem:[%s169 + $0x340] sm:$0xff] %v378
                %v380 = vld [vmem:[%s168 + $0x678] sm:$0xff]
                %381 = vst [vmem:[%s169 + $0x348] sm:$0xff] %v380
                %v382 = vld [vmem:[%s168 + $0x680] sm:$0xff]
                %383 = vst [vmem:[%s169 + $0x350] sm:$0xff] %v382
                %v384 = vld [vmem:[%s168 + $0x688] sm:$0xff]
                %385 = vst [vmem:[%s169 + $0x358] sm:$0xff] %v384
                %v386 = vld [vmem:[%s168 + $0x6c0] sm:$0xff]
                %387 = vst [vmem:[%s169 + $0x360] sm:$0xff] %v386
                %v388 = vld [vmem:[%s168 + $0x6c8] sm:$0xff]
                %389 = vst [vmem:[%s169 + $0x368] sm:$0xff] %v388
                %v390 = vld [vmem:[%s168 + $0x6d0] sm:$0xff]
                %391 = vst [vmem:[%s169 + $0x370] sm:$0xff] %v390
                %v392 = vld [vmem:[%s168 + $0x6d8] sm:$0xff]
                %393 = vst [vmem:[%s169 + $0x378] sm:$0xff] %v392
                %v394 = vld [vmem:[%s168 + $0x6e0] sm:$0xff]
                %395 = vst [vmem:[%s169 + $0x380] sm:$0xff] %v394
                %v396 = vld [vmem:[%s168 + $0x6e8] sm:$0xff]
                %397 = vst [vmem:[%s169 + $0x388] sm:$0xff] %v396
                %v398 = vld [vmem:[%s168 + $0x720] sm:$0xff]
                %399 = vst [vmem:[%s169 + $0x390] sm:$0xff] %v398
                %v400 = vld [vmem:[%s168 + $0x728] sm:$0xff]
                %401 = vst [vmem:[%s169 + $0x398] sm:$0xff] %v400
                %v402 = vld [vmem:[%s168 + $0x730] sm:$0xff]
                %403 = vst [vmem:[%s169 + $0x3a0] sm:$0xff] %v402
                %v404 = vld [vmem:[%s168 + $0x738] sm:$0xff]
                %405 = vst [vmem:[%s169 + $0x3a8] sm:$0xff] %v404
                %v406 = vld [vmem:[%s168 + $0x740] sm:$0xff]
                %407 = vst [vmem:[%s169 + $0x3b0] sm:$0xff] %v406
                %v408 = vld [vmem:[%s168 + $0x748] sm:$0xff]
                %409 = vst [vmem:[%s169 + $0x3b8] sm:$0xff] %v408
                %v410 = vld [vmem:[%s168 + $0x780] sm:$0xff]
                %411 = vst [vmem:[%s169 + $0x3c0] sm:$0xff] %v410
                %v412 = vld [vmem:[%s168 + $0x788] sm:$0xff]
                %413 = vst [vmem:[%s169 + $0x3c8] sm:$0xff] %v412
                %v414 = vld [vmem:[%s168 + $0x790] sm:$0xff]
                %415 = vst [vmem:[%s169 + $0x3d0] sm:$0xff] %v414
                %v416 = vld [vmem:[%s168 + $0x798] sm:$0xff]
                %417 = vst [vmem:[%s169 + $0x3d8] sm:$0xff] %v416
                %v418 = vld [vmem:[%s168 + $0x7a0] sm:$0xff]
                %419 = vst [vmem:[%s169 + $0x3e0] sm:$0xff] %v418
                %v420 = vld [vmem:[%s168 + $0x7a8] sm:$0xff]
                %421 = vst [vmem:[%s169 + $0x3e8] sm:$0xff] %v420
                %v422 = vld [vmem:[%s168 + $0x7e0] sm:$0xff]
                %423 = vst [vmem:[%s169 + $0x3f0] sm:$0xff] %v422
                %v424 = vld [vmem:[%s168 + $0x7e8] sm:$0xff]
                %425 = vst [vmem:[%s169 + $0x3f8] sm:$0xff] %v424
                %v426 = vld [vmem:[%s168 + $0x7f0] sm:$0xff]
                %427 = vst [vmem:[%s169 + $0x400] sm:$0xff] %v426
                %v428 = vld [vmem:[%s168 + $0x7f8] sm:$0xff]
                %429 = vst [vmem:[%s169 + $0x408] sm:$0xff] %v428
                %v430 = vld [vmem:[%s168 + $0x800] sm:$0xff]
                %431 = vst [vmem:[%s169 + $0x410] sm:$0xff] %v430
                %v432 = vld [vmem:[%s168 + $0x808] sm:$0xff]
                %433 = vst [vmem:[%s169 + $0x418] sm:$0xff] %v432
                %v434 = vld [vmem:[%s168 + $0x840] sm:$0xff]
                %435 = vst [vmem:[%s169 + $0x420] sm:$0xff] %v434
                %v436 = vld [vmem:[%s168 + $0x848] sm:$0xff]
                %437 = vst [vmem:[%s169 + $0x428] sm:$0xff] %v436
                %v438 = vld [vmem:[%s168 + $0x850] sm:$0xff]
                %439 = vst [vmem:[%s169 + $0x430] sm:$0xff] %v438
                %v440 = vld [vmem:[%s168 + $0x858] sm:$0xff]
                %441 = vst [vmem:[%s169 + $0x438] sm:$0xff] %v440
                %v442 = vld [vmem:[%s168 + $0x860] sm:$0xff]
                %443 = vst [vmem:[%s169 + $0x440] sm:$0xff] %v442
                %v444 = vld [vmem:[%s168 + $0x868] sm:$0xff]
                %445 = vst [vmem:[%s169 + $0x448] sm:$0xff] %v444
                %v446 = vld [vmem:[%s168 + $0x8a0] sm:$0xff]
                %447 = vst [vmem:[%s169 + $0x450] sm:$0xff] %v446
                %v448 = vld [vmem:[%s168 + $0x8a8] sm:$0xff]
                %449 = vst [vmem:[%s169 + $0x458] sm:$0xff] %v448
                %v450 = vld [vmem:[%s168 + $0x8b0] sm:$0xff]
                %451 = vst [vmem:[%s169 + $0x460] sm:$0xff] %v450
                %v452 = vld [vmem:[%s168 + $0x8b8] sm:$0xff]
                %453 = vst [vmem:[%s169 + $0x468] sm:$0xff] %v452
                %v454 = vld [vmem:[%s168 + $0x8c0] sm:$0xff]
                %455 = vst [vmem:[%s169 + $0x470] sm:$0xff] %v454
                %v456 = vld [vmem:[%s168 + $0x8c8] sm:$0xff]
                %457 = vst [vmem:[%s169 + $0x478] sm:$0xff] %v456
                %v458 = vld [vmem:[%s168 + $0x900] sm:$0xff]
                %459 = vst [vmem:[%s169 + $0x480] sm:$0xff] %v458
                %v460 = vld [vmem:[%s168 + $0x908] sm:$0xff]
                %461 = vst [vmem:[%s169 + $0x488] sm:$0xff] %v460
                %v462 = vld [vmem:[%s168 + $0x910] sm:$0xff]
                %463 = vst [vmem:[%s169 + $0x490] sm:$0xff] %v462
                %v464 = vld [vmem:[%s168 + $0x918] sm:$0xff]
                %465 = vst [vmem:[%s169 + $0x498] sm:$0xff] %v464
                %v466 = vld [vmem:[%s168 + $0x920] sm:$0xff]
                %467 = vst [vmem:[%s169 + $0x4a0] sm:$0xff] %v466
                %v468 = vld [vmem:[%s168 + $0x928] sm:$0xff]
                %469 = vst [vmem:[%s169 + $0x4a8] sm:$0xff] %v468
                %v470 = vld [vmem:[%s168 + $0x960] sm:$0xff]
                %471 = vst [vmem:[%s169 + $0x4b0] sm:$0xff] %v470
                %v472 = vld [vmem:[%s168 + $0x968] sm:$0xff]
                %473 = vst [vmem:[%s169 + $0x4b8] sm:$0xff] %v472
                %v474 = vld [vmem:[%s168 + $0x970] sm:$0xff]
                %475 = vst [vmem:[%s169 + $0x4c0] sm:$0xff] %v474
                %v476 = vld [vmem:[%s168 + $0x978] sm:$0xff]
                %477 = vst [vmem:[%s169 + $0x4c8] sm:$0xff] %v476
                %v478 = vld [vmem:[%s168 + $0x980] sm:$0xff]
                %479 = vst [vmem:[%s169 + $0x4d0] sm:$0xff] %v478
                %v480 = vld [vmem:[%s168 + $0x988] sm:$0xff]
                %481 = vst [vmem:[%s169 + $0x4d8] sm:$0xff] %v480
                %v482 = vld [vmem:[%s168 + $0x9c0] sm:$0xff]
                %483 = vst [vmem:[%s169 + $0x4e0] sm:$0xff] %v482
                %v484 = vld [vmem:[%s168 + $0x9c8] sm:$0xff]
                %485 = vst [vmem:[%s169 + $0x4e8] sm:$0xff] %v484
                %v486 = vld [vmem:[%s168 + $0x9d0] sm:$0xff]
                %487 = vst [vmem:[%s169 + $0x4f0] sm:$0xff] %v486
                %v488 = vld [vmem:[%s168 + $0x9d8] sm:$0xff]
                %489 = vst [vmem:[%s169 + $0x4f8] sm:$0xff] %v488
                %v490 = vld [vmem:[%s168 + $0x9e0] sm:$0xff]
                %491 = vst [vmem:[%s169 + $0x500] sm:$0xff] %v490
                %v492 = vld [vmem:[%s168 + $0x9e8] sm:$0xff]
                %493 = vst [vmem:[%s169 + $0x508] sm:$0xff] %v492
                %v494 = vld [vmem:[%s168 + $0xa20] sm:$0xff]
                %495 = vst [vmem:[%s169 + $0x510] sm:$0xff] %v494
                %v496 = vld [vmem:[%s168 + $0xa28] sm:$0xff]
                %497 = vst [vmem:[%s169 + $0x518] sm:$0xff] %v496
                %v498 = vld [vmem:[%s168 + $0xa30] sm:$0xff]
                %499 = vst [vmem:[%s169 + $0x520] sm:$0xff] %v498
                %v500 = vld [vmem:[%s168 + $0xa38] sm:$0xff]
                %501 = vst [vmem:[%s169 + $0x528] sm:$0xff] %v500
                %v502 = vld [vmem:[%s168 + $0xa40] sm:$0xff]
                %503 = vst [vmem:[%s169 + $0x530] sm:$0xff] %v502
                %v504 = vld [vmem:[%s168 + $0xa48] sm:$0xff]
                %505 = vst [vmem:[%s169 + $0x538] sm:$0xff] %v504
                %v506 = vld [vmem:[%s168 + $0xa80] sm:$0xff]
                %507 = vst [vmem:[%s169 + $0x540] sm:$0xff] %v506
                %v508 = vld [vmem:[%s168 + $0xa88] sm:$0xff]
                %509 = vst [vmem:[%s169 + $0x548] sm:$0xff] %v508
                %v510 = vld [vmem:[%s168 + $0xa90] sm:$0xff]
                %511 = vst [vmem:[%s169 + $0x550] sm:$0xff] %v510
                %v512 = vld [vmem:[%s168 + $0xa98] sm:$0xff]
                %513 = vst [vmem:[%s169 + $0x558] sm:$0xff] %v512
                %v514 = vld [vmem:[%s168 + $0xaa0] sm:$0xff]
                %515 = vst [vmem:[%s169 + $0x560] sm:$0xff] %v514
                %v516 = vld [vmem:[%s168 + $0xaa8] sm:$0xff]
                %517 = vst [vmem:[%s169 + $0x568] sm:$0xff] %v516
                %v518 = vld [vmem:[%s168 + $0xae0] sm:$0xff]
                %519 = vst [vmem:[%s169 + $0x570] sm:$0xff] %v518
                %v520 = vld [vmem:[%s168 + $0xae8] sm:$0xff]
                %521 = vst [vmem:[%s169 + $0x578] sm:$0xff] %v520
                %v522 = vld [vmem:[%s168 + $0xaf0] sm:$0xff]
                %523 = vst [vmem:[%s169 + $0x580] sm:$0xff] %v522
                %v524 = vld [vmem:[%s168 + $0xaf8] sm:$0xff]
                %525 = vst [vmem:[%s169 + $0x588] sm:$0xff] %v524
                %v526 = vld [vmem:[%s168 + $0xb00] sm:$0xff]
                %527 = vst [vmem:[%s169 + $0x590] sm:$0xff] %v526
                %v528 = vld [vmem:[%s168 + $0xb08] sm:$0xff]
                %529 = vst [vmem:[%s169 + $0x598] sm:$0xff] %v528
                %v530 = vld [vmem:[%s168 + $0xb40] sm:$0xff]
                %531 = vst [vmem:[%s169 + $0x5a0] sm:$0xff] %v530
                %v532 = vld [vmem:[%s168 + $0xb48] sm:$0xff]
                %533 = vst [vmem:[%s169 + $0x5a8] sm:$0xff] %v532
                %v534 = vld [vmem:[%s168 + $0xb50] sm:$0xff]
                %535 = vst [vmem:[%s169 + $0x5b0] sm:$0xff] %v534
                %v536 = vld [vmem:[%s168 + $0xb58] sm:$0xff]
                %537 = vst [vmem:[%s169 + $0x5b8] sm:$0xff] %v536
                %v538 = vld [vmem:[%s168 + $0xb60] sm:$0xff]
                %539 = vst [vmem:[%s169 + $0x5c0] sm:$0xff] %v538
                %v540 = vld [vmem:[%s168 + $0xb68] sm:$0xff]
                %541 = vst [vmem:[%s169 + $0x5c8] sm:$0xff] %v540
                %v542 = vld [vmem:[%s168 + $0xba0] sm:$0xff]
                %543 = vst [vmem:[%s169 + $0x5d0] sm:$0xff] %v542
                %v544 = vld [vmem:[%s168 + $0xba8] sm:$0xff]
                %545 = vst [vmem:[%s169 + $0x5d8] sm:$0xff] %v544
                %v546 = vld [vmem:[%s168 + $0xbb0] sm:$0xff]
                %547 = vst [vmem:[%s169 + $0x5e0] sm:$0xff] %v546
                %v548 = vld [vmem:[%s168 + $0xbb8] sm:$0xff]
                %549 = vst [vmem:[%s169 + $0x5e8] sm:$0xff] %v548
                %v550 = vld [vmem:[%s168 + $0xbc0] sm:$0xff]
                %551 = vst [vmem:[%s169 + $0x5f0] sm:$0xff] %v550
                %v552 = vld [vmem:[%s168 + $0xbc8] sm:$0xff]
                %553 = vst [vmem:[%s169 + $0x5f8] sm:$0xff] %v552
                %v554 = vld [vmem:[%s168 + $0xc00] sm:$0xff]
                %555 = vst [vmem:[%s169 + $0x600] sm:$0xff] %v554
                %v556 = vld [vmem:[%s168 + $0xc08] sm:$0xff]
                %557 = vst [vmem:[%s169 + $0x608] sm:$0xff] %v556
                %v558 = vld [vmem:[%s168 + $0xc10] sm:$0xff]
                %559 = vst [vmem:[%s169 + $0x610] sm:$0xff] %v558
                %v560 = vld [vmem:[%s168 + $0xc18] sm:$0xff]
                %561 = vst [vmem:[%s169 + $0x618] sm:$0xff] %v560
                %v562 = vld [vmem:[%s168 + $0xc20] sm:$0xff]
                %563 = vst [vmem:[%s169 + $0x620] sm:$0xff] %v562
                %v564 = vld [vmem:[%s168 + $0xc28] sm:$0xff]
                %565 = vst [vmem:[%s169 + $0x628] sm:$0xff] %v564
                %v566 = vld [vmem:[%s168 + $0xc60] sm:$0xff]
                %567 = vst [vmem:[%s169 + $0x630] sm:$0xff] %v566
                %v568 = vld [vmem:[%s168 + $0xc68] sm:$0xff]
                %569 = vst [vmem:[%s169 + $0x638] sm:$0xff] %v568
                %v570 = vld [vmem:[%s168 + $0xc70] sm:$0xff]
                %571 = vst [vmem:[%s169 + $0x640] sm:$0xff] %v570
                %v572 = vld [vmem:[%s168 + $0xc78] sm:$0xff]
                %573 = vst [vmem:[%s169 + $0x648] sm:$0xff] %v572
                %v574 = vld [vmem:[%s168 + $0xc80] sm:$0xff]
                %575 = vst [vmem:[%s169 + $0x650] sm:$0xff] %v574
                %v576 = vld [vmem:[%s168 + $0xc88] sm:$0xff]
                %577 = vst [vmem:[%s169 + $0x658] sm:$0xff] %v576
                %v578 = vld [vmem:[%s168 + $0xcc0] sm:$0xff]
                %579 = vst [vmem:[%s169 + $0x660] sm:$0xff] %v578
                %v580 = vld [vmem:[%s168 + $0xcc8] sm:$0xff]
                %581 = vst [vmem:[%s169 + $0x668] sm:$0xff] %v580
                %v582 = vld [vmem:[%s168 + $0xcd0] sm:$0xff]
                %583 = vst [vmem:[%s169 + $0x670] sm:$0xff] %v582
                %v584 = vld [vmem:[%s168 + $0xcd8] sm:$0xff]
                %585 = vst [vmem:[%s169 + $0x678] sm:$0xff] %v584
                %v586 = vld [vmem:[%s168 + $0xce0] sm:$0xff]
                %587 = vst [vmem:[%s169 + $0x680] sm:$0xff] %v586
                %v588 = vld [vmem:[%s168 + $0xce8] sm:$0xff]
                %589 = vst [vmem:[%s169 + $0x688] sm:$0xff] %v588
                %v590 = vld [vmem:[%s168 + $0xd20] sm:$0xff]
                %591 = vst [vmem:[%s169 + $0x690] sm:$0xff] %v590
                %v592 = vld [vmem:[%s168 + $0xd28] sm:$0xff]
                %593 = vst [vmem:[%s169 + $0x698] sm:$0xff] %v592
                %v594 = vld [vmem:[%s168 + $0xd30] sm:$0xff]
                %595 = vst [vmem:[%s169 + $0x6a0] sm:$0xff] %v594
                %v596 = vld [vmem:[%s168 + $0xd38] sm:$0xff]
                %597 = vst [vmem:[%s169 + $0x6a8] sm:$0xff] %v596
                %v598 = vld [vmem:[%s168 + $0xd40] sm:$0xff]
                %599 = vst [vmem:[%s169 + $0x6b0] sm:$0xff] %v598
                %v600 = vld [vmem:[%s168 + $0xd48] sm:$0xff]
                %601 = vst [vmem:[%s169 + $0x6b8] sm:$0xff] %v600
                %v602 = vld [vmem:[%s168 + $0xd80] sm:$0xff]
                %603 = vst [vmem:[%s169 + $0x6c0] sm:$0xff] %v602
                %v604 = vld [vmem:[%s168 + $0xd88] sm:$0xff]
                %605 = vst [vmem:[%s169 + $0x6c8] sm:$0xff] %v604
                %v606 = vld [vmem:[%s168 + $0xd90] sm:$0xff]
                %607 = vst [vmem:[%s169 + $0x6d0] sm:$0xff] %v606
                %v608 = vld [vmem:[%s168 + $0xd98] sm:$0xff]
                %609 = vst [vmem:[%s169 + $0x6d8] sm:$0xff] %v608
                %v610 = vld [vmem:[%s168 + $0xda0] sm:$0xff]
                %611 = vst [vmem:[%s169 + $0x6e0] sm:$0xff] %v610
                %v612 = vld [vmem:[%s168 + $0xda8] sm:$0xff]
                %613 = vst [vmem:[%s169 + $0x6e8] sm:$0xff] %v612
                %v614 = vld [vmem:[%s168 + $0xde0] sm:$0xff]
                %615 = vst [vmem:[%s169 + $0x6f0] sm:$0xff] %v614
                %v616 = vld [vmem:[%s168 + $0xde8] sm:$0xff]
                %617 = vst [vmem:[%s169 + $0x6f8] sm:$0xff] %v616
                %v618 = vld [vmem:[%s168 + $0xdf0] sm:$0xff]
                %619 = vst [vmem:[%s169 + $0x700] sm:$0xff] %v618
                %v620 = vld [vmem:[%s168 + $0xdf8] sm:$0xff]
                %621 = vst [vmem:[%s169 + $0x708] sm:$0xff] %v620
                %v622 = vld [vmem:[%s168 + $0xe00] sm:$0xff]
                %623 = vst [vmem:[%s169 + $0x710] sm:$0xff] %v622
                %v624 = vld [vmem:[%s168 + $0xe08] sm:$0xff]
                %625 = vst [vmem:[%s169 + $0x718] sm:$0xff] %v624
                %v626 = vld [vmem:[%s168 + $0xe40] sm:$0xff]
                %627 = vst [vmem:[%s169 + $0x720] sm:$0xff] %v626
                %v628 = vld [vmem:[%s168 + $0xe48] sm:$0xff]
                %629 = vst [vmem:[%s169 + $0x728] sm:$0xff] %v628
                %v630 = vld [vmem:[%s168 + $0xe50] sm:$0xff]
                %631 = vst [vmem:[%s169 + $0x730] sm:$0xff] %v630
                %v632 = vld [vmem:[%s168 + $0xe58] sm:$0xff]
                %633 = vst [vmem:[%s169 + $0x738] sm:$0xff] %v632
                %v634 = vld [vmem:[%s168 + $0xe60] sm:$0xff]
                %635 = vst [vmem:[%s169 + $0x740] sm:$0xff] %v634
                %v636 = vld [vmem:[%s168 + $0xe68] sm:$0xff]
                %637 = vst [vmem:[%s169 + $0x748] sm:$0xff] %v636
                %v638 = vld [vmem:[%s168 + $0xea0] sm:$0xff]
                %639 = vst [vmem:[%s169 + $0x750] sm:$0xff] %v638
                %v640 = vld [vmem:[%s168 + $0xea8] sm:$0xff]
                %641 = vst [vmem:[%s169 + $0x758] sm:$0xff] %v640
                %v642 = vld [vmem:[%s168 + $0xeb0] sm:$0xff]
                %643 = vst [vmem:[%s169 + $0x760] sm:$0xff] %v642
                %v644 = vld [vmem:[%s168 + $0xeb8] sm:$0xff]
                %645 = vst [vmem:[%s169 + $0x768] sm:$0xff] %v644
                %v646 = vld [vmem:[%s168 + $0xec0] sm:$0xff]
                %647 = vst [vmem:[%s169 + $0x770] sm:$0xff] %v646
                %v648 = vld [vmem:[%s168 + $0xec8] sm:$0xff]
                %649 = vst [vmem:[%s169 + $0x778] sm:$0xff] %v648
                %v650 = vld [vmem:[%s168 + $0xf00] sm:$0xff]
                %651 = vst [vmem:[%s169 + $0x780] sm:$0xff] %v650
                %v652 = vld [vmem:[%s168 + $0xf08] sm:$0xff]
                %653 = vst [vmem:[%s169 + $0x788] sm:$0xff] %v652
                %v654 = vld [vmem:[%s168 + $0xf10] sm:$0xff]
                %655 = vst [vmem:[%s169 + $0x790] sm:$0xff] %v654
                %v656 = vld [vmem:[%s168 + $0xf18] sm:$0xff]
                %657 = vst [vmem:[%s169 + $0x798] sm:$0xff] %v656
                %v658 = vld [vmem:[%s168 + $0xf20] sm:$0xff]
                %659 = vst [vmem:[%s169 + $0x7a0] sm:$0xff] %v658
                %v660 = vld [vmem:[%s168 + $0xf28] sm:$0xff]
                %661 = vst [vmem:[%s169 + $0x7a8] sm:$0xff] %v660
                %v662 = vld [vmem:[%s168 + $0xf60] sm:$0xff]
                %663 = vst [vmem:[%s169 + $0x7b0] sm:$0xff] %v662
                %v664 = vld [vmem:[%s168 + $0xf68] sm:$0xff]
                %665 = vst [vmem:[%s169 + $0x7b8] sm:$0xff] %v664
                %v666 = vld [vmem:[%s168 + $0xf70] sm:$0xff]
                %667 = vst [vmem:[%s169 + $0x7c0] sm:$0xff] %v666
                %v668 = vld [vmem:[%s168 + $0xf78] sm:$0xff]
                %669 = vst [vmem:[%s169 + $0x7c8] sm:$0xff] %v668
                %v670 = vld [vmem:[%s168 + $0xf80] sm:$0xff]
                %671 = vst [vmem:[%s169 + $0x7d0] sm:$0xff] %v670
                %v672 = vld [vmem:[%s168 + $0xf88] sm:$0xff]
                %673 = vst [vmem:[%s169 + $0x7d8] sm:$0xff] %v672
                %v674 = vld [vmem:[%s168 + $0xfc0] sm:$0xff]
                %675 = vst [vmem:[%s169 + $0x7e0] sm:$0xff] %v674
                %v676 = vld [vmem:[%s168 + $0xfc8] sm:$0xff]
                %677 = vst [vmem:[%s169 + $0x7e8] sm:$0xff] %v676
                %v678 = vld [vmem:[%s168 + $0xfd0] sm:$0xff]
                %679 = vst [vmem:[%s169 + $0x7f0] sm:$0xff] %v678
                %v680 = vld [vmem:[%s168 + $0xfd8] sm:$0xff]
                %681 = vst [vmem:[%s169 + $0x7f8] sm:$0xff] %v680
                %v682 = vld [vmem:[%s168 + $0xfe0] sm:$0xff]
                %683 = vst [vmem:[%s169 + $0x800] sm:$0xff] %v682
                %v684 = vld [vmem:[%s168 + $0xfe8] sm:$0xff]
                %685 = vst [vmem:[%s169 + $0x808] sm:$0xff] %v684
                %v686 = vld [vmem:[%s168 + $0x1020] sm:$0xff]
                %687 = vst [vmem:[%s169 + $0x810] sm:$0xff] %v686
                %v688 = vld [vmem:[%s168 + $0x1028] sm:$0xff]
                %689 = vst [vmem:[%s169 + $0x818] sm:$0xff] %v688
                %v690 = vld [vmem:[%s168 + $0x1030] sm:$0xff]
                %691 = vst [vmem:[%s169 + $0x820] sm:$0xff] %v690
                %v692 = vld [vmem:[%s168 + $0x1038] sm:$0xff]
                %693 = vst [vmem:[%s169 + $0x828] sm:$0xff] %v692
                %v694 = vld [vmem:[%s168 + $0x1040] sm:$0xff]
                %695 = vst [vmem:[%s169 + $0x830] sm:$0xff] %v694
                %v696 = vld [vmem:[%s168 + $0x1048] sm:$0xff]
                %697 = vst [vmem:[%s169 + $0x838] sm:$0xff] %v696
                %v698 = vld [vmem:[%s168 + $0x1080] sm:$0xff]
                %699 = vst [vmem:[%s169 + $0x840] sm:$0xff] %v698
                %v700 = vld [vmem:[%s168 + $0x1088] sm:$0xff]
                %701 = vst [vmem:[%s169 + $0x848] sm:$0xff] %v700
                %v702 = vld [vmem:[%s168 + $0x1090] sm:$0xff]
                %703 = vst [vmem:[%s169 + $0x850] sm:$0xff] %v702
                %v704 = vld [vmem:[%s168 + $0x1098] sm:$0xff]
                %705 = vst [vmem:[%s169 + $0x858] sm:$0xff] %v704
                %v706 = vld [vmem:[%s168 + $0x10a0] sm:$0xff]
                %707 = vst [vmem:[%s169 + $0x860] sm:$0xff] %v706
                %v708 = vld [vmem:[%s168 + $0x10a8] sm:$0xff]
                %709 = vst [vmem:[%s169 + $0x868] sm:$0xff] %v708
                %v710 = vld [vmem:[%s168 + $0x10e0] sm:$0xff]
                %711 = vst [vmem:[%s169 + $0x870] sm:$0xff] %v710
                %v712 = vld [vmem:[%s168 + $0x10e8] sm:$0xff]
                %713 = vst [vmem:[%s169 + $0x878] sm:$0xff] %v712
                %v714 = vld [vmem:[%s168 + $0x10f0] sm:$0xff]
                %715 = vst [vmem:[%s169 + $0x880] sm:$0xff] %v714
                %v716 = vld [vmem:[%s168 + $0x10f8] sm:$0xff]
                %717 = vst [vmem:[%s169 + $0x888] sm:$0xff] %v716
                %v718 = vld [vmem:[%s168 + $0x1100] sm:$0xff]
                %719 = vst [vmem:[%s169 + $0x890] sm:$0xff] %v718
                %v720 = vld [vmem:[%s168 + $0x1108] sm:$0xff]
                %721 = vst [vmem:[%s169 + $0x898] sm:$0xff] %v720
                %v722 = vld [vmem:[%s168 + $0x1140] sm:$0xff]
                %723 = vst [vmem:[%s169 + $0x8a0] sm:$0xff] %v722
                %v724 = vld [vmem:[%s168 + $0x1148] sm:$0xff]
                %725 = vst [vmem:[%s169 + $0x8a8] sm:$0xff] %v724
                %v726 = vld [vmem:[%s168 + $0x1150] sm:$0xff]
                %727 = vst [vmem:[%s169 + $0x8b0] sm:$0xff] %v726
                %v728 = vld [vmem:[%s168 + $0x1158] sm:$0xff]
                %729 = vst [vmem:[%s169 + $0x8b8] sm:$0xff] %v728
                %v730 = vld [vmem:[%s168 + $0x1160] sm:$0xff]
                %731 = vst [vmem:[%s169 + $0x8c0] sm:$0xff] %v730
                %v732 = vld [vmem:[%s168 + $0x1168] sm:$0xff]
                %733 = vst [vmem:[%s169 + $0x8c8] sm:$0xff] %v732
                %v734 = vld [vmem:[%s168 + $0x11a0] sm:$0xff]
                %735 = vst [vmem:[%s169 + $0x8d0] sm:$0xff] %v734
                %v736 = vld [vmem:[%s168 + $0x11a8] sm:$0xff]
                %737 = vst [vmem:[%s169 + $0x8d8] sm:$0xff] %v736
                %v738 = vld [vmem:[%s168 + $0x11b0] sm:$0xff]
                %739 = vst [vmem:[%s169 + $0x8e0] sm:$0xff] %v738
                %v740 = vld [vmem:[%s168 + $0x11b8] sm:$0xff]
                %741 = vst [vmem:[%s169 + $0x8e8] sm:$0xff] %v740
                %v742 = vld [vmem:[%s168 + $0x11c0] sm:$0xff]
                %743 = vst [vmem:[%s169 + $0x8f0] sm:$0xff] %v742
                %v744 = vld [vmem:[%s168 + $0x11c8] sm:$0xff]
                %745 = vst [vmem:[%s169 + $0x8f8] sm:$0xff] %v744
                %v746 = vld [vmem:[%s168 + $0x1200] sm:$0xff]
                %747 = vst [vmem:[%s169 + $0x900] sm:$0xff] %v746
                %v748 = vld [vmem:[%s168 + $0x1208] sm:$0xff]
                %749 = vst [vmem:[%s169 + $0x908] sm:$0xff] %v748
                %v750 = vld [vmem:[%s168 + $0x1210] sm:$0xff]
                %751 = vst [vmem:[%s169 + $0x910] sm:$0xff] %v750
                %v752 = vld [vmem:[%s168 + $0x1218] sm:$0xff]
                %753 = vst [vmem:[%s169 + $0x918] sm:$0xff] %v752
                %v754 = vld [vmem:[%s168 + $0x1220] sm:$0xff]
                %755 = vst [vmem:[%s169 + $0x920] sm:$0xff] %v754
                %v756 = vld [vmem:[%s168 + $0x1228] sm:$0xff]
                %757 = vst [vmem:[%s169 + $0x928] sm:$0xff] %v756
                %v758 = vld [vmem:[%s168 + $0x1260] sm:$0xff]
                %759 = vst [vmem:[%s169 + $0x930] sm:$0xff] %v758
                %v760 = vld [vmem:[%s168 + $0x1268] sm:$0xff]
                %761 = vst [vmem:[%s169 + $0x938] sm:$0xff] %v760
                %v762 = vld [vmem:[%s168 + $0x1270] sm:$0xff]
                %763 = vst [vmem:[%s169 + $0x940] sm:$0xff] %v762
                %v764 = vld [vmem:[%s168 + $0x1278] sm:$0xff]
                %765 = vst [vmem:[%s169 + $0x948] sm:$0xff] %v764
                %v766 = vld [vmem:[%s168 + $0x1280] sm:$0xff]
                %767 = vst [vmem:[%s169 + $0x950] sm:$0xff] %v766
                %v768 = vld [vmem:[%s168 + $0x1288] sm:$0xff]
                %769 = vst [vmem:[%s169 + $0x958] sm:$0xff] %v768
                %v770 = vld [vmem:[%s168 + $0x12c0] sm:$0xff]
                %771 = vst [vmem:[%s169 + $0x960] sm:$0xff] %v770
                %v772 = vld [vmem:[%s168 + $0x12c8] sm:$0xff]
                %773 = vst [vmem:[%s169 + $0x968] sm:$0xff] %v772
                %v774 = vld [vmem:[%s168 + $0x12d0] sm:$0xff]
                %775 = vst [vmem:[%s169 + $0x970] sm:$0xff] %v774
                %v776 = vld [vmem:[%s168 + $0x12d8] sm:$0xff]
                %777 = vst [vmem:[%s169 + $0x978] sm:$0xff] %v776
                %v778 = vld [vmem:[%s168 + $0x12e0] sm:$0xff]
                %779 = vst [vmem:[%s169 + $0x980] sm:$0xff] %v778
                %v780 = vld [vmem:[%s168 + $0x12e8] sm:$0xff]
                %781 = vst [vmem:[%s169 + $0x988] sm:$0xff] %v780
                %v782 = vld [vmem:[%s168 + $0x1320] sm:$0xff]
                %783 = vst [vmem:[%s169 + $0x990] sm:$0xff] %v782
                %v784 = vld [vmem:[%s168 + $0x1328] sm:$0xff]
                %785 = vst [vmem:[%s169 + $0x998] sm:$0xff] %v784
                %v786 = vld [vmem:[%s168 + $0x1330] sm:$0xff]
                %787 = vst [vmem:[%s169 + $0x9a0] sm:$0xff] %v786
                %v788 = vld [vmem:[%s168 + $0x1338] sm:$0xff]
                %789 = vst [vmem:[%s169 + $0x9a8] sm:$0xff] %v788
                %v790 = vld [vmem:[%s168 + $0x1340] sm:$0xff]
                %791 = vst [vmem:[%s169 + $0x9b0] sm:$0xff] %v790
                %v792 = vld [vmem:[%s168 + $0x1348] sm:$0xff]
                %793 = vst [vmem:[%s169 + $0x9b8] sm:$0xff] %v792
                %v794 = vld [vmem:[%s168 + $0x1380] sm:$0xff]
                %795 = vst [vmem:[%s169 + $0x9c0] sm:$0xff] %v794
                %v796 = vld [vmem:[%s168 + $0x1388] sm:$0xff]
                %797 = vst [vmem:[%s169 + $0x9c8] sm:$0xff] %v796
                %v798 = vld [vmem:[%s168 + $0x1390] sm:$0xff]
                %799 = vst [vmem:[%s169 + $0x9d0] sm:$0xff] %v798
                %v800 = vld [vmem:[%s168 + $0x1398] sm:$0xff]
                %801 = vst [vmem:[%s169 + $0x9d8] sm:$0xff] %v800
                %v802 = vld [vmem:[%s168 + $0x13a0] sm:$0xff]
                %803 = vst [vmem:[%s169 + $0x9e0] sm:$0xff] %v802
                %v804 = vld [vmem:[%s168 + $0x13a8] sm:$0xff]
                %805 = vst [vmem:[%s169 + $0x9e8] sm:$0xff] %v804
                %v806 = vld [vmem:[%s168 + $0x13e0] sm:$0xff]
                %807 = vst [vmem:[%s169 + $0x9f0] sm:$0xff] %v806
                %v808 = vld [vmem:[%s168 + $0x13e8] sm:$0xff]
                %809 = vst [vmem:[%s169 + $0x9f8] sm:$0xff] %v808
                %v810 = vld [vmem:[%s168 + $0x13f0] sm:$0xff]
                %811 = vst [vmem:[%s169 + $0xa00] sm:$0xff] %v810
                %v812 = vld [vmem:[%s168 + $0x13f8] sm:$0xff]
                %813 = vst [vmem:[%s169 + $0xa08] sm:$0xff] %v812
                %v814 = vld [vmem:[%s168 + $0x1400] sm:$0xff]
                %815 = vst [vmem:[%s169 + $0xa10] sm:$0xff] %v814
                %v816 = vld [vmem:[%s168 + $0x1408] sm:$0xff]
                %817 = vst [vmem:[%s169 + $0xa18] sm:$0xff] %v816
              $region37: #{aspp_pallas.1} parent=31 // loop_footer
                %s167 = sadd.s32 1, %s163
              $region38: #{aspp_pallas.1} parent=31 // loop_footer_branch
                %162 = sbr.rel target = $region34
              $region39: #{aspp_pallas.1} parent=31 // loop_exit
                _
            $region32: #{aspp_pallas.1} parent=27 // pred_fallthru
              _
            // Predicated region
            $region40: #{aspp_pallas.1} parent=27 // pred_check
              _
            $region41: #{aspp_pallas.1} parent=27 // pred_check_branch
              %819 = sbr.rel target = $region43
            $region42: #{aspp_pallas.1} parent=27 // pred_region
              _
            $region43: #{aspp_pallas.1} parent=27 // pred_fallthru
              _
          $region28: #{aspp_pallas.1} parent=23 // pred_fallthru
            _
          %820 = vnop
        $region24: #{aspp_pallas.1} parent=19 // pred_fallthru
          _
        // Predicated region
        $region44: #{aspp_pallas.1} parent=19 // pred_check
          %p821 = pneg %p90
        $region45: #{aspp_pallas.1} parent=19 // pred_check_branch
          %823 = sbr.rel (%p821) target = $region47
        $region46: #{aspp_pallas.1} parent=19 // pred_region
          %p824 = scmp.lt.s32.totalorder %s16, 1
          %s825 = scalar_select %p824, %s16, 1
          %s826 = smul.addr %s825, 4
          %s827 = scalar_lea.vmem %s2, %s826
        $region47: #{aspp_pallas.1} parent=19 // pred_fallthru
          _
      $region20: #{aspp_pallas.1} parent=5 // pred_fallthru
        _
      %p828 = scmp.le.s32.totalorder 1, %s9
      %p829 = scmp.lt.s32.totalorder %s9, 5
      %p830 = pnand %p828, %p829
      %p831 = pneg %p830
      // Predicated region
      $region48: #{aspp_pallas.1} parent=5 // pred_check
        _
      $region49: #{aspp_pallas.1} parent=5 // pred_check_branch
        %833 = sbr.rel (%p830) target = $region51
      $region50: #{aspp_pallas.1} parent=5 // pred_region
        %s834 = ssub.s32 %s9, 1
        %s835 = sand.u32 %s36, 1
        %s836 = sand.u32 %s36, 1
        %s837 = smul.addr %s836, 2592
        %s838 = scalar_lea.vmem [#allocation2], %s837
        // Predicated region
        $region52: #{aspp_pallas.1} parent=50 // pred_check
          %p839 = pneg %p49
        $region53: #{aspp_pallas.1} parent=50 // pred_check_branch
          %841 = sbr.rel (%p839) target = $region55
        $region54: #{aspp_pallas.1} parent=50 // pred_region
          _
        $region55: #{aspp_pallas.1} parent=50 // pred_fallthru
          _
        %s842 = sand.u32 %s36, 1
        %s843 = sand.u32 %s36, 1
        %s844 = smul.addr %s843, 2592
        %s845 = scalar_lea.vmem [#allocation2], %s844
        %p846 = pneg %p49
        %p847 = pneg %p46
        %p848 = pneg %p70
        %p849 = pneg %p67
        %p850 = scmp.lt.s32.totalorder %s18, 1
        %s851 = scalar_select %p850, %s18, 1
        %s852 = smul.addr %s851, 4
        %s853 = scalar_lea.vmem %s2, %s852
        %p854 = pneg %p96
        %p855 = pneg %p93
        %p856 = pneg %p124
        %p857 = pneg %p121
        %s858 = smul.u32 12, %s19
        %p859 = scmp.lt.s32.totalorder %s18, 1
        %s860 = scalar_select %p859, %s18, 1
        %p861 = scmp.lt.s32.totalorder %s858, 23
        %s862 = scalar_select %p861, %s858, 23
        %s863 = smul.addr %s860, 24
        %s864 = sadd.s32 %s862, %s863
        %s865 = smul.addr %s864, 4
        %s866 = scalar_lea.vmem %s3, %s865
        %s867 = smul.u32 12, %s19
        %p868 = scmp.lt.s32.totalorder %s18, 1
        %s869 = scalar_select %p868, %s18, 1
        %s870 = smul.addr %s869, 4
        %s871 = scalar_lea.vmem %s2, %s870
        %s872 = smul.u32 12, %s19
        %p873 = scmp.lt.s32.totalorder %s18, 1
        %s874 = scalar_select %p873, %s18, 1
        %p875 = scmp.lt.s32.totalorder %s872, 23
        %s876 = scalar_select %p875, %s872, 23
        %s877 = smul.addr %s874, 24
        %s878 = sadd.s32 %s876, %s877
        %s879 = smul.addr %s878, 4
        %s880 = scalar_lea.vmem %s3, %s879
        %s881 = smul.u32 12, %s19
        %v883 = vld [vmem:[%s1] sm:$0xff]
        %v884 = vld [vmem:[%s838] sm:$0xff]
        %v885 = vld [vmem:[%s838 + $0x8] sm:$0xff]
        %v886 = vld [vmem:[%s838 + $0x10] sm:$0xff]
        %v887 = vld [vmem:[%s838 + $0x18] sm:$0xff]
        %v888 = vld [vmem:[%s838 + $0x20] sm:$0xff]
        %v889 = vld [vmem:[%s838 + $0x28] sm:$0xff]
        %v890 = vld [vmem:[%s838 + $0x30] sm:$0xff]
        %v891 = vld [vmem:[%s838 + $0x38] sm:$0xff]
        %v892 = vld [vmem:[%s838 + $0x40] sm:$0xff]
        %v893 = vld [vmem:[%s838 + $0x48] sm:$0xff]
        %v894 = vld [vmem:[%s838 + $0x50] sm:$0xff]
        %v895 = vld [vmem:[%s838 + $0x58] sm:$0xff]
        %v896 = vld [vmem:[%s838 + $0x60] sm:$0xff]
        %v897 = vld [vmem:[%s838 + $0x68] sm:$0xff]
        %v898 = vld [vmem:[%s838 + $0x70] sm:$0xff]
        %v899 = vld [vmem:[%s838 + $0x78] sm:$0xff]
        %v900 = vld [vmem:[%s838 + $0x80] sm:$0xff]
        %v901 = vld [vmem:[%s838 + $0x88] sm:$0xff]
        %v902 = vld [vmem:[%s838 + $0x90] sm:$0xff]
        %v903 = vld [vmem:[%s838 + $0x98] sm:$0xff]
        %v904 = vld [vmem:[%s838 + $0xa0] sm:$0xff]
        %v905 = vld [vmem:[%s838 + $0xa8] sm:$0xff]
        %v906 = vld [vmem:[%s838 + $0xb0] sm:$0xff]
        %v907 = vld [vmem:[%s838 + $0xb8] sm:$0xff]
        %v908 = vld [vmem:[%s838 + $0xc0] sm:$0xff]
        %v909 = vld [vmem:[%s838 + $0xc8] sm:$0xff]
        %v910 = vld [vmem:[%s838 + $0xd0] sm:$0xff]
        %v911 = vld [vmem:[%s838 + $0xd8] sm:$0xff]
        %v912 = vld [vmem:[%s838 + $0xe0] sm:$0xff]
        %v913 = vld [vmem:[%s838 + $0xe8] sm:$0xff]
        %v914 = vld [vmem:[%s838 + $0xf0] sm:$0xff]
        %v915 = vld [vmem:[%s838 + $0xf8] sm:$0xff]
        %v916 = vld [vmem:[%s838 + $0x100] sm:$0xff]
        %v917 = vld [vmem:[%s838 + $0x108] sm:$0xff]
        %v918 = vld [vmem:[%s838 + $0x110] sm:$0xff]
        %v919 = vld [vmem:[%s838 + $0x118] sm:$0xff]
        %v920 = vld [vmem:[%s838 + $0x120] sm:$0xff]
        %v921 = vld [vmem:[%s838 + $0x128] sm:$0xff]
        %v922 = vld [vmem:[%s838 + $0x130] sm:$0xff]
        %v923 = vld [vmem:[%s838 + $0x138] sm:$0xff]
        %v924 = vld [vmem:[%s838 + $0x140] sm:$0xff]
        %v925 = vld [vmem:[%s838 + $0x148] sm:$0xff]
        %v926 = vld [vmem:[%s838 + $0x150] sm:$0xff]
        %v927 = vld [vmem:[%s838 + $0x158] sm:$0xff]
        %v928 = vld [vmem:[%s838 + $0x160] sm:$0xff]
        %v929 = vld [vmem:[%s838 + $0x168] sm:$0xff]
        %v930 = vld [vmem:[%s838 + $0x170] sm:$0xff]
        %v931 = vld [vmem:[%s838 + $0x178] sm:$0xff]
        %v932 = vld [vmem:[%s838 + $0x180] sm:$0xff]
        %v933 = vld [vmem:[%s838 + $0x188] sm:$0xff]
        %v934 = vld [vmem:[%s838 + $0x190] sm:$0xff]
        %v935 = vld [vmem:[%s838 + $0x198] sm:$0xff]
        %v936 = vld [vmem:[%s838 + $0x1a0] sm:$0xff]
        %v937 = vld [vmem:[%s838 + $0x1a8] sm:$0xff]
        %v938 = vld [vmem:[%s838 + $0x1b0] sm:$0xff]
        %v939 = vld [vmem:[%s838 + $0x1b8] sm:$0xff]
        %v940 = vld [vmem:[%s838 + $0x1c0] sm:$0xff]
        %v941 = vld [vmem:[%s838 + $0x1c8] sm:$0xff]
        %v942 = vld [vmem:[%s838 + $0x1d0] sm:$0xff]
        %v943 = vld [vmem:[%s838 + $0x1d8] sm:$0xff]
        %v944 = vld [vmem:[%s838 + $0x1e0] sm:$0xff]
        %v945 = vld [vmem:[%s838 + $0x1e8] sm:$0xff]
        %v946 = vld [vmem:[%s838 + $0x1f0] sm:$0xff]
        %v947 = vld [vmem:[%s838 + $0x1f8] sm:$0xff]
        %v948 = vld [vmem:[%s838 + $0x200] sm:$0xff]
        %v949 = vld [vmem:[%s838 + $0x208] sm:$0xff]
        %v950 = vld [vmem:[%s838 + $0x210] sm:$0xff]
        %v951 = vld [vmem:[%s838 + $0x218] sm:$0xff]
        %v952 = vld [vmem:[%s838 + $0x220] sm:$0xff]
        %v953 = vld [vmem:[%s838 + $0x228] sm:$0xff]
        %v954 = vld [vmem:[%s838 + $0x230] sm:$0xff]
        %v955 = vld [vmem:[%s838 + $0x238] sm:$0xff]
        %v956 = vld [vmem:[%s838 + $0x240] sm:$0xff]
        %v957 = vld [vmem:[%s838 + $0x248] sm:$0xff]
        %v958 = vld [vmem:[%s838 + $0x250] sm:$0xff]
        %v959 = vld [vmem:[%s838 + $0x258] sm:$0xff]
        %v960 = vld [vmem:[%s838 + $0x260] sm:$0xff]
        %v961 = vld [vmem:[%s838 + $0x268] sm:$0xff]
        %v962 = vld [vmem:[%s838 + $0x270] sm:$0xff]
        %v963 = vld [vmem:[%s838 + $0x278] sm:$0xff]
        %v964 = vld [vmem:[%s838 + $0x280] sm:$0xff]
        %v965 = vld [vmem:[%s838 + $0x288] sm:$0xff]
        %v966 = vld [vmem:[%s838 + $0x290] sm:$0xff]
        %v967 = vld [vmem:[%s838 + $0x298] sm:$0xff]
        %v968 = vld [vmem:[%s838 + $0x2a0] sm:$0xff]
        %v969 = vld [vmem:[%s838 + $0x2a8] sm:$0xff]
        %v970 = vld [vmem:[%s838 + $0x2b0] sm:$0xff]
        %v971 = vld [vmem:[%s838 + $0x2b8] sm:$0xff]
        %v972 = vld [vmem:[%s838 + $0x2c0] sm:$0xff]
        %v973 = vld [vmem:[%s838 + $0x2c8] sm:$0xff]
        %v974 = vld [vmem:[%s838 + $0x2d0] sm:$0xff]
        %v975 = vld [vmem:[%s838 + $0x2d8] sm:$0xff]
        %v976 = vld [vmem:[%s838 + $0x2e0] sm:$0xff]
        %v977 = vld [vmem:[%s838 + $0x2e8] sm:$0xff]
        %v978 = vld [vmem:[%s838 + $0x2f0] sm:$0xff]
        %v979 = vld [vmem:[%s838 + $0x2f8] sm:$0xff]
        %v980 = vld [vmem:[%s838 + $0x300] sm:$0xff]
        %v981 = vld [vmem:[%s838 + $0x308] sm:$0xff]
        %v982 = vld [vmem:[%s838 + $0x310] sm:$0xff]
        %v983 = vld [vmem:[%s838 + $0x318] sm:$0xff]
        %v984 = vld [vmem:[%s838 + $0x320] sm:$0xff]
        %v985 = vld [vmem:[%s838 + $0x328] sm:$0xff]
        %v986 = vld [vmem:[%s838 + $0x330] sm:$0xff]
        %v987 = vld [vmem:[%s838 + $0x338] sm:$0xff]
        %v988 = vld [vmem:[%s838 + $0x340] sm:$0xff]
        %v989 = vld [vmem:[%s838 + $0x348] sm:$0xff]
        %v990 = vld [vmem:[%s838 + $0x350] sm:$0xff]
        %v991 = vld [vmem:[%s838 + $0x358] sm:$0xff]
        %v992 = vld [vmem:[%s838 + $0x360] sm:$0xff]
        %v993 = vld [vmem:[%s838 + $0x368] sm:$0xff]
        %v994 = vld [vmem:[%s838 + $0x370] sm:$0xff]
        %v995 = vld [vmem:[%s838 + $0x378] sm:$0xff]
        %v996 = vld [vmem:[%s838 + $0x380] sm:$0xff]
        %v997 = vld [vmem:[%s838 + $0x388] sm:$0xff]
        %v998 = vld [vmem:[%s838 + $0x390] sm:$0xff]
        %v999 = vld [vmem:[%s838 + $0x398] sm:$0xff]
        %v1000 = vld [vmem:[%s838 + $0x3a0] sm:$0xff]
        %v1001 = vld [vmem:[%s838 + $0x3a8] sm:$0xff]
        %v1002 = vld [vmem:[%s838 + $0x3b0] sm:$0xff]
        %v1003 = vld [vmem:[%s838 + $0x3b8] sm:$0xff]
        %v1004 = vld [vmem:[%s838 + $0x3c0] sm:$0xff]
        %v1005 = vld [vmem:[%s838 + $0x3c8] sm:$0xff]
        %v1006 = vld [vmem:[%s838 + $0x3d0] sm:$0xff]
        %v1007 = vld [vmem:[%s838 + $0x3d8] sm:$0xff]
        %v1008 = vld [vmem:[%s838 + $0x3e0] sm:$0xff]
        %v1009 = vld [vmem:[%s838 + $0x3e8] sm:$0xff]
        %v1010 = vld [vmem:[%s838 + $0x3f0] sm:$0xff]
        %v1011 = vld [vmem:[%s838 + $0x3f8] sm:$0xff]
        %v1012 = vld [vmem:[%s838 + $0x400] sm:$0xff]
        %v1013 = vld [vmem:[%s838 + $0x408] sm:$0xff]
        %v1014 = vld [vmem:[%s838 + $0x410] sm:$0xff]
        %v1015 = vld [vmem:[%s838 + $0x418] sm:$0xff]
        %v1016 = vld [vmem:[%s838 + $0x420] sm:$0xff]
        %v1017 = vld [vmem:[%s838 + $0x428] sm:$0xff]
        %v1018 = vld [vmem:[%s838 + $0x430] sm:$0xff]
        %v1019 = vld [vmem:[%s838 + $0x438] sm:$0xff]
        %v1020 = vld [vmem:[%s838 + $0x440] sm:$0xff]
        %v1021 = vld [vmem:[%s838 + $0x448] sm:$0xff]
        %v1022 = vld [vmem:[%s838 + $0x450] sm:$0xff]
        %v1023 = vld [vmem:[%s838 + $0x458] sm:$0xff]
        %v1024 = vld [vmem:[%s838 + $0x460] sm:$0xff]
        %v1025 = vld [vmem:[%s838 + $0x468] sm:$0xff]
        %v1026 = vld [vmem:[%s838 + $0x470] sm:$0xff]
        %v1027 = vld [vmem:[%s838 + $0x478] sm:$0xff]
        %v1028 = vld [vmem:[%s838 + $0x480] sm:$0xff]
        %v1029 = vld [vmem:[%s838 + $0x488] sm:$0xff]
        %v1030 = vld [vmem:[%s838 + $0x490] sm:$0xff]
        %v1031 = vld [vmem:[%s838 + $0x498] sm:$0xff]
        %v1032 = vld [vmem:[%s838 + $0x4a0] sm:$0xff]
        %v1033 = vld [vmem:[%s838 + $0x4a8] sm:$0xff]
        %v1034 = vld [vmem:[%s838 + $0x4b0] sm:$0xff]
        %v1035 = vld [vmem:[%s838 + $0x4b8] sm:$0xff]
        %v1036 = vld [vmem:[%s838 + $0x4c0] sm:$0xff]
        %v1037 = vld [vmem:[%s838 + $0x4c8] sm:$0xff]
        %v1038 = vld [vmem:[%s838 + $0x4d0] sm:$0xff]
        %v1039 = vld [vmem:[%s838 + $0x4d8] sm:$0xff]
        %v1040 = vld [vmem:[%s838 + $0x4e0] sm:$0xff]
        %v1041 = vld [vmem:[%s838 + $0x4e8] sm:$0xff]
        %v1042 = vld [vmem:[%s838 + $0x4f0] sm:$0xff]
        %v1043 = vld [vmem:[%s838 + $0x4f8] sm:$0xff]
        %v1044 = vld [vmem:[%s838 + $0x500] sm:$0xff]
        %v1045 = vld [vmem:[%s838 + $0x508] sm:$0xff]
        %v1046 = vld [vmem:[%s838 + $0x510] sm:$0xff]
        %v1047 = vld [vmem:[%s838 + $0x518] sm:$0xff]
        %v1048 = vld [vmem:[%s838 + $0x520] sm:$0xff]
        %v1049 = vld [vmem:[%s838 + $0x528] sm:$0xff]
        %v1050 = vld [vmem:[%s838 + $0x530] sm:$0xff]
        %v1051 = vld [vmem:[%s838 + $0x538] sm:$0xff]
        %v1052 = vld [vmem:[%s838 + $0x540] sm:$0xff]
        %v1053 = vld [vmem:[%s838 + $0x548] sm:$0xff]
        %v1054 = vld [vmem:[%s838 + $0x550] sm:$0xff]
        %v1055 = vld [vmem:[%s838 + $0x558] sm:$0xff]
        %v1056 = vld [vmem:[%s838 + $0x560] sm:$0xff]
        %v1057 = vld [vmem:[%s838 + $0x568] sm:$0xff]
        %v1058 = vld [vmem:[%s838 + $0x570] sm:$0xff]
        %v1059 = vld [vmem:[%s838 + $0x578] sm:$0xff]
        %v1060 = vld [vmem:[%s838 + $0x580] sm:$0xff]
        %v1061 = vld [vmem:[%s838 + $0x588] sm:$0xff]
        %v1062 = vld [vmem:[%s838 + $0x590] sm:$0xff]
        %v1063 = vld [vmem:[%s838 + $0x598] sm:$0xff]
        %v1064 = vld [vmem:[%s838 + $0x5a0] sm:$0xff]
        %v1065 = vld [vmem:[%s838 + $0x5a8] sm:$0xff]
        %v1066 = vld [vmem:[%s838 + $0x5b0] sm:$0xff]
        %v1067 = vld [vmem:[%s838 + $0x5b8] sm:$0xff]
        %v1068 = vld [vmem:[%s838 + $0x5c0] sm:$0xff]
        %v1069 = vld [vmem:[%s838 + $0x5c8] sm:$0xff]
        %v1070 = vld [vmem:[%s838 + $0x5d0] sm:$0xff]
        %v1071 = vld [vmem:[%s838 + $0x5d8] sm:$0xff]
        %v1072 = vld [vmem:[%s838 + $0x5e0] sm:$0xff]
        %v1073 = vld [vmem:[%s838 + $0x5e8] sm:$0xff]
        %v1074 = vld [vmem:[%s838 + $0x5f0] sm:$0xff]
        %v1075 = vld [vmem:[%s838 + $0x5f8] sm:$0xff]
        %v1076 = vld [vmem:[%s838 + $0x600] sm:$0xff]
        %v1077 = vld [vmem:[%s838 + $0x608] sm:$0xff]
        %v1078 = vld [vmem:[%s838 + $0x610] sm:$0xff]
        %v1079 = vld [vmem:[%s838 + $0x618] sm:$0xff]
        %v1080 = vld [vmem:[%s838 + $0x620] sm:$0xff]
        %v1081 = vld [vmem:[%s838 + $0x628] sm:$0xff]
        %v1082 = vld [vmem:[%s838 + $0x630] sm:$0xff]
        %v1083 = vld [vmem:[%s838 + $0x638] sm:$0xff]
        %v1084 = vld [vmem:[%s838 + $0x640] sm:$0xff]
        %v1085 = vld [vmem:[%s838 + $0x648] sm:$0xff]
        %v1086 = vld [vmem:[%s838 + $0x650] sm:$0xff]
        %v1087 = vld [vmem:[%s838 + $0x658] sm:$0xff]
        %v1088 = vld [vmem:[%s838 + $0x660] sm:$0xff]
        %v1089 = vld [vmem:[%s838 + $0x668] sm:$0xff]
        %v1090 = vld [vmem:[%s838 + $0x670] sm:$0xff]
        %v1091 = vld [vmem:[%s838 + $0x678] sm:$0xff]
        %v1092 = vld [vmem:[%s838 + $0x680] sm:$0xff]
        %v1093 = vld [vmem:[%s838 + $0x688] sm:$0xff]
        %v1094 = vld [vmem:[%s838 + $0x690] sm:$0xff]
        %v1095 = vld [vmem:[%s838 + $0x698] sm:$0xff]
        %v1096 = vld [vmem:[%s838 + $0x6a0] sm:$0xff]
        %v1097 = vld [vmem:[%s838 + $0x6a8] sm:$0xff]
        %v1098 = vld [vmem:[%s838 + $0x6b0] sm:$0xff]
        %v1099 = vld [vmem:[%s838 + $0x6b8] sm:$0xff]
        %v1100 = vld [vmem:[%s838 + $0x6c0] sm:$0xff]
        %v1101 = vld [vmem:[%s838 + $0x6c8] sm:$0xff]
        %v1102 = vld [vmem:[%s838 + $0x6d0] sm:$0xff]
        %v1103 = vld [vmem:[%s838 + $0x6d8] sm:$0xff]
        %v1104 = vld [vmem:[%s838 + $0x6e0] sm:$0xff]
        %v1105 = vld [vmem:[%s838 + $0x6e8] sm:$0xff]
        %v1106 = vld [vmem:[%s838 + $0x6f0] sm:$0xff]
        %v1107 = vld [vmem:[%s838 + $0x6f8] sm:$0xff]
        %v1108 = vld [vmem:[%s838 + $0x700] sm:$0xff]
        %v1109 = vld [vmem:[%s838 + $0x708] sm:$0xff]
        %v1110 = vld [vmem:[%s838 + $0x710] sm:$0xff]
        %v1111 = vld [vmem:[%s838 + $0x718] sm:$0xff]
        %v1112 = vld [vmem:[%s838 + $0x720] sm:$0xff]
        %v1113 = vld [vmem:[%s838 + $0x728] sm:$0xff]
        %v1114 = vld [vmem:[%s838 + $0x730] sm:$0xff]
        %v1115 = vld [vmem:[%s838 + $0x738] sm:$0xff]
        %v1116 = vld [vmem:[%s838 + $0x740] sm:$0xff]
        %v1117 = vld [vmem:[%s838 + $0x748] sm:$0xff]
        %v1118 = vld [vmem:[%s838 + $0x750] sm:$0xff]
        %v1119 = vld [vmem:[%s838 + $0x758] sm:$0xff]
        %v1120 = vld [vmem:[%s838 + $0x760] sm:$0xff]
        %v1121 = vld [vmem:[%s838 + $0x768] sm:$0xff]
        %v1122 = vld [vmem:[%s838 + $0x770] sm:$0xff]
        %v1123 = vld [vmem:[%s838 + $0x778] sm:$0xff]
        %v1124 = vld [vmem:[%s838 + $0x780] sm:$0xff]
        %v1125 = vld [vmem:[%s838 + $0x788] sm:$0xff]
        %v1126 = vld [vmem:[%s838 + $0x790] sm:$0xff]
        %v1127 = vld [vmem:[%s838 + $0x798] sm:$0xff]
        %v1128 = vld [vmem:[%s838 + $0x7a0] sm:$0xff]
        %v1129 = vld [vmem:[%s838 + $0x7a8] sm:$0xff]
        %v1130 = vld [vmem:[%s838 + $0x7b0] sm:$0xff]
        %v1131 = vld [vmem:[%s838 + $0x7b8] sm:$0xff]
        %v1132 = vld [vmem:[%s838 + $0x7c0] sm:$0xff]
        %v1133 = vld [vmem:[%s838 + $0x7c8] sm:$0xff]
        %v1134 = vld [vmem:[%s838 + $0x7d0] sm:$0xff]
        %v1135 = vld [vmem:[%s838 + $0x7d8] sm:$0xff]
        %v1136 = vld [vmem:[%s838 + $0x7e0] sm:$0xff]
        %v1137 = vld [vmem:[%s838 + $0x7e8] sm:$0xff]
        %v1138 = vld [vmem:[%s838 + $0x7f0] sm:$0xff]
        %v1139 = vld [vmem:[%s838 + $0x7f8] sm:$0xff]
        %v1140 = vld [vmem:[%s838 + $0x800] sm:$0xff]
        %v1141 = vld [vmem:[%s838 + $0x808] sm:$0xff]
        %v1142 = vld [vmem:[%s838 + $0x810] sm:$0xff]
        %v1143 = vld [vmem:[%s838 + $0x818] sm:$0xff]
        %v1144 = vld [vmem:[%s838 + $0x820] sm:$0xff]
        %v1145 = vld [vmem:[%s838 + $0x828] sm:$0xff]
        %v1146 = vld [vmem:[%s838 + $0x830] sm:$0xff]
        %v1147 = vld [vmem:[%s838 + $0x838] sm:$0xff]
        %v1148 = vld [vmem:[%s838 + $0x840] sm:$0xff]
        %v1149 = vld [vmem:[%s838 + $0x848] sm:$0xff]
        %v1150 = vld [vmem:[%s838 + $0x850] sm:$0xff]
        %v1151 = vld [vmem:[%s838 + $0x858] sm:$0xff]
        %v1152 = vld [vmem:[%s838 + $0x860] sm:$0xff]
        %v1153 = vld [vmem:[%s838 + $0x868] sm:$0xff]
        %v1154 = vld [vmem:[%s838 + $0x870] sm:$0xff]
        %v1155 = vld [vmem:[%s838 + $0x878] sm:$0xff]
        %v1156 = vld [vmem:[%s838 + $0x880] sm:$0xff]
        %v1157 = vld [vmem:[%s838 + $0x888] sm:$0xff]
        %v1158 = vld [vmem:[%s838 + $0x890] sm:$0xff]
        %v1159 = vld [vmem:[%s838 + $0x898] sm:$0xff]
        %v1160 = vld [vmem:[%s838 + $0x8a0] sm:$0xff]
        %v1161 = vld [vmem:[%s838 + $0x8a8] sm:$0xff]
        %v1162 = vld [vmem:[%s838 + $0x8b0] sm:$0xff]
        %v1163 = vld [vmem:[%s838 + $0x8b8] sm:$0xff]
        %v1164 = vld [vmem:[%s838 + $0x8c0] sm:$0xff]
        %v1165 = vld [vmem:[%s838 + $0x8c8] sm:$0xff]
        %v1166 = vld [vmem:[%s838 + $0x8d0] sm:$0xff]
        %v1167 = vld [vmem:[%s838 + $0x8d8] sm:$0xff]
        %v1168 = vld [vmem:[%s838 + $0x8e0] sm:$0xff]
        %v1169 = vld [vmem:[%s838 + $0x8e8] sm:$0xff]
        %v1170 = vld [vmem:[%s838 + $0x8f0] sm:$0xff]
        %v1171 = vld [vmem:[%s838 + $0x8f8] sm:$0xff]
        %v1172 = vld [vmem:[%s838 + $0x900] sm:$0xff]
        %v1173 = vld [vmem:[%s838 + $0x908] sm:$0xff]
        %v1174 = vld [vmem:[%s838 + $0x910] sm:$0xff]
        %v1175 = vld [vmem:[%s838 + $0x918] sm:$0xff]
        %v1176 = vld [vmem:[%s838 + $0x920] sm:$0xff]
        %v1177 = vld [vmem:[%s838 + $0x928] sm:$0xff]
        %v1178 = vld [vmem:[%s838 + $0x930] sm:$0xff]
        %v1179 = vld [vmem:[%s838 + $0x938] sm:$0xff]
        %v1180 = vld [vmem:[%s838 + $0x940] sm:$0xff]
        %v1181 = vld [vmem:[%s838 + $0x948] sm:$0xff]
        %v1182 = vld [vmem:[%s838 + $0x950] sm:$0xff]
        %v1183 = vld [vmem:[%s838 + $0x958] sm:$0xff]
        %v1184 = vld [vmem:[%s838 + $0x960] sm:$0xff]
        %v1185 = vld [vmem:[%s838 + $0x968] sm:$0xff]
        %v1186 = vld [vmem:[%s838 + $0x970] sm:$0xff]
        %v1187 = vld [vmem:[%s838 + $0x978] sm:$0xff]
        %v1188 = vld [vmem:[%s838 + $0x980] sm:$0xff]
        %v1189 = vld [vmem:[%s838 + $0x988] sm:$0xff]
        %v1190 = vld [vmem:[%s838 + $0x990] sm:$0xff]
        %v1191 = vld [vmem:[%s838 + $0x998] sm:$0xff]
        %v1192 = vld [vmem:[%s838 + $0x9a0] sm:$0xff]
        %v1193 = vld [vmem:[%s838 + $0x9a8] sm:$0xff]
        %v1194 = vld [vmem:[%s838 + $0x9b0] sm:$0xff]
        %v1195 = vld [vmem:[%s838 + $0x9b8] sm:$0xff]
        %v1196 = vld [vmem:[%s838 + $0x9c0] sm:$0xff]
        %v1197 = vld [vmem:[%s838 + $0x9c8] sm:$0xff]
        %v1198 = vld [vmem:[%s838 + $0x9d0] sm:$0xff]
        %v1199 = vld [vmem:[%s838 + $0x9d8] sm:$0xff]
        %v1200 = vld [vmem:[%s838 + $0x9e0] sm:$0xff]
        %v1201 = vld [vmem:[%s838 + $0x9e8] sm:$0xff]
        %v1202 = vld [vmem:[%s838 + $0x9f0] sm:$0xff]
        %v1203 = vld [vmem:[%s838 + $0x9f8] sm:$0xff]
        %v1204 = vld [vmem:[%s838 + $0xa00] sm:$0xff]
        %v1205 = vld [vmem:[%s838 + $0xa08] sm:$0xff]
        %v1206 = vld [vmem:[%s838 + $0xa10] sm:$0xff]
        %v1207 = vld [vmem:[%s838 + $0xa18] sm:$0xff]
        %v1208 = vld [vmem:[%s871] sm:$0xf]
        %1210 = vset.pattern.permute.xlu0 0
        %1211 = vperm.xlu0 %1210, %v1208
        %v1212 = vpop.permute.xlu0 %1211
        %1215 = vst [vmem:[#allocation1] ss:$4 sm:$0xff] %v883
        %v1216 = vld.sshfl [vmem:[#allocation1] sm:$0xff pattern:$0x73625140]
        %v1217 = vld.sshfl [vmem:[#allocation1 + $0x8] sm:$0xff pattern:$0x73625140]
        %v1218 = vld.sshfl [vmem:[#allocation1 + $0x10] sm:$0xff pattern:$0x73625140]
        %v1219 = vld.sshfl [vmem:[#allocation1 + $0x18] sm:$0xff pattern:$0x73625140]
        %v1547 = vunpack.c.l.b16 %v884
        %v1548 = vunpack.c.h.b16 %v884
        %v1549 = vunpack.c.l.b16 %v885
        %v1550 = vunpack.c.h.b16 %v885
        %v1551 = vunpack.c.l.b16 %v886
        %v1552 = vunpack.c.h.b16 %v886
        %v1553 = vunpack.c.l.b16 %v887
        %v1554 = vunpack.c.h.b16 %v887
        %v1555 = vunpack.c.l.b16 %v888
        %v1556 = vunpack.c.h.b16 %v888
        %v1557 = vunpack.c.l.b16 %v889
        %v1558 = vunpack.c.h.b16 %v889
        %v1559 = vunpack.c.l.b16 %v890
        %v1560 = vunpack.c.h.b16 %v890
        %v1561 = vunpack.c.l.b16 %v891
        %v1562 = vunpack.c.h.b16 %v891
        %v1563 = vunpack.c.l.b16 %v892
        %v1564 = vunpack.c.h.b16 %v892
        %v1565 = vunpack.c.l.b16 %v893
        %v1566 = vunpack.c.h.b16 %v893
        %v1567 = vunpack.c.l.b16 %v894
        %v1568 = vunpack.c.h.b16 %v894
        %v1569 = vunpack.c.l.b16 %v895
        %v1570 = vunpack.c.h.b16 %v895
        %v1571 = vunpack.c.l.b16 %v896
        %v1572 = vunpack.c.h.b16 %v896
        %v1573 = vunpack.c.l.b16 %v897
        %v1574 = vunpack.c.h.b16 %v897
        %v1575 = vunpack.c.l.b16 %v898
        %v1576 = vunpack.c.h.b16 %v898
        %v1577 = vunpack.c.l.b16 %v899
        %v1578 = vunpack.c.h.b16 %v899
        %v1579 = vunpack.c.l.b16 %v900
        %v1580 = vunpack.c.h.b16 %v900
        %v1581 = vunpack.c.l.b16 %v901
        %v1582 = vunpack.c.h.b16 %v901
        %v1583 = vunpack.c.l.b16 %v902
        %v1584 = vunpack.c.h.b16 %v902
        %v1585 = vunpack.c.l.b16 %v903
        %v1586 = vunpack.c.h.b16 %v903
        %v1587 = vunpack.c.l.b16 %v904
        %v1588 = vunpack.c.h.b16 %v904
        %v1589 = vunpack.c.l.b16 %v905
        %v1590 = vunpack.c.h.b16 %v905
        %v1591 = vunpack.c.l.b16 %v906
        %v1592 = vunpack.c.h.b16 %v906
        %v1593 = vunpack.c.l.b16 %v907
        %v1594 = vunpack.c.h.b16 %v907
        %v1595 = vunpack.c.l.b16 %v908
        %v1596 = vunpack.c.h.b16 %v908
        %v1597 = vunpack.c.l.b16 %v909
        %v1598 = vunpack.c.h.b16 %v909
        %v1599 = vunpack.c.l.b16 %v910
        %v1600 = vunpack.c.h.b16 %v910
        %v1601 = vunpack.c.l.b16 %v911
        %v1602 = vunpack.c.h.b16 %v911
        %v1603 = vunpack.c.l.b16 %v912
        %v1604 = vunpack.c.h.b16 %v912
        %v1605 = vunpack.c.l.b16 %v913
        %v1606 = vunpack.c.h.b16 %v913
        %v1607 = vunpack.c.l.b16 %v914
        %v1608 = vunpack.c.h.b16 %v914
        %v1609 = vunpack.c.l.b16 %v915
        %v1610 = vunpack.c.h.b16 %v915
        %v1611 = vunpack.c.l.b16 %v916
        %v1612 = vunpack.c.h.b16 %v916
        %v1613 = vunpack.c.l.b16 %v917
        %v1614 = vunpack.c.h.b16 %v917
        %v1615 = vunpack.c.l.b16 %v918
        %v1616 = vunpack.c.h.b16 %v918
        %v1617 = vunpack.c.l.b16 %v919
        %v1618 = vunpack.c.h.b16 %v919
        %v1619 = vunpack.c.l.b16 %v920
        %v1620 = vunpack.c.h.b16 %v920
        %v1621 = vunpack.c.l.b16 %v921
        %v1622 = vunpack.c.h.b16 %v921
        %v1623 = vunpack.c.l.b16 %v922
        %v1624 = vunpack.c.h.b16 %v922
        %v1625 = vunpack.c.l.b16 %v923
        %v1626 = vunpack.c.h.b16 %v923
        %v1627 = vunpack.c.l.b16 %v924
        %v1628 = vunpack.c.h.b16 %v924
        %v1629 = vunpack.c.l.b16 %v925
        %v1630 = vunpack.c.h.b16 %v925
        %v1631 = vunpack.c.l.b16 %v926
        %v1632 = vunpack.c.h.b16 %v926
        %v1633 = vunpack.c.l.b16 %v927
        %v1634 = vunpack.c.h.b16 %v927
        %v1635 = vunpack.c.l.b16 %v928
        %v1636 = vunpack.c.h.b16 %v928
        %v1637 = vunpack.c.l.b16 %v929
        %v1638 = vunpack.c.h.b16 %v929
        %v1639 = vunpack.c.l.b16 %v930
        %v1640 = vunpack.c.h.b16 %v930
        %v1641 = vunpack.c.l.b16 %v931
        %v1642 = vunpack.c.h.b16 %v931
        %v1643 = vunpack.c.l.b16 %v932
        %v1644 = vunpack.c.h.b16 %v932
        %v1645 = vunpack.c.l.b16 %v933
        %v1646 = vunpack.c.h.b16 %v933
        %v1647 = vunpack.c.l.b16 %v934
        %v1648 = vunpack.c.h.b16 %v934
        %v1649 = vunpack.c.l.b16 %v935
        %v1650 = vunpack.c.h.b16 %v935
        %v1651 = vunpack.c.l.b16 %v936
        %v1652 = vunpack.c.h.b16 %v936
        %v1653 = vunpack.c.l.b16 %v937
        %v1654 = vunpack.c.h.b16 %v937
        %v1655 = vunpack.c.l.b16 %v938
        %v1656 = vunpack.c.h.b16 %v938
        %v1657 = vunpack.c.l.b16 %v939
        %v1658 = vunpack.c.h.b16 %v939
        %v1659 = vunpack.c.l.b16 %v940
        %v1660 = vunpack.c.h.b16 %v940
        %v1661 = vunpack.c.l.b16 %v941
        %v1662 = vunpack.c.h.b16 %v941
        %v1663 = vunpack.c.l.b16 %v942
        %v1664 = vunpack.c.h.b16 %v942
        %v1665 = vunpack.c.l.b16 %v943
        %v1666 = vunpack.c.h.b16 %v943
        %v1667 = vunpack.c.l.b16 %v944
        %v1668 = vunpack.c.h.b16 %v944
        %v1669 = vunpack.c.l.b16 %v945
        %v1670 = vunpack.c.h.b16 %v945
        %v1671 = vunpack.c.l.b16 %v946
        %v1672 = vunpack.c.h.b16 %v946
        %v1673 = vunpack.c.l.b16 %v947
        %v1674 = vunpack.c.h.b16 %v947
        %v1675 = vunpack.c.l.b16 %v948
        %v1676 = vunpack.c.h.b16 %v948
        %v1677 = vunpack.c.l.b16 %v949
        %v1678 = vunpack.c.h.b16 %v949
        %v1679 = vunpack.c.l.b16 %v950
        %v1680 = vunpack.c.h.b16 %v950
        %v1681 = vunpack.c.l.b16 %v951
        %v1682 = vunpack.c.h.b16 %v951
        %v1683 = vunpack.c.l.b16 %v952
        %v1684 = vunpack.c.h.b16 %v952
        %v1685 = vunpack.c.l.b16 %v953
        %v1686 = vunpack.c.h.b16 %v953
        %v1687 = vunpack.c.l.b16 %v954
        %v1688 = vunpack.c.h.b16 %v954
        %v1689 = vunpack.c.l.b16 %v955
        %v1690 = vunpack.c.h.b16 %v955
        %v1691 = vunpack.c.l.b16 %v956
        %v1692 = vunpack.c.h.b16 %v956
        %v1693 = vunpack.c.l.b16 %v957
        %v1694 = vunpack.c.h.b16 %v957
        %v1695 = vunpack.c.l.b16 %v958
        %v1696 = vunpack.c.h.b16 %v958
        %v1697 = vunpack.c.l.b16 %v959
        %v1698 = vunpack.c.h.b16 %v959
        %v1699 = vunpack.c.l.b16 %v960
        %v1700 = vunpack.c.h.b16 %v960
        %v1701 = vunpack.c.l.b16 %v961
        %v1702 = vunpack.c.h.b16 %v961
        %v1703 = vunpack.c.l.b16 %v962
        %v1704 = vunpack.c.h.b16 %v962
        %v1705 = vunpack.c.l.b16 %v963
        %v1706 = vunpack.c.h.b16 %v963
        %v1707 = vunpack.c.l.b16 %v964
        %v1708 = vunpack.c.h.b16 %v964
        %v1709 = vunpack.c.l.b16 %v965
        %v1710 = vunpack.c.h.b16 %v965
        %v1711 = vunpack.c.l.b16 %v966
        %v1712 = vunpack.c.h.b16 %v966
        %v1713 = vunpack.c.l.b16 %v967
        %v1714 = vunpack.c.h.b16 %v967
        %v1715 = vunpack.c.l.b16 %v968
        %v1716 = vunpack.c.h.b16 %v968
        %v1717 = vunpack.c.l.b16 %v969
        %v1718 = vunpack.c.h.b16 %v969
        %v1719 = vunpack.c.l.b16 %v970
        %v1720 = vunpack.c.h.b16 %v970
        %v1721 = vunpack.c.l.b16 %v971
        %v1722 = vunpack.c.h.b16 %v971
        %v1723 = vunpack.c.l.b16 %v972
        %v1724 = vunpack.c.h.b16 %v972
        %v1725 = vunpack.c.l.b16 %v973
        %v1726 = vunpack.c.h.b16 %v973
        %v1727 = vunpack.c.l.b16 %v974
        %v1728 = vunpack.c.h.b16 %v974
        %v1729 = vunpack.c.l.b16 %v975
        %v1730 = vunpack.c.h.b16 %v975
        %v1731 = vunpack.c.l.b16 %v976
        %v1732 = vunpack.c.h.b16 %v976
        %v1733 = vunpack.c.l.b16 %v977
        %v1734 = vunpack.c.h.b16 %v977
        %v1735 = vunpack.c.l.b16 %v978
        %v1736 = vunpack.c.h.b16 %v978
        %v1737 = vunpack.c.l.b16 %v979
        %v1738 = vunpack.c.h.b16 %v979
        %v1739 = vunpack.c.l.b16 %v980
        %v1740 = vunpack.c.h.b16 %v980
        %v1741 = vunpack.c.l.b16 %v981
        %v1742 = vunpack.c.h.b16 %v981
        %v1743 = vunpack.c.l.b16 %v982
        %v1744 = vunpack.c.h.b16 %v982
        %v1745 = vunpack.c.l.b16 %v983
        %v1746 = vunpack.c.h.b16 %v983
        %v1747 = vunpack.c.l.b16 %v984
        %v1748 = vunpack.c.h.b16 %v984
        %v1749 = vunpack.c.l.b16 %v985
        %v1750 = vunpack.c.h.b16 %v985
        %v1751 = vunpack.c.l.b16 %v986
        %v1752 = vunpack.c.h.b16 %v986
        %v1753 = vunpack.c.l.b16 %v987
        %v1754 = vunpack.c.h.b16 %v987
        %v1755 = vunpack.c.l.b16 %v988
        %v1756 = vunpack.c.h.b16 %v988
        %v1757 = vunpack.c.l.b16 %v989
        %v1758 = vunpack.c.h.b16 %v989
        %v1759 = vunpack.c.l.b16 %v990
        %v1760 = vunpack.c.h.b16 %v990
        %v1761 = vunpack.c.l.b16 %v991
        %v1762 = vunpack.c.h.b16 %v991
        %v1763 = vunpack.c.l.b16 %v992
        %v1764 = vunpack.c.h.b16 %v992
        %v1765 = vunpack.c.l.b16 %v993
        %v1766 = vunpack.c.h.b16 %v993
        %v1767 = vunpack.c.l.b16 %v994
        %v1768 = vunpack.c.h.b16 %v994
        %v1769 = vunpack.c.l.b16 %v995
        %v1770 = vunpack.c.h.b16 %v995
        %v1771 = vunpack.c.l.b16 %v996
        %v1772 = vunpack.c.h.b16 %v996
        %v1773 = vunpack.c.l.b16 %v997
        %v1774 = vunpack.c.h.b16 %v997
        %v1775 = vunpack.c.l.b16 %v998
        %v1776 = vunpack.c.h.b16 %v998
        %v1777 = vunpack.c.l.b16 %v999
        %v1778 = vunpack.c.h.b16 %v999
        %v1779 = vunpack.c.l.b16 %v1000
        %v1780 = vunpack.c.h.b16 %v1000
        %v1781 = vunpack.c.l.b16 %v1001
        %v1782 = vunpack.c.h.b16 %v1001
        %v1783 = vunpack.c.l.b16 %v1002
        %v1784 = vunpack.c.h.b16 %v1002
        %v1785 = vunpack.c.l.b16 %v1003
        %v1786 = vunpack.c.h.b16 %v1003
        %v1787 = vunpack.c.l.b16 %v1004
        %v1788 = vunpack.c.h.b16 %v1004
        %v1789 = vunpack.c.l.b16 %v1005
        %v1790 = vunpack.c.h.b16 %v1005
        %v1791 = vunpack.c.l.b16 %v1006
        %v1792 = vunpack.c.h.b16 %v1006
        %v1793 = vunpack.c.l.b16 %v1007
        %v1794 = vunpack.c.h.b16 %v1007
        %v1795 = vunpack.c.l.b16 %v1008
        %v1796 = vunpack.c.h.b16 %v1008
        %v1797 = vunpack.c.l.b16 %v1009
        %v1798 = vunpack.c.h.b16 %v1009
        %v1799 = vunpack.c.l.b16 %v1010
        %v1800 = vunpack.c.h.b16 %v1010
        %v1801 = vunpack.c.l.b16 %v1011
        %v1802 = vunpack.c.h.b16 %v1011
        %v1803 = vunpack.c.l.b16 %v1012
        %v1804 = vunpack.c.h.b16 %v1012
        %v1805 = vunpack.c.l.b16 %v1013
        %v1806 = vunpack.c.h.b16 %v1013
        %v1807 = vunpack.c.l.b16 %v1014
        %v1808 = vunpack.c.h.b16 %v1014
        %v1809 = vunpack.c.l.b16 %v1015
        %v1810 = vunpack.c.h.b16 %v1015
        %v1811 = vunpack.c.l.b16 %v1016
        %v1812 = vunpack.c.h.b16 %v1016
        %v1813 = vunpack.c.l.b16 %v1017
        %v1814 = vunpack.c.h.b16 %v1017
        %v1815 = vunpack.c.l.b16 %v1018
        %v1816 = vunpack.c.h.b16 %v1018
        %v1817 = vunpack.c.l.b16 %v1019
        %v1818 = vunpack.c.h.b16 %v1019
        %v1819 = vunpack.c.l.b16 %v1020
        %v1820 = vunpack.c.h.b16 %v1020
        %v1821 = vunpack.c.l.b16 %v1021
        %v1822 = vunpack.c.h.b16 %v1021
        %v1823 = vunpack.c.l.b16 %v1022
        %v1824 = vunpack.c.h.b16 %v1022
        %v1825 = vunpack.c.l.b16 %v1023
        %v1826 = vunpack.c.h.b16 %v1023
        %v1827 = vunpack.c.l.b16 %v1024
        %v1828 = vunpack.c.h.b16 %v1024
        %v1829 = vunpack.c.l.b16 %v1025
        %v1830 = vunpack.c.h.b16 %v1025
        %v1831 = vunpack.c.l.b16 %v1026
        %v1832 = vunpack.c.h.b16 %v1026
        %v1833 = vunpack.c.l.b16 %v1027
        %v1834 = vunpack.c.h.b16 %v1027
        %v1835 = vunpack.c.l.b16 %v1028
        %v1836 = vunpack.c.h.b16 %v1028
        %v1837 = vunpack.c.l.b16 %v1029
        %v1838 = vunpack.c.h.b16 %v1029
        %v1839 = vunpack.c.l.b16 %v1030
        %v1840 = vunpack.c.h.b16 %v1030
        %v1841 = vunpack.c.l.b16 %v1031
        %v1842 = vunpack.c.h.b16 %v1031
        %v1843 = vunpack.c.l.b16 %v1032
        %v1844 = vunpack.c.h.b16 %v1032
        %v1845 = vunpack.c.l.b16 %v1033
        %v1846 = vunpack.c.h.b16 %v1033
        %v1847 = vunpack.c.l.b16 %v1034
        %v1848 = vunpack.c.h.b16 %v1034
        %v1849 = vunpack.c.l.b16 %v1035
        %v1850 = vunpack.c.h.b16 %v1035
        %v1851 = vunpack.c.l.b16 %v1036
        %v1852 = vunpack.c.h.b16 %v1036
        %v1853 = vunpack.c.l.b16 %v1037
        %v1854 = vunpack.c.h.b16 %v1037
        %v1855 = vunpack.c.l.b16 %v1038
        %v1856 = vunpack.c.h.b16 %v1038
        %v1857 = vunpack.c.l.b16 %v1039
        %v1858 = vunpack.c.h.b16 %v1039
        %v1859 = vunpack.c.l.b16 %v1040
        %v1860 = vunpack.c.h.b16 %v1040
        %v1861 = vunpack.c.l.b16 %v1041
        %v1862 = vunpack.c.h.b16 %v1041
        %v1863 = vunpack.c.l.b16 %v1042
        %v1864 = vunpack.c.h.b16 %v1042
        %v1865 = vunpack.c.l.b16 %v1043
        %v1866 = vunpack.c.h.b16 %v1043
        %v1867 = vunpack.c.l.b16 %v1044
        %v1868 = vunpack.c.h.b16 %v1044
        %v1869 = vunpack.c.l.b16 %v1045
        %v1870 = vunpack.c.h.b16 %v1045
        %v1871 = vunpack.c.l.b16 %v1046
        %v1872 = vunpack.c.h.b16 %v1046
        %v1873 = vunpack.c.l.b16 %v1047
        %v1874 = vunpack.c.h.b16 %v1047
        %v1875 = vunpack.c.l.b16 %v1048
        %v1876 = vunpack.c.h.b16 %v1048
        %v1877 = vunpack.c.l.b16 %v1049
        %v1878 = vunpack.c.h.b16 %v1049
        %v1879 = vunpack.c.l.b16 %v1050
        %v1880 = vunpack.c.h.b16 %v1050
        %v1881 = vunpack.c.l.b16 %v1051
        %v1882 = vunpack.c.h.b16 %v1051
        %v1883 = vunpack.c.l.b16 %v1052
        %v1884 = vunpack.c.h.b16 %v1052
        %v1885 = vunpack.c.l.b16 %v1053
        %v1886 = vunpack.c.h.b16 %v1053
        %v1887 = vunpack.c.l.b16 %v1054
        %v1888 = vunpack.c.h.b16 %v1054
        %v1889 = vunpack.c.l.b16 %v1055
        %v1890 = vunpack.c.h.b16 %v1055
        %v1891 = vunpack.c.l.b16 %v1056
        %v1892 = vunpack.c.h.b16 %v1056
        %v1893 = vunpack.c.l.b16 %v1057
        %v1894 = vunpack.c.h.b16 %v1057
        %v1895 = vunpack.c.l.b16 %v1058
        %v1896 = vunpack.c.h.b16 %v1058
        %v1897 = vunpack.c.l.b16 %v1059
        %v1898 = vunpack.c.h.b16 %v1059
        %v1899 = vunpack.c.l.b16 %v1060
        %v1900 = vunpack.c.h.b16 %v1060
        %v1901 = vunpack.c.l.b16 %v1061
        %v1902 = vunpack.c.h.b16 %v1061
        %v1903 = vunpack.c.l.b16 %v1062
        %v1904 = vunpack.c.h.b16 %v1062
        %v1905 = vunpack.c.l.b16 %v1063
        %v1906 = vunpack.c.h.b16 %v1063
        %v1907 = vunpack.c.l.b16 %v1064
        %v1908 = vunpack.c.h.b16 %v1064
        %v1909 = vunpack.c.l.b16 %v1065
        %v1910 = vunpack.c.h.b16 %v1065
        %v1911 = vunpack.c.l.b16 %v1066
        %v1912 = vunpack.c.h.b16 %v1066
        %v1913 = vunpack.c.l.b16 %v1067
        %v1914 = vunpack.c.h.b16 %v1067
        %v1915 = vunpack.c.l.b16 %v1068
        %v1916 = vunpack.c.h.b16 %v1068
        %v1917 = vunpack.c.l.b16 %v1069
        %v1918 = vunpack.c.h.b16 %v1069
        %v1919 = vunpack.c.l.b16 %v1070
        %v1920 = vunpack.c.h.b16 %v1070
        %v1921 = vunpack.c.l.b16 %v1071
        %v1922 = vunpack.c.h.b16 %v1071
        %v1923 = vunpack.c.l.b16 %v1072
        %v1924 = vunpack.c.h.b16 %v1072
        %v1925 = vunpack.c.l.b16 %v1073
        %v1926 = vunpack.c.h.b16 %v1073
        %v1927 = vunpack.c.l.b16 %v1074
        %v1928 = vunpack.c.h.b16 %v1074
        %v1929 = vunpack.c.l.b16 %v1075
        %v1930 = vunpack.c.h.b16 %v1075
        %v1931 = vunpack.c.l.b16 %v1076
        %v1932 = vunpack.c.h.b16 %v1076
        %v1933 = vunpack.c.l.b16 %v1077
        %v1934 = vunpack.c.h.b16 %v1077
        %v1935 = vunpack.c.l.b16 %v1078
        %v1936 = vunpack.c.h.b16 %v1078
        %v1937 = vunpack.c.l.b16 %v1079
        %v1938 = vunpack.c.h.b16 %v1079
        %v1939 = vunpack.c.l.b16 %v1080
        %v1940 = vunpack.c.h.b16 %v1080
        %v1941 = vunpack.c.l.b16 %v1081
        %v1942 = vunpack.c.h.b16 %v1081
        %v1943 = vunpack.c.l.b16 %v1082
        %v1944 = vunpack.c.h.b16 %v1082
        %v1945 = vunpack.c.l.b16 %v1083
        %v1946 = vunpack.c.h.b16 %v1083
        %v1947 = vunpack.c.l.b16 %v1084
        %v1948 = vunpack.c.h.b16 %v1084
        %v1949 = vunpack.c.l.b16 %v1085
        %v1950 = vunpack.c.h.b16 %v1085
        %v1951 = vunpack.c.l.b16 %v1086
        %v1952 = vunpack.c.h.b16 %v1086
        %v1953 = vunpack.c.l.b16 %v1087
        %v1954 = vunpack.c.h.b16 %v1087
        %v1955 = vunpack.c.l.b16 %v1088
        %v1956 = vunpack.c.h.b16 %v1088
        %v1957 = vunpack.c.l.b16 %v1089
        %v1958 = vunpack.c.h.b16 %v1089
        %v1959 = vunpack.c.l.b16 %v1090
        %v1960 = vunpack.c.h.b16 %v1090
        %v1961 = vunpack.c.l.b16 %v1091
        %v1962 = vunpack.c.h.b16 %v1091
        %v1963 = vunpack.c.l.b16 %v1092
        %v1964 = vunpack.c.h.b16 %v1092
        %v1965 = vunpack.c.l.b16 %v1093
        %v1966 = vunpack.c.h.b16 %v1093
        %v1967 = vunpack.c.l.b16 %v1094
        %v1968 = vunpack.c.h.b16 %v1094
        %v1969 = vunpack.c.l.b16 %v1095
        %v1970 = vunpack.c.h.b16 %v1095
        %v1971 = vunpack.c.l.b16 %v1096
        %v1972 = vunpack.c.h.b16 %v1096
        %v1973 = vunpack.c.l.b16 %v1097
        %v1974 = vunpack.c.h.b16 %v1097
        %v1975 = vunpack.c.l.b16 %v1098
        %v1976 = vunpack.c.h.b16 %v1098
        %v1977 = vunpack.c.l.b16 %v1099
        %v1978 = vunpack.c.h.b16 %v1099
        %v1979 = vunpack.c.l.b16 %v1100
        %v1980 = vunpack.c.h.b16 %v1100
        %v1981 = vunpack.c.l.b16 %v1101
        %v1982 = vunpack.c.h.b16 %v1101
        %v1983 = vunpack.c.l.b16 %v1102
        %v1984 = vunpack.c.h.b16 %v1102
        %v1985 = vunpack.c.l.b16 %v1103
        %v1986 = vunpack.c.h.b16 %v1103
        %v1987 = vunpack.c.l.b16 %v1104
        %v1988 = vunpack.c.h.b16 %v1104
        %v1989 = vunpack.c.l.b16 %v1105
        %v1990 = vunpack.c.h.b16 %v1105
        %v1991 = vunpack.c.l.b16 %v1106
        %v1992 = vunpack.c.h.b16 %v1106
        %v1993 = vunpack.c.l.b16 %v1107
        %v1994 = vunpack.c.h.b16 %v1107
        %v1995 = vunpack.c.l.b16 %v1108
        %v1996 = vunpack.c.h.b16 %v1108
        %v1997 = vunpack.c.l.b16 %v1109
        %v1998 = vunpack.c.h.b16 %v1109
        %v1999 = vunpack.c.l.b16 %v1110
        %v2000 = vunpack.c.h.b16 %v1110
        %v2001 = vunpack.c.l.b16 %v1111
        %v2002 = vunpack.c.h.b16 %v1111
        %v2003 = vunpack.c.l.b16 %v1112
        %v2004 = vunpack.c.h.b16 %v1112
        %v2005 = vunpack.c.l.b16 %v1113
        %v2006 = vunpack.c.h.b16 %v1113
        %v2007 = vunpack.c.l.b16 %v1114
        %v2008 = vunpack.c.h.b16 %v1114
        %v2009 = vunpack.c.l.b16 %v1115
        %v2010 = vunpack.c.h.b16 %v1115
        %v2011 = vunpack.c.l.b16 %v1116
        %v2012 = vunpack.c.h.b16 %v1116
        %v2013 = vunpack.c.l.b16 %v1117
        %v2014 = vunpack.c.h.b16 %v1117
        %v2015 = vunpack.c.l.b16 %v1118
        %v2016 = vunpack.c.h.b16 %v1118
        %v2017 = vunpack.c.l.b16 %v1119
        %v2018 = vunpack.c.h.b16 %v1119
        %v2019 = vunpack.c.l.b16 %v1120
        %v2020 = vunpack.c.h.b16 %v1120
        %v2021 = vunpack.c.l.b16 %v1121
        %v2022 = vunpack.c.h.b16 %v1121
        %v2023 = vunpack.c.l.b16 %v1122
        %v2024 = vunpack.c.h.b16 %v1122
        %v2025 = vunpack.c.l.b16 %v1123
        %v2026 = vunpack.c.h.b16 %v1123
        %v2027 = vunpack.c.l.b16 %v1124
        %v2028 = vunpack.c.h.b16 %v1124
        %v2029 = vunpack.c.l.b16 %v1125
        %v2030 = vunpack.c.h.b16 %v1125
        %v2031 = vunpack.c.l.b16 %v1126
        %v2032 = vunpack.c.h.b16 %v1126
        %v2033 = vunpack.c.l.b16 %v1127
        %v2034 = vunpack.c.h.b16 %v1127
        %v2035 = vunpack.c.l.b16 %v1128
        %v2036 = vunpack.c.h.b16 %v1128
        %v2037 = vunpack.c.l.b16 %v1129
        %v2038 = vunpack.c.h.b16 %v1129
        %v2039 = vunpack.c.l.b16 %v1130
        %v2040 = vunpack.c.h.b16 %v1130
        %v2041 = vunpack.c.l.b16 %v1131
        %v2042 = vunpack.c.h.b16 %v1131
        %v2043 = vunpack.c.l.b16 %v1132
        %v2044 = vunpack.c.h.b16 %v1132
        %v2045 = vunpack.c.l.b16 %v1133
        %v2046 = vunpack.c.h.b16 %v1133
        %v2047 = vunpack.c.l.b16 %v1134
        %v2048 = vunpack.c.h.b16 %v1134
        %v2049 = vunpack.c.l.b16 %v1135
        %v2050 = vunpack.c.h.b16 %v1135
        %v2051 = vunpack.c.l.b16 %v1136
        %v2052 = vunpack.c.h.b16 %v1136
        %v2053 = vunpack.c.l.b16 %v1137
        %v2054 = vunpack.c.h.b16 %v1137
        %v2055 = vunpack.c.l.b16 %v1138
        %v2056 = vunpack.c.h.b16 %v1138
        %v2057 = vunpack.c.l.b16 %v1139
        %v2058 = vunpack.c.h.b16 %v1139
        %v2059 = vunpack.c.l.b16 %v1140
        %v2060 = vunpack.c.h.b16 %v1140
        %v2061 = vunpack.c.l.b16 %v1141
        %v2062 = vunpack.c.h.b16 %v1141
        %v2063 = vunpack.c.l.b16 %v1142
        %v2064 = vunpack.c.h.b16 %v1142
        %v2065 = vunpack.c.l.b16 %v1143
        %v2066 = vunpack.c.h.b16 %v1143
        %v2067 = vunpack.c.l.b16 %v1144
        %v2068 = vunpack.c.h.b16 %v1144
        %v2069 = vunpack.c.l.b16 %v1145
        %v2070 = vunpack.c.h.b16 %v1145
        %v2071 = vunpack.c.l.b16 %v1146
        %v2072 = vunpack.c.h.b16 %v1146
        %v2073 = vunpack.c.l.b16 %v1147
        %v2074 = vunpack.c.h.b16 %v1147
        %v2075 = vunpack.c.l.b16 %v1148
        %v2076 = vunpack.c.h.b16 %v1148
        %v2077 = vunpack.c.l.b16 %v1149
        %v2078 = vunpack.c.h.b16 %v1149
        %v2079 = vunpack.c.l.b16 %v1150
        %v2080 = vunpack.c.h.b16 %v1150
        %v2081 = vunpack.c.l.b16 %v1151
        %v2082 = vunpack.c.h.b16 %v1151
        %v2083 = vunpack.c.l.b16 %v1152
        %v2084 = vunpack.c.h.b16 %v1152
        %v2085 = vunpack.c.l.b16 %v1153
        %v2086 = vunpack.c.h.b16 %v1153
        %v2087 = vunpack.c.l.b16 %v1154
        %v2088 = vunpack.c.h.b16 %v1154
        %v2089 = vunpack.c.l.b16 %v1155
        %v2090 = vunpack.c.h.b16 %v1155
        %v2091 = vunpack.c.l.b16 %v1156
        %v2092 = vunpack.c.h.b16 %v1156
        %v2093 = vunpack.c.l.b16 %v1157
        %v2094 = vunpack.c.h.b16 %v1157
        %v2095 = vunpack.c.l.b16 %v1158
        %v2096 = vunpack.c.h.b16 %v1158
        %v2097 = vunpack.c.l.b16 %v1159
        %v2098 = vunpack.c.h.b16 %v1159
        %v2099 = vunpack.c.l.b16 %v1160
        %v2100 = vunpack.c.h.b16 %v1160
        %v2101 = vunpack.c.l.b16 %v1161
        %v2102 = vunpack.c.h.b16 %v1161
        %v2103 = vunpack.c.l.b16 %v1162
        %v2104 = vunpack.c.h.b16 %v1162
        %v2105 = vunpack.c.l.b16 %v1163
        %v2106 = vunpack.c.h.b16 %v1163
        %v2107 = vunpack.c.l.b16 %v1164
        %v2108 = vunpack.c.h.b16 %v1164
        %v2109 = vunpack.c.l.b16 %v1165
        %v2110 = vunpack.c.h.b16 %v1165
        %v2111 = vunpack.c.l.b16 %v1166
        %v2112 = vunpack.c.h.b16 %v1166
        %v2113 = vunpack.c.l.b16 %v1167
        %v2114 = vunpack.c.h.b16 %v1167
        %v2115 = vunpack.c.l.b16 %v1168
        %v2116 = vunpack.c.h.b16 %v1168
        %v2117 = vunpack.c.l.b16 %v1169
        %v2118 = vunpack.c.h.b16 %v1169
        %v2119 = vunpack.c.l.b16 %v1170
        %v2120 = vunpack.c.h.b16 %v1170
        %v2121 = vunpack.c.l.b16 %v1171
        %v2122 = vunpack.c.h.b16 %v1171
        %v2123 = vunpack.c.l.b16 %v1172
        %v2124 = vunpack.c.h.b16 %v1172
        %v2125 = vunpack.c.l.b16 %v1173
        %v2126 = vunpack.c.h.b16 %v1173
        %v2127 = vunpack.c.l.b16 %v1174
        %v2128 = vunpack.c.h.b16 %v1174
        %v2129 = vunpack.c.l.b16 %v1175
        %v2130 = vunpack.c.h.b16 %v1175
        %v2131 = vunpack.c.l.b16 %v1176
        %v2132 = vunpack.c.h.b16 %v1176
        %v2133 = vunpack.c.l.b16 %v1177
        %v2134 = vunpack.c.h.b16 %v1177
        %v2135 = vunpack.c.l.b16 %v1178
        %v2136 = vunpack.c.h.b16 %v1178
        %v2137 = vunpack.c.l.b16 %v1179
        %v2138 = vunpack.c.h.b16 %v1179
        %v2139 = vunpack.c.l.b16 %v1180
        %v2140 = vunpack.c.h.b16 %v1180
        %v2141 = vunpack.c.l.b16 %v1181
        %v2142 = vunpack.c.h.b16 %v1181
        %v2143 = vunpack.c.l.b16 %v1182
        %v2144 = vunpack.c.h.b16 %v1182
        %v2145 = vunpack.c.l.b16 %v1183
        %v2146 = vunpack.c.h.b16 %v1183
        %v2147 = vunpack.c.l.b16 %v1184
        %v2148 = vunpack.c.h.b16 %v1184
        %v2149 = vunpack.c.l.b16 %v1185
        %v2150 = vunpack.c.h.b16 %v1185
        %v2151 = vunpack.c.l.b16 %v1186
        %v2152 = vunpack.c.h.b16 %v1186
        %v2153 = vunpack.c.l.b16 %v1187
        %v2154 = vunpack.c.h.b16 %v1187
        %v2155 = vunpack.c.l.b16 %v1188
        %v2156 = vunpack.c.h.b16 %v1188
        %v2157 = vunpack.c.l.b16 %v1189
        %v2158 = vunpack.c.h.b16 %v1189
        %v2159 = vunpack.c.l.b16 %v1190
        %v2160 = vunpack.c.h.b16 %v1190
        %v2161 = vunpack.c.l.b16 %v1191
        %v2162 = vunpack.c.h.b16 %v1191
        %v2163 = vunpack.c.l.b16 %v1192
        %v2164 = vunpack.c.h.b16 %v1192
        %v2165 = vunpack.c.l.b16 %v1193
        %v2166 = vunpack.c.h.b16 %v1193
        %v2167 = vunpack.c.l.b16 %v1194
        %v2168 = vunpack.c.h.b16 %v1194
        %v2169 = vunpack.c.l.b16 %v1195
        %v2170 = vunpack.c.h.b16 %v1195
        %v2171 = vunpack.c.l.b16 %v1196
        %v2172 = vunpack.c.h.b16 %v1196
        %v2173 = vunpack.c.l.b16 %v1197
        %v2174 = vunpack.c.h.b16 %v1197
        %v2175 = vunpack.c.l.b16 %v1198
        %v2176 = vunpack.c.h.b16 %v1198
        %v2177 = vunpack.c.l.b16 %v1199
        %v2178 = vunpack.c.h.b16 %v1199
        %v2179 = vunpack.c.l.b16 %v1200
        %v2180 = vunpack.c.h.b16 %v1200
        %v2181 = vunpack.c.l.b16 %v1201
        %v2182 = vunpack.c.h.b16 %v1201
        %v2183 = vunpack.c.l.b16 %v1202
        %v2184 = vunpack.c.h.b16 %v1202
        %v2185 = vunpack.c.l.b16 %v1203
        %v2186 = vunpack.c.h.b16 %v1203
        %v2187 = vunpack.c.l.b16 %v1204
        %v2188 = vunpack.c.h.b16 %v1204
        %v2189 = vunpack.c.l.b16 %v1205
        %v2190 = vunpack.c.h.b16 %v1205
        %v2191 = vunpack.c.l.b16 %v1206
        %v2192 = vunpack.c.h.b16 %v1206
        %v2193 = vunpack.c.l.b16 %v1207
        %v2194 = vunpack.c.h.b16 %v1207
        %v2195 = vpack.c.b16 %v1559, %v1547
        %v2196 = vpack.c.b16 %v1560, %v1548
        %v2197 = vpack.c.b16 %v1561, %v1549
        %v2198 = vpack.c.b16 %v1562, %v1550
        %v2199 = vpack.c.b16 %v1563, %v1551
        %v2200 = vpack.c.b16 %v1564, %v1552
        %v2201 = vpack.c.b16 %v1565, %v1553
        %v2202 = vpack.c.b16 %v1566, %v1554
        %v2203 = vpack.c.b16 %v1567, %v1555
        %v2204 = vpack.c.b16 %v1568, %v1556
        %v2205 = vpack.c.b16 %v1569, %v1557
        %v2206 = vpack.c.b16 %v1570, %v1558
        %v2207 = vpack.c.b16 %v1583, %v1571
        %v2208 = vpack.c.b16 %v1584, %v1572
        %v2209 = vpack.c.b16 %v1585, %v1573
        %v2210 = vpack.c.b16 %v1586, %v1574
        %v2211 = vpack.c.b16 %v1587, %v1575
        %v2212 = vpack.c.b16 %v1588, %v1576
        %v2213 = vpack.c.b16 %v1589, %v1577
        %v2214 = vpack.c.b16 %v1590, %v1578
        %v2215 = vpack.c.b16 %v1591, %v1579
        %v2216 = vpack.c.b16 %v1592, %v1580
        %v2217 = vpack.c.b16 %v1593, %v1581
        %v2218 = vpack.c.b16 %v1594, %v1582
        %v2219 = vpack.c.b16 %v1607, %v1595
        %v2220 = vpack.c.b16 %v1608, %v1596
        %v2221 = vpack.c.b16 %v1609, %v1597
        %v2222 = vpack.c.b16 %v1610, %v1598
        %v2223 = vpack.c.b16 %v1611, %v1599
        %v2224 = vpack.c.b16 %v1612, %v1600
        %v2225 = vpack.c.b16 %v1613, %v1601
        %v2226 = vpack.c.b16 %v1614, %v1602
        %v2227 = vpack.c.b16 %v1615, %v1603
        %v2228 = vpack.c.b16 %v1616, %v1604
        %v2229 = vpack.c.b16 %v1617, %v1605
        %v2230 = vpack.c.b16 %v1618, %v1606
        %v2231 = vpack.c.b16 %v1631, %v1619
        %v2232 = vpack.c.b16 %v1632, %v1620
        %v2233 = vpack.c.b16 %v1633, %v1621
        %v2234 = vpack.c.b16 %v1634, %v1622
        %v2235 = vpack.c.b16 %v1635, %v1623
        %v2236 = vpack.c.b16 %v1636, %v1624
        %v2237 = vpack.c.b16 %v1637, %v1625
        %v2238 = vpack.c.b16 %v1638, %v1626
        %v2239 = vpack.c.b16 %v1639, %v1627
        %v2240 = vpack.c.b16 %v1640, %v1628
        %v2241 = vpack.c.b16 %v1641, %v1629
        %v2242 = vpack.c.b16 %v1642, %v1630
        %v2243 = vpack.c.b16 %v1655, %v1643
        %v2244 = vpack.c.b16 %v1656, %v1644
        %v2245 = vpack.c.b16 %v1657, %v1645
        %v2246 = vpack.c.b16 %v1658, %v1646
        %v2247 = vpack.c.b16 %v1659, %v1647
        %v2248 = vpack.c.b16 %v1660, %v1648
        %v2249 = vpack.c.b16 %v1661, %v1649
        %v2250 = vpack.c.b16 %v1662, %v1650
        %v2251 = vpack.c.b16 %v1663, %v1651
        %v2252 = vpack.c.b16 %v1664, %v1652
        %v2253 = vpack.c.b16 %v1665, %v1653
        %v2254 = vpack.c.b16 %v1666, %v1654
        %v2255 = vpack.c.b16 %v1679, %v1667
        %v2256 = vpack.c.b16 %v1680, %v1668
        %v2257 = vpack.c.b16 %v1681, %v1669
        %v2258 = vpack.c.b16 %v1682, %v1670
        %v2259 = vpack.c.b16 %v1683, %v1671
        %v2260 = vpack.c.b16 %v1684, %v1672
        %v2261 = vpack.c.b16 %v1685, %v1673
        %v2262 = vpack.c.b16 %v1686, %v1674
        %v2263 = vpack.c.b16 %v1687, %v1675
        %v2264 = vpack.c.b16 %v1688, %v1676
        %v2265 = vpack.c.b16 %v1689, %v1677
        %v2266 = vpack.c.b16 %v1690, %v1678
        %v2267 = vpack.c.b16 %v1703, %v1691
        %v2268 = vpack.c.b16 %v1704, %v1692
        %v2269 = vpack.c.b16 %v1705, %v1693
        %v2270 = vpack.c.b16 %v1706, %v1694
        %v2271 = vpack.c.b16 %v1707, %v1695
        %v2272 = vpack.c.b16 %v1708, %v1696
        %v2273 = vpack.c.b16 %v1709, %v1697
        %v2274 = vpack.c.b16 %v1710, %v1698
        %v2275 = vpack.c.b16 %v1711, %v1699
        %v2276 = vpack.c.b16 %v1712, %v1700
        %v2277 = vpack.c.b16 %v1713, %v1701
        %v2278 = vpack.c.b16 %v1714, %v1702
        %v2279 = vpack.c.b16 %v1727, %v1715
        %v2280 = vpack.c.b16 %v1728, %v1716
        %v2281 = vpack.c.b16 %v1729, %v1717
        %v2282 = vpack.c.b16 %v1730, %v1718
        %v2283 = vpack.c.b16 %v1731, %v1719
        %v2284 = vpack.c.b16 %v1732, %v1720
        %v2285 = vpack.c.b16 %v1733, %v1721
        %v2286 = vpack.c.b16 %v1734, %v1722
        %v2287 = vpack.c.b16 %v1735, %v1723
        %v2288 = vpack.c.b16 %v1736, %v1724
        %v2289 = vpack.c.b16 %v1737, %v1725
        %v2290 = vpack.c.b16 %v1738, %v1726
        %v2291 = vpack.c.b16 %v1751, %v1739
        %v2292 = vpack.c.b16 %v1752, %v1740
        %v2293 = vpack.c.b16 %v1753, %v1741
        %v2294 = vpack.c.b16 %v1754, %v1742
        %v2295 = vpack.c.b16 %v1755, %v1743
        %v2296 = vpack.c.b16 %v1756, %v1744
        %v2297 = vpack.c.b16 %v1757, %v1745
        %v2298 = vpack.c.b16 %v1758, %v1746
        %v2299 = vpack.c.b16 %v1759, %v1747
        %v2300 = vpack.c.b16 %v1760, %v1748
        %v2301 = vpack.c.b16 %v1761, %v1749
        %v2302 = vpack.c.b16 %v1762, %v1750
        %v2303 = vpack.c.b16 %v1775, %v1763
        %v2304 = vpack.c.b16 %v1776, %v1764
        %v2305 = vpack.c.b16 %v1777, %v1765
        %v2306 = vpack.c.b16 %v1778, %v1766
        %v2307 = vpack.c.b16 %v1779, %v1767
        %v2308 = vpack.c.b16 %v1780, %v1768
        %v2309 = vpack.c.b16 %v1781, %v1769
        %v2310 = vpack.c.b16 %v1782, %v1770
        %v2311 = vpack.c.b16 %v1783, %v1771
        %v2312 = vpack.c.b16 %v1784, %v1772
        %v2313 = vpack.c.b16 %v1785, %v1773
        %v2314 = vpack.c.b16 %v1786, %v1774
        %v2315 = vpack.c.b16 %v1799, %v1787
        %v2316 = vpack.c.b16 %v1800, %v1788
        %v2317 = vpack.c.b16 %v1801, %v1789
        %v2318 = vpack.c.b16 %v1802, %v1790
        %v2319 = vpack.c.b16 %v1803, %v1791
        %v2320 = vpack.c.b16 %v1804, %v1792
        %v2321 = vpack.c.b16 %v1805, %v1793
        %v2322 = vpack.c.b16 %v1806, %v1794
        %v2323 = vpack.c.b16 %v1807, %v1795
        %v2324 = vpack.c.b16 %v1808, %v1796
        %v2325 = vpack.c.b16 %v1809, %v1797
        %v2326 = vpack.c.b16 %v1810, %v1798
        %v2327 = vpack.c.b16 %v1823, %v1811
        %v2328 = vpack.c.b16 %v1824, %v1812
        %v2329 = vpack.c.b16 %v1825, %v1813
        %v2330 = vpack.c.b16 %v1826, %v1814
        %v2331 = vpack.c.b16 %v1827, %v1815
        %v2332 = vpack.c.b16 %v1828, %v1816
        %v2333 = vpack.c.b16 %v1829, %v1817
        %v2334 = vpack.c.b16 %v1830, %v1818
        %v2335 = vpack.c.b16 %v1831, %v1819
        %v2336 = vpack.c.b16 %v1832, %v1820
        %v2337 = vpack.c.b16 %v1833, %v1821
        %v2338 = vpack.c.b16 %v1834, %v1822
        %v2339 = vpack.c.b16 %v1847, %v1835
        %v2340 = vpack.c.b16 %v1848, %v1836
        %v2341 = vpack.c.b16 %v1849, %v1837
        %v2342 = vpack.c.b16 %v1850, %v1838
        %v2343 = vpack.c.b16 %v1851, %v1839
        %v2344 = vpack.c.b16 %v1852, %v1840
        %v2345 = vpack.c.b16 %v1853, %v1841
        %v2346 = vpack.c.b16 %v1854, %v1842
        %v2347 = vpack.c.b16 %v1855, %v1843
        %v2348 = vpack.c.b16 %v1856, %v1844
        %v2349 = vpack.c.b16 %v1857, %v1845
        %v2350 = vpack.c.b16 %v1858, %v1846
        %v2351 = vpack.c.b16 %v1871, %v1859
        %v2352 = vpack.c.b16 %v1872, %v1860
        %v2353 = vpack.c.b16 %v1873, %v1861
        %v2354 = vpack.c.b16 %v1874, %v1862
        %v2355 = vpack.c.b16 %v1875, %v1863
        %v2356 = vpack.c.b16 %v1876, %v1864
        %v2357 = vpack.c.b16 %v1877, %v1865
        %v2358 = vpack.c.b16 %v1878, %v1866
        %v2359 = vpack.c.b16 %v1879, %v1867
        %v2360 = vpack.c.b16 %v1880, %v1868
        %v2361 = vpack.c.b16 %v1881, %v1869
        %v2362 = vpack.c.b16 %v1882, %v1870
        %v2363 = vpack.c.b16 %v1895, %v1883
        %v2364 = vpack.c.b16 %v1896, %v1884
        %v2365 = vpack.c.b16 %v1897, %v1885
        %v2366 = vpack.c.b16 %v1898, %v1886
        %v2367 = vpack.c.b16 %v1899, %v1887
        %v2368 = vpack.c.b16 %v1900, %v1888
        %v2369 = vpack.c.b16 %v1901, %v1889
        %v2370 = vpack.c.b16 %v1902, %v1890
        %v2371 = vpack.c.b16 %v1903, %v1891
        %v2372 = vpack.c.b16 %v1904, %v1892
        %v2373 = vpack.c.b16 %v1905, %v1893
        %v2374 = vpack.c.b16 %v1906, %v1894
        %v2375 = vpack.c.b16 %v1919, %v1907
        %v2376 = vpack.c.b16 %v1920, %v1908
        %v2377 = vpack.c.b16 %v1921, %v1909
        %v2378 = vpack.c.b16 %v1922, %v1910
        %v2379 = vpack.c.b16 %v1923, %v1911
        %v2380 = vpack.c.b16 %v1924, %v1912
        %v2381 = vpack.c.b16 %v1925, %v1913
        %v2382 = vpack.c.b16 %v1926, %v1914
        %v2383 = vpack.c.b16 %v1927, %v1915
        %v2384 = vpack.c.b16 %v1928, %v1916
        %v2385 = vpack.c.b16 %v1929, %v1917
        %v2386 = vpack.c.b16 %v1930, %v1918
        %v2387 = vpack.c.b16 %v1943, %v1931
        %v2388 = vpack.c.b16 %v1944, %v1932
        %v2389 = vpack.c.b16 %v1945, %v1933
        %v2390 = vpack.c.b16 %v1946, %v1934
        %v2391 = vpack.c.b16 %v1947, %v1935
        %v2392 = vpack.c.b16 %v1948, %v1936
        %v2393 = vpack.c.b16 %v1949, %v1937
        %v2394 = vpack.c.b16 %v1950, %v1938
        %v2395 = vpack.c.b16 %v1951, %v1939
        %v2396 = vpack.c.b16 %v1952, %v1940
        %v2397 = vpack.c.b16 %v1953, %v1941
        %v2398 = vpack.c.b16 %v1954, %v1942
        %v2399 = vpack.c.b16 %v1967, %v1955
        %v2400 = vpack.c.b16 %v1968, %v1956
        %v2401 = vpack.c.b16 %v1969, %v1957
        %v2402 = vpack.c.b16 %v1970, %v1958
        %v2403 = vpack.c.b16 %v1971, %v1959
        %v2404 = vpack.c.b16 %v1972, %v1960
        %v2405 = vpack.c.b16 %v1973, %v1961
        %v2406 = vpack.c.b16 %v1974, %v1962
        %v2407 = vpack.c.b16 %v1975, %v1963
        %v2408 = vpack.c.b16 %v1976, %v1964
        %v2409 = vpack.c.b16 %v1977, %v1965
        %v2410 = vpack.c.b16 %v1978, %v1966
        %v2411 = vpack.c.b16 %v1991, %v1979
        %v2412 = vpack.c.b16 %v1992, %v1980
        %v2413 = vpack.c.b16 %v1993, %v1981
        %v2414 = vpack.c.b16 %v1994, %v1982
        %v2415 = vpack.c.b16 %v1995, %v1983
        %v2416 = vpack.c.b16 %v1996, %v1984
        %v2417 = vpack.c.b16 %v1997, %v1985
        %v2418 = vpack.c.b16 %v1998, %v1986
        %v2419 = vpack.c.b16 %v1999, %v1987
        %v2420 = vpack.c.b16 %v2000, %v1988
        %v2421 = vpack.c.b16 %v2001, %v1989
        %v2422 = vpack.c.b16 %v2002, %v1990
        %v2423 = vpack.c.b16 %v2015, %v2003
        %v2424 = vpack.c.b16 %v2016, %v2004
        %v2425 = vpack.c.b16 %v2017, %v2005
        %v2426 = vpack.c.b16 %v2018, %v2006
        %v2427 = vpack.c.b16 %v2019, %v2007
        %v2428 = vpack.c.b16 %v2020, %v2008
        %v2429 = vpack.c.b16 %v2021, %v2009
        %v2430 = vpack.c.b16 %v2022, %v2010
        %v2431 = vpack.c.b16 %v2023, %v2011
        %v2432 = vpack.c.b16 %v2024, %v2012
        %v2433 = vpack.c.b16 %v2025, %v2013
        %v2434 = vpack.c.b16 %v2026, %v2014
        %v2435 = vpack.c.b16 %v2039, %v2027
        %v2436 = vpack.c.b16 %v2040, %v2028
        %v2437 = vpack.c.b16 %v2041, %v2029
        %v2438 = vpack.c.b16 %v2042, %v2030
        %v2439 = vpack.c.b16 %v2043, %v2031
        %v2440 = vpack.c.b16 %v2044, %v2032
        %v2441 = vpack.c.b16 %v2045, %v2033
        %v2442 = vpack.c.b16 %v2046, %v2034
        %v2443 = vpack.c.b16 %v2047, %v2035
        %v2444 = vpack.c.b16 %v2048, %v2036
        %v2445 = vpack.c.b16 %v2049, %v2037
        %v2446 = vpack.c.b16 %v2050, %v2038
        %v2447 = vpack.c.b16 %v2063, %v2051
        %v2448 = vpack.c.b16 %v2064, %v2052
        %v2449 = vpack.c.b16 %v2065, %v2053
        %v2450 = vpack.c.b16 %v2066, %v2054
        %v2451 = vpack.c.b16 %v2067, %v2055
        %v2452 = vpack.c.b16 %v2068, %v2056
        %v2453 = vpack.c.b16 %v2069, %v2057
        %v2454 = vpack.c.b16 %v2070, %v2058
        %v2455 = vpack.c.b16 %v2071, %v2059
        %v2456 = vpack.c.b16 %v2072, %v2060
        %v2457 = vpack.c.b16 %v2073, %v2061
        %v2458 = vpack.c.b16 %v2074, %v2062
        %v2459 = vpack.c.b16 %v2087, %v2075
        %v2460 = vpack.c.b16 %v2088, %v2076
        %v2461 = vpack.c.b16 %v2089, %v2077
        %v2462 = vpack.c.b16 %v2090, %v2078
        %v2463 = vpack.c.b16 %v2091, %v2079
        %v2464 = vpack.c.b16 %v2092, %v2080
        %v2465 = vpack.c.b16 %v2093, %v2081
        %v2466 = vpack.c.b16 %v2094, %v2082
        %v2467 = vpack.c.b16 %v2095, %v2083
        %v2468 = vpack.c.b16 %v2096, %v2084
        %v2469 = vpack.c.b16 %v2097, %v2085
        %v2470 = vpack.c.b16 %v2098, %v2086
        %v2471 = vpack.c.b16 %v2111, %v2099
        %v2472 = vpack.c.b16 %v2112, %v2100
        %v2473 = vpack.c.b16 %v2113, %v2101
        %v2474 = vpack.c.b16 %v2114, %v2102
        %v2475 = vpack.c.b16 %v2115, %v2103
        %v2476 = vpack.c.b16 %v2116, %v2104
        %v2477 = vpack.c.b16 %v2117, %v2105
        %v2478 = vpack.c.b16 %v2118, %v2106
        %v2479 = vpack.c.b16 %v2119, %v2107
        %v2480 = vpack.c.b16 %v2120, %v2108
        %v2481 = vpack.c.b16 %v2121, %v2109
        %v2482 = vpack.c.b16 %v2122, %v2110
        %v2483 = vpack.c.b16 %v2135, %v2123
        %v2484 = vpack.c.b16 %v2136, %v2124
        %v2485 = vpack.c.b16 %v2137, %v2125
        %v2486 = vpack.c.b16 %v2138, %v2126
        %v2487 = vpack.c.b16 %v2139, %v2127
        %v2488 = vpack.c.b16 %v2140, %v2128
        %v2489 = vpack.c.b16 %v2141, %v2129
        %v2490 = vpack.c.b16 %v2142, %v2130
        %v2491 = vpack.c.b16 %v2143, %v2131
        %v2492 = vpack.c.b16 %v2144, %v2132
        %v2493 = vpack.c.b16 %v2145, %v2133
        %v2494 = vpack.c.b16 %v2146, %v2134
        %v2495 = vpack.c.b16 %v2159, %v2147
        %v2496 = vpack.c.b16 %v2160, %v2148
        %v2497 = vpack.c.b16 %v2161, %v2149
        %v2498 = vpack.c.b16 %v2162, %v2150
        %v2499 = vpack.c.b16 %v2163, %v2151
        %v2500 = vpack.c.b16 %v2164, %v2152
        %v2501 = vpack.c.b16 %v2165, %v2153
        %v2502 = vpack.c.b16 %v2166, %v2154
        %v2503 = vpack.c.b16 %v2167, %v2155
        %v2504 = vpack.c.b16 %v2168, %v2156
        %v2505 = vpack.c.b16 %v2169, %v2157
        %v2506 = vpack.c.b16 %v2170, %v2158
        %v2507 = vpack.c.b16 %v2183, %v2171
        %v2508 = vpack.c.b16 %v2184, %v2172
        %v2509 = vpack.c.b16 %v2185, %v2173
        %v2510 = vpack.c.b16 %v2186, %v2174
        %v2511 = vpack.c.b16 %v2187, %v2175
        %v2512 = vpack.c.b16 %v2188, %v2176
        %v2513 = vpack.c.b16 %v2189, %v2177
        %v2514 = vpack.c.b16 %v2190, %v2178
        %v2515 = vpack.c.b16 %v2191, %v2179
        %v2516 = vpack.c.b16 %v2192, %v2180
        %v2517 = vpack.c.b16 %v2193, %v2181
        %v2518 = vpack.c.b16 %v2194, %v2182
        %vm2843 = vcmask 392192
        %v2844 = vsel %vm2843, %v1219, 0
        %2846 = vmatpush.bf16.msra.mxu0 %v2279
        %2847 = vmatpush.bf16.msra.mxu0 %v2267
        %2848 = vmatpush.bf16.msra.mxu0 %v2255
        %2849 = vmatpush.bf16.msra.mxu0 %v2243
        %2850 = vmatpush.bf16.msra.mxu0 %v2231
        %2851 = vmatpush.bf16.msra.mxu0 %v2219
        %2852 = vmatpush.bf16.msra.mxu0 %v2207
        %2853 = vmatpush.bf16.msra.mxu0 %v2195
        %2854 = vmatmul.bf16.gmra.mxu0 %v1216
        %v2855 = vpop.f32.mrf.mxu0
        %v2856 = vadd.f32 %v1212, %v2855
        %v2857 = vpop.f32.mrf.mxu0
        %2858 = vdwg.mxu0
        %2859 = vmatpush.bf16.msra.mxu0 %v2375
        %2860 = vmatpush.bf16.msra.mxu0 %v2363
        %2861 = vmatpush.bf16.msra.mxu0 %v2351
        %2862 = vmatpush.bf16.msra.mxu0 %v2339
        %2863 = vmatpush.bf16.msra.mxu0 %v2327
        %2864 = vmatpush.bf16.msra.mxu0 %v2315
        %2865 = vmatpush.bf16.msra.mxu0 %v2303
        %2866 = vmatpush.bf16.msra.mxu0 %v2291
        %2867 = vmatmul.bf16.gmra.mxu0 %v1217
        %v2868 = vpop.f32.mrf.mxu0
        %v2869 = vadd.f32 %v2856, %v2868
        %v2870 = vpop.f32.mrf.mxu0
        %2871 = vdwg.mxu0
        %2872 = vmatpush.bf16.msra.mxu0 %v2471
        %2873 = vmatpush.bf16.msra.mxu0 %v2459
        %2874 = vmatpush.bf16.msra.mxu0 %v2447
        %2875 = vmatpush.bf16.msra.mxu0 %v2435
        %2876 = vmatpush.bf16.msra.mxu0 %v2423
        %2877 = vmatpush.bf16.msra.mxu0 %v2411
        %2878 = vmatpush.bf16.msra.mxu0 %v2399
        %2879 = vmatpush.bf16.msra.mxu0 %v2387
        %2880 = vmatmul.bf16.gmra.mxu0 %v1218
        %v2881 = vpop.f32.mrf.mxu0
        %v2882 = vadd.f32 %v2869, %v2881
        %v2883 = vpop.f32.mrf.mxu0
        %2884 = vdwg.mxu0
        %2885 = vmatpush.bf16.msra.mxu0 0
        %2886 = vmatpush.bf16.msra.mxu0 0
        %2887 = vmatpush.bf16.msra.mxu0 0
        %2888 = vmatpush.bf16.msra.mxu0 0
        %2889 = vmatpush.bf16.msra.mxu0 0
        %2890 = vmatpush.bf16.msra.mxu0 %v2507
        %2891 = vmatpush.bf16.msra.mxu0 %v2495
        %2892 = vmatpush.bf16.msra.mxu0 %v2483
        %2893 = vmatmul.bf16.gmra.mxu0 %v2844
        %v2894 = vpop.f32.mrf.mxu0
        %v2895 = vadd.f32 %v2882, %v2894
        %v2896 = vpop.f32.mrf.mxu0
        %2897 = vdwg.mxu0
        %2898 = vmatpush.bf16.msra.mxu0 %v2280
        %2899 = vmatpush.bf16.msra.mxu0 %v2268
        %2900 = vmatpush.bf16.msra.mxu0 %v2256
        %2901 = vmatpush.bf16.msra.mxu0 %v2244
        %2902 = vmatpush.bf16.msra.mxu0 %v2232
        %2903 = vmatpush.bf16.msra.mxu0 %v2220
        %2904 = vmatpush.bf16.msra.mxu0 %v2208
        %2905 = vmatpush.bf16.msra.mxu0 %v2196
        %2906 = vmatmul.bf16.gmra.mxu0 %v1216
        %v2907 = vpop.f32.mrf.mxu0
        %v2908 = vadd.f32 %v1212, %v2907
        %v2909 = vpop.f32.mrf.mxu0
        %2910 = vdwg.mxu0
        %2911 = vmatpush.bf16.msra.mxu0 %v2376
        %2912 = vmatpush.bf16.msra.mxu0 %v2364
        %2913 = vmatpush.bf16.msra.mxu0 %v2352
        %2914 = vmatpush.bf16.msra.mxu0 %v2340
        %2915 = vmatpush.bf16.msra.mxu0 %v2328
        %2916 = vmatpush.bf16.msra.mxu0 %v2316
        %2917 = vmatpush.bf16.msra.mxu0 %v2304
        %2918 = vmatpush.bf16.msra.mxu0 %v2292
        %2919 = vmatmul.bf16.gmra.mxu0 %v1217
        %v2920 = vpop.f32.mrf.mxu0
        %v2921 = vadd.f32 %v2908, %v2920
        %v2922 = vpop.f32.mrf.mxu0
        %2923 = vdwg.mxu0
        %2924 = vmatpush.bf16.msra.mxu0 %v2472
        %2925 = vmatpush.bf16.msra.mxu0 %v2460
        %2926 = vmatpush.bf16.msra.mxu0 %v2448
        %2927 = vmatpush.bf16.msra.mxu0 %v2436
        %2928 = vmatpush.bf16.msra.mxu0 %v2424
        %2929 = vmatpush.bf16.msra.mxu0 %v2412
        %2930 = vmatpush.bf16.msra.mxu0 %v2400
        %2931 = vmatpush.bf16.msra.mxu0 %v2388
        %2932 = vmatmul.bf16.gmra.mxu0 %v1218
        %v2933 = vpop.f32.mrf.mxu0
        %v2934 = vadd.f32 %v2921, %v2933
        %v2935 = vpop.f32.mrf.mxu0
        %2936 = vdwg.mxu0
        %2937 = vmatpush.bf16.msra.mxu0 0
        %2938 = vmatpush.bf16.msra.mxu0 0
        %2939 = vmatpush.bf16.msra.mxu0 0
        %2940 = vmatpush.bf16.msra.mxu0 0
        %2941 = vmatpush.bf16.msra.mxu0 0
        %2942 = vmatpush.bf16.msra.mxu0 %v2508
        %2943 = vmatpush.bf16.msra.mxu0 %v2496
        %2944 = vmatpush.bf16.msra.mxu0 %v2484
        %2945 = vmatmul.bf16.gmra.mxu0 %v2844
        %v2946 = vpop.f32.mrf.mxu0
        %v2947 = vadd.f32 %v2934, %v2946
        %v2948 = vpop.f32.mrf.mxu0
        %2949 = vdwg.mxu0
        %2950 = vmatpush.bf16.msra.mxu0 %v2281
        %2951 = vmatpush.bf16.msra.mxu0 %v2269
        %2952 = vmatpush.bf16.msra.mxu0 %v2257
        %2953 = vmatpush.bf16.msra.mxu0 %v2245
        %2954 = vmatpush.bf16.msra.mxu0 %v2233
        %2955 = vmatpush.bf16.msra.mxu0 %v2221
        %2956 = vmatpush.bf16.msra.mxu0 %v2209
        %2957 = vmatpush.bf16.msra.mxu0 %v2197
        %2958 = vmatmul.bf16.gmra.mxu0 %v1216
        %v2959 = vpop.f32.mrf.mxu0
        %v2960 = vadd.f32 %v1212, %v2959
        %v2961 = vpop.f32.mrf.mxu0
        %2962 = vdwg.mxu0
        %2963 = vmatpush.bf16.msra.mxu0 %v2377
        %2964 = vmatpush.bf16.msra.mxu0 %v2365
        %2965 = vmatpush.bf16.msra.mxu0 %v2353
        %2966 = vmatpush.bf16.msra.mxu0 %v2341
        %2967 = vmatpush.bf16.msra.mxu0 %v2329
        %2968 = vmatpush.bf16.msra.mxu0 %v2317
        %2969 = vmatpush.bf16.msra.mxu0 %v2305
        %2970 = vmatpush.bf16.msra.mxu0 %v2293
        %2971 = vmatmul.bf16.gmra.mxu0 %v1217
        %v2972 = vpop.f32.mrf.mxu0
        %v2973 = vadd.f32 %v2960, %v2972
        %v2974 = vpop.f32.mrf.mxu0
        %2975 = vdwg.mxu0
        %2976 = vmatpush.bf16.msra.mxu0 %v2473
        %2977 = vmatpush.bf16.msra.mxu0 %v2461
        %2978 = vmatpush.bf16.msra.mxu0 %v2449
        %2979 = vmatpush.bf16.msra.mxu0 %v2437
        %2980 = vmatpush.bf16.msra.mxu0 %v2425
        %2981 = vmatpush.bf16.msra.mxu0 %v2413
        %2982 = vmatpush.bf16.msra.mxu0 %v2401
        %2983 = vmatpush.bf16.msra.mxu0 %v2389
        %2984 = vmatmul.bf16.gmra.mxu0 %v1218
        %v2985 = vpop.f32.mrf.mxu0
        %v2986 = vadd.f32 %v2973, %v2985
        %v2987 = vpop.f32.mrf.mxu0
        %2988 = vdwg.mxu0
        %2989 = vmatpush.bf16.msra.mxu0 0
        %2990 = vmatpush.bf16.msra.mxu0 0
        %2991 = vmatpush.bf16.msra.mxu0 0
        %2992 = vmatpush.bf16.msra.mxu0 0
        %2993 = vmatpush.bf16.msra.mxu0 0
        %2994 = vmatpush.bf16.msra.mxu0 %v2509
        %2995 = vmatpush.bf16.msra.mxu0 %v2497
        %2996 = vmatpush.bf16.msra.mxu0 %v2485
        %2997 = vmatmul.bf16.gmra.mxu0 %v2844
        %v2998 = vpop.f32.mrf.mxu0
        %v2999 = vadd.f32 %v2986, %v2998
        %v3000 = vpop.f32.mrf.mxu0
        %3001 = vdwg.mxu0
        %3002 = vmatpush.bf16.msra.mxu0 %v2282
        %3003 = vmatpush.bf16.msra.mxu0 %v2270
        %3004 = vmatpush.bf16.msra.mxu0 %v2258
        %3005 = vmatpush.bf16.msra.mxu0 %v2246
        %3006 = vmatpush.bf16.msra.mxu0 %v2234
        %3007 = vmatpush.bf16.msra.mxu0 %v2222
        %3008 = vmatpush.bf16.msra.mxu0 %v2210
        %3009 = vmatpush.bf16.msra.mxu0 %v2198
        %3010 = vmatmul.bf16.gmra.mxu0 %v1216
        %v3011 = vpop.f32.mrf.mxu0
        %v3012 = vadd.f32 %v1212, %v3011
        %v3013 = vpop.f32.mrf.mxu0
        %3014 = vdwg.mxu0
        %3015 = vmatpush.bf16.msra.mxu0 %v2378
        %3016 = vmatpush.bf16.msra.mxu0 %v2366
        %3017 = vmatpush.bf16.msra.mxu0 %v2354
        %3018 = vmatpush.bf16.msra.mxu0 %v2342
        %3019 = vmatpush.bf16.msra.mxu0 %v2330
        %3020 = vmatpush.bf16.msra.mxu0 %v2318
        %3021 = vmatpush.bf16.msra.mxu0 %v2306
        %3022 = vmatpush.bf16.msra.mxu0 %v2294
        %3023 = vmatmul.bf16.gmra.mxu0 %v1217
        %v3024 = vpop.f32.mrf.mxu0
        %v3025 = vadd.f32 %v3012, %v3024
        %v3026 = vpop.f32.mrf.mxu0
        %3027 = vdwg.mxu0
        %3028 = vmatpush.bf16.msra.mxu0 %v2474
        %3029 = vmatpush.bf16.msra.mxu0 %v2462
        %3030 = vmatpush.bf16.msra.mxu0 %v2450
        %3031 = vmatpush.bf16.msra.mxu0 %v2438
        %3032 = vmatpush.bf16.msra.mxu0 %v2426
        %3033 = vmatpush.bf16.msra.mxu0 %v2414
        %3034 = vmatpush.bf16.msra.mxu0 %v2402
        %3035 = vmatpush.bf16.msra.mxu0 %v2390
        %3036 = vmatmul.bf16.gmra.mxu0 %v1218
        %v3037 = vpop.f32.mrf.mxu0
        %v3038 = vadd.f32 %v3025, %v3037
        %v3039 = vpop.f32.mrf.mxu0
        %3040 = vdwg.mxu0
        %3041 = vmatpush.bf16.msra.mxu0 0
        %3042 = vmatpush.bf16.msra.mxu0 0
        %3043 = vmatpush.bf16.msra.mxu0 0
        %3044 = vmatpush.bf16.msra.mxu0 0
        %3045 = vmatpush.bf16.msra.mxu0 0
        %3046 = vmatpush.bf16.msra.mxu0 %v2510
        %3047 = vmatpush.bf16.msra.mxu0 %v2498
        %3048 = vmatpush.bf16.msra.mxu0 %v2486
        %3049 = vmatmul.bf16.gmra.mxu0 %v2844
        %v3050 = vpop.f32.mrf.mxu0
        %v3051 = vadd.f32 %v3038, %v3050
        %v3052 = vpop.f32.mrf.mxu0
        %3053 = vdwg.mxu0
        %3054 = vmatpush.bf16.msra.mxu0 %v2283
        %3055 = vmatpush.bf16.msra.mxu0 %v2271
        %3056 = vmatpush.bf16.msra.mxu0 %v2259
        %3057 = vmatpush.bf16.msra.mxu0 %v2247
        %3058 = vmatpush.bf16.msra.mxu0 %v2235
        %3059 = vmatpush.bf16.msra.mxu0 %v2223
        %3060 = vmatpush.bf16.msra.mxu0 %v2211
        %3061 = vmatpush.bf16.msra.mxu0 %v2199
        %3062 = vmatmul.bf16.gmra.mxu0 %v1216
        %v3063 = vpop.f32.mrf.mxu0
        %v3064 = vadd.f32 %v1212, %v3063
        %v3065 = vpop.f32.mrf.mxu0
        %3066 = vdwg.mxu0
        %3067 = vmatpush.bf16.msra.mxu0 %v2379
        %3068 = vmatpush.bf16.msra.mxu0 %v2367
        %3069 = vmatpush.bf16.msra.mxu0 %v2355
        %3070 = vmatpush.bf16.msra.mxu0 %v2343
        %3071 = vmatpush.bf16.msra.mxu0 %v2331
        %3072 = vmatpush.bf16.msra.mxu0 %v2319
        %3073 = vmatpush.bf16.msra.mxu0 %v2307
        %3074 = vmatpush.bf16.msra.mxu0 %v2295
        %3075 = vmatmul.bf16.gmra.mxu0 %v1217
        %v3076 = vpop.f32.mrf.mxu0
        %v3077 = vadd.f32 %v3064, %v3076
        %v3078 = vpop.f32.mrf.mxu0
        %3079 = vdwg.mxu0
        %3080 = vmatpush.bf16.msra.mxu0 %v2475
        %3081 = vmatpush.bf16.msra.mxu0 %v2463
        %3082 = vmatpush.bf16.msra.mxu0 %v2451
        %3083 = vmatpush.bf16.msra.mxu0 %v2439
        %3084 = vmatpush.bf16.msra.mxu0 %v2427
        %3085 = vmatpush.bf16.msra.mxu0 %v2415
        %3086 = vmatpush.bf16.msra.mxu0 %v2403
        %3087 = vmatpush.bf16.msra.mxu0 %v2391
        %3088 = vmatmul.bf16.gmra.mxu0 %v1218
        %v3089 = vpop.f32.mrf.mxu0
        %v3090 = vadd.f32 %v3077, %v3089
        %v3091 = vpop.f32.mrf.mxu0
        %3092 = vdwg.mxu0
        %3093 = vmatpush.bf16.msra.mxu0 0
        %3094 = vmatpush.bf16.msra.mxu0 0
        %3095 = vmatpush.bf16.msra.mxu0 0
        %3096 = vmatpush.bf16.msra.mxu0 0
        %3097 = vmatpush.bf16.msra.mxu0 0
        %3098 = vmatpush.bf16.msra.mxu0 %v2511
        %3099 = vmatpush.bf16.msra.mxu0 %v2499
        %3100 = vmatpush.bf16.msra.mxu0 %v2487
        %3101 = vmatmul.bf16.gmra.mxu0 %v2844
        %v3102 = vpop.f32.mrf.mxu0
        %v3103 = vadd.f32 %v3090, %v3102
        %v3104 = vpop.f32.mrf.mxu0
        %3105 = vdwg.mxu0
        %3106 = vmatpush.bf16.msra.mxu0 %v2284
        %3107 = vmatpush.bf16.msra.mxu0 %v2272
        %3108 = vmatpush.bf16.msra.mxu0 %v2260
        %3109 = vmatpush.bf16.msra.mxu0 %v2248
        %3110 = vmatpush.bf16.msra.mxu0 %v2236
        %3111 = vmatpush.bf16.msra.mxu0 %v2224
        %3112 = vmatpush.bf16.msra.mxu0 %v2212
        %3113 = vmatpush.bf16.msra.mxu0 %v2200
        %3114 = vmatmul.bf16.gmra.mxu0 %v1216
        %v3115 = vpop.f32.mrf.mxu0
        %v3116 = vadd.f32 %v1212, %v3115
        %v3117 = vpop.f32.mrf.mxu0
        %3118 = vdwg.mxu0
        %3119 = vmatpush.bf16.msra.mxu0 %v2380
        %3120 = vmatpush.bf16.msra.mxu0 %v2368
        %3121 = vmatpush.bf16.msra.mxu0 %v2356
        %3122 = vmatpush.bf16.msra.mxu0 %v2344
        %3123 = vmatpush.bf16.msra.mxu0 %v2332
        %3124 = vmatpush.bf16.msra.mxu0 %v2320
        %3125 = vmatpush.bf16.msra.mxu0 %v2308
        %3126 = vmatpush.bf16.msra.mxu0 %v2296
        %3127 = vmatmul.bf16.gmra.mxu0 %v1217
        %v3128 = vpop.f32.mrf.mxu0
        %v3129 = vadd.f32 %v3116, %v3128
        %v3130 = vpop.f32.mrf.mxu0
        %3131 = vdwg.mxu0
        %3132 = vmatpush.bf16.msra.mxu0 %v2476
        %3133 = vmatpush.bf16.msra.mxu0 %v2464
        %3134 = vmatpush.bf16.msra.mxu0 %v2452
        %3135 = vmatpush.bf16.msra.mxu0 %v2440
        %3136 = vmatpush.bf16.msra.mxu0 %v2428
        %3137 = vmatpush.bf16.msra.mxu0 %v2416
        %3138 = vmatpush.bf16.msra.mxu0 %v2404
        %3139 = vmatpush.bf16.msra.mxu0 %v2392
        %3140 = vmatmul.bf16.gmra.mxu0 %v1218
        %v3141 = vpop.f32.mrf.mxu0
        %v3142 = vadd.f32 %v3129, %v3141
        %v3143 = vpop.f32.mrf.mxu0
        %3144 = vdwg.mxu0
        %3145 = vmatpush.bf16.msra.mxu0 0
        %3146 = vmatpush.bf16.msra.mxu0 0
        %3147 = vmatpush.bf16.msra.mxu0 0
        %3148 = vmatpush.bf16.msra.mxu0 0
        %3149 = vmatpush.bf16.msra.mxu0 0
        %3150 = vmatpush.bf16.msra.mxu0 %v2512
        %3151 = vmatpush.bf16.msra.mxu0 %v2500
        %3152 = vmatpush.bf16.msra.mxu0 %v2488
        %3153 = vmatmul.bf16.gmra.mxu0 %v2844
        %v3154 = vpop.f32.mrf.mxu0
        %v3155 = vadd.f32 %v3142, %v3154
        %v3156 = vpop.f32.mrf.mxu0
        %3157 = vdwg.mxu0
        %3158 = vmatpush.bf16.msra.mxu0 %v2285
        %3159 = vmatpush.bf16.msra.mxu0 %v2273
        %3160 = vmatpush.bf16.msra.mxu0 %v2261
        %3161 = vmatpush.bf16.msra.mxu0 %v2249
        %3162 = vmatpush.bf16.msra.mxu0 %v2237
        %3163 = vmatpush.bf16.msra.mxu0 %v2225
        %3164 = vmatpush.bf16.msra.mxu0 %v2213
        %3165 = vmatpush.bf16.msra.mxu0 %v2201
        %3166 = vmatmul.bf16.gmra.mxu0 %v1216
        %v3167 = vpop.f32.mrf.mxu0
        %v3168 = vadd.f32 %v1212, %v3167
        %v3169 = vpop.f32.mrf.mxu0
        %3170 = vdwg.mxu0
        %3171 = vmatpush.bf16.msra.mxu0 %v2381
        %3172 = vmatpush.bf16.msra.mxu0 %v2369
        %3173 = vmatpush.bf16.msra.mxu0 %v2357
        %3174 = vmatpush.bf16.msra.mxu0 %v2345
        %3175 = vmatpush.bf16.msra.mxu0 %v2333
        %3176 = vmatpush.bf16.msra.mxu0 %v2321
        %3177 = vmatpush.bf16.msra.mxu0 %v2309
        %3178 = vmatpush.bf16.msra.mxu0 %v2297
        %3179 = vmatmul.bf16.gmra.mxu0 %v1217
        %v3180 = vpop.f32.mrf.mxu0
        %v3181 = vadd.f32 %v3168, %v3180
        %v3182 = vpop.f32.mrf.mxu0
        %3183 = vdwg.mxu0
        %3184 = vmatpush.bf16.msra.mxu0 %v2477
        %3185 = vmatpush.bf16.msra.mxu0 %v2465
        %3186 = vmatpush.bf16.msra.mxu0 %v2453
        %3187 = vmatpush.bf16.msra.mxu0 %v2441
        %3188 = vmatpush.bf16.msra.mxu0 %v2429
        %3189 = vmatpush.bf16.msra.mxu0 %v2417
        %3190 = vmatpush.bf16.msra.mxu0 %v2405
        %3191 = vmatpush.bf16.msra.mxu0 %v2393
        %3192 = vmatmul.bf16.gmra.mxu0 %v1218
        %v3193 = vpop.f32.mrf.mxu0
        %v3194 = vadd.f32 %v3181, %v3193
        %v3195 = vpop.f32.mrf.mxu0
        %3196 = vdwg.mxu0
        %3197 = vmatpush.bf16.msra.mxu0 0
        %3198 = vmatpush.bf16.msra.mxu0 0
        %3199 = vmatpush.bf16.msra.mxu0 0
        %3200 = vmatpush.bf16.msra.mxu0 0
        %3201 = vmatpush.bf16.msra.mxu0 0
        %3202 = vmatpush.bf16.msra.mxu0 %v2513
        %3203 = vmatpush.bf16.msra.mxu0 %v2501
        %3204 = vmatpush.bf16.msra.mxu0 %v2489
        %3205 = vmatmul.bf16.gmra.mxu0 %v2844
        %v3206 = vpop.f32.mrf.mxu0
        %v3207 = vadd.f32 %v3194, %v3206
        %v3208 = vpop.f32.mrf.mxu0
        %3209 = vdwg.mxu0
        %3210 = vmatpush.bf16.msra.mxu0 %v2286
        %3211 = vmatpush.bf16.msra.mxu0 %v2274
        %3212 = vmatpush.bf16.msra.mxu0 %v2262
        %3213 = vmatpush.bf16.msra.mxu0 %v2250
        %3214 = vmatpush.bf16.msra.mxu0 %v2238
        %3215 = vmatpush.bf16.msra.mxu0 %v2226
        %3216 = vmatpush.bf16.msra.mxu0 %v2214
        %3217 = vmatpush.bf16.msra.mxu0 %v2202
        %3218 = vmatmul.bf16.gmra.mxu0 %v1216
        %v3219 = vpop.f32.mrf.mxu0
        %v3220 = vadd.f32 %v1212, %v3219
        %v3221 = vpop.f32.mrf.mxu0
        %3222 = vdwg.mxu0
        %3223 = vmatpush.bf16.msra.mxu0 %v2382
        %3224 = vmatpush.bf16.msra.mxu0 %v2370
        %3225 = vmatpush.bf16.msra.mxu0 %v2358
        %3226 = vmatpush.bf16.msra.mxu0 %v2346
        %3227 = vmatpush.bf16.msra.mxu0 %v2334
        %3228 = vmatpush.bf16.msra.mxu0 %v2322
        %3229 = vmatpush.bf16.msra.mxu0 %v2310
        %3230 = vmatpush.bf16.msra.mxu0 %v2298
        %3231 = vmatmul.bf16.gmra.mxu0 %v1217
        %v3232 = vpop.f32.mrf.mxu0
        %v3233 = vadd.f32 %v3220, %v3232
        %v3234 = vpop.f32.mrf.mxu0
        %3235 = vdwg.mxu0
        %3236 = vmatpush.bf16.msra.mxu0 %v2478
        %3237 = vmatpush.bf16.msra.mxu0 %v2466
        %3238 = vmatpush.bf16.msra.mxu0 %v2454
        %3239 = vmatpush.bf16.msra.mxu0 %v2442
        %3240 = vmatpush.bf16.msra.mxu0 %v2430
        %3241 = vmatpush.bf16.msra.mxu0 %v2418
        %3242 = vmatpush.bf16.msra.mxu0 %v2406
        %3243 = vmatpush.bf16.msra.mxu0 %v2394
        %3244 = vmatmul.bf16.gmra.mxu0 %v1218
        %v3245 = vpop.f32.mrf.mxu0
        %v3246 = vadd.f32 %v3233, %v3245
        %v3247 = vpop.f32.mrf.mxu0
        %3248 = vdwg.mxu0
        %3249 = vmatpush.bf16.msra.mxu0 0
        %3250 = vmatpush.bf16.msra.mxu0 0
        %3251 = vmatpush.bf16.msra.mxu0 0
        %3252 = vmatpush.bf16.msra.mxu0 0
        %3253 = vmatpush.bf16.msra.mxu0 0
        %3254 = vmatpush.bf16.msra.mxu0 %v2514
        %3255 = vmatpush.bf16.msra.mxu0 %v2502
        %3256 = vmatpush.bf16.msra.mxu0 %v2490
        %3257 = vmatmul.bf16.gmra.mxu0 %v2844
        %v3258 = vpop.f32.mrf.mxu0
        %v3259 = vadd.f32 %v3246, %v3258
        %v3260 = vpop.f32.mrf.mxu0
        %3261 = vdwg.mxu0
        %3262 = vmatpush.bf16.msra.mxu0 %v2287
        %3263 = vmatpush.bf16.msra.mxu0 %v2275
        %3264 = vmatpush.bf16.msra.mxu0 %v2263
        %3265 = vmatpush.bf16.msra.mxu0 %v2251
        %3266 = vmatpush.bf16.msra.mxu0 %v2239
        %3267 = vmatpush.bf16.msra.mxu0 %v2227
        %3268 = vmatpush.bf16.msra.mxu0 %v2215
        %3269 = vmatpush.bf16.msra.mxu0 %v2203
        %3270 = vmatmul.bf16.gmra.mxu0 %v1216
        %v3271 = vpop.f32.mrf.mxu0
        %v3272 = vadd.f32 %v1212, %v3271
        %v3273 = vpop.f32.mrf.mxu0
        %3274 = vdwg.mxu0
        %3275 = vmatpush.bf16.msra.mxu0 %v2383
        %3276 = vmatpush.bf16.msra.mxu0 %v2371
        %3277 = vmatpush.bf16.msra.mxu0 %v2359
        %3278 = vmatpush.bf16.msra.mxu0 %v2347
        %3279 = vmatpush.bf16.msra.mxu0 %v2335
        %3280 = vmatpush.bf16.msra.mxu0 %v2323
        %3281 = vmatpush.bf16.msra.mxu0 %v2311
        %3282 = vmatpush.bf16.msra.mxu0 %v2299
        %3283 = vmatmul.bf16.gmra.mxu0 %v1217
        %v3284 = vpop.f32.mrf.mxu0
        %v3285 = vadd.f32 %v3272, %v3284
        %v3286 = vpop.f32.mrf.mxu0
        %3287 = vdwg.mxu0
        %3288 = vmatpush.bf16.msra.mxu0 %v2479
        %3289 = vmatpush.bf16.msra.mxu0 %v2467
        %3290 = vmatpush.bf16.msra.mxu0 %v2455
        %3291 = vmatpush.bf16.msra.mxu0 %v2443
        %3292 = vmatpush.bf16.msra.mxu0 %v2431
        %3293 = vmatpush.bf16.msra.mxu0 %v2419
        %3294 = vmatpush.bf16.msra.mxu0 %v2407
        %3295 = vmatpush.bf16.msra.mxu0 %v2395
        %3296 = vmatmul.bf16.gmra.mxu0 %v1218
        %v3297 = vpop.f32.mrf.mxu0
        %v3298 = vadd.f32 %v3285, %v3297
        %v3299 = vpop.f32.mrf.mxu0
        %3300 = vdwg.mxu0
        %3301 = vmatpush.bf16.msra.mxu0 0
        %3302 = vmatpush.bf16.msra.mxu0 0
        %3303 = vmatpush.bf16.msra.mxu0 0
        %3304 = vmatpush.bf16.msra.mxu0 0
        %3305 = vmatpush.bf16.msra.mxu0 0
        %3306 = vmatpush.bf16.msra.mxu0 %v2515
        %3307 = vmatpush.bf16.msra.mxu0 %v2503
        %3308 = vmatpush.bf16.msra.mxu0 %v2491
        %3309 = vmatmul.bf16.gmra.mxu0 %v2844
        %v3310 = vpop.f32.mrf.mxu0
        %v3311 = vadd.f32 %v3298, %v3310
        %v3312 = vpop.f32.mrf.mxu0
        %3313 = vdwg.mxu0
        %3314 = vmatpush.bf16.msra.mxu0 %v2288
        %3315 = vmatpush.bf16.msra.mxu0 %v2276
        %3316 = vmatpush.bf16.msra.mxu0 %v2264
        %3317 = vmatpush.bf16.msra.mxu0 %v2252
        %3318 = vmatpush.bf16.msra.mxu0 %v2240
        %3319 = vmatpush.bf16.msra.mxu0 %v2228
        %3320 = vmatpush.bf16.msra.mxu0 %v2216
        %3321 = vmatpush.bf16.msra.mxu0 %v2204
        %3322 = vmatmul.bf16.gmra.mxu0 %v1216
        %v3323 = vpop.f32.mrf.mxu0
        %v3324 = vadd.f32 %v1212, %v3323
        %v3325 = vpop.f32.mrf.mxu0
        %3326 = vdwg.mxu0
        %3327 = vmatpush.bf16.msra.mxu0 %v2384
        %3328 = vmatpush.bf16.msra.mxu0 %v2372
        %3329 = vmatpush.bf16.msra.mxu0 %v2360
        %3330 = vmatpush.bf16.msra.mxu0 %v2348
        %3331 = vmatpush.bf16.msra.mxu0 %v2336
        %3332 = vmatpush.bf16.msra.mxu0 %v2324
        %3333 = vmatpush.bf16.msra.mxu0 %v2312
        %3334 = vmatpush.bf16.msra.mxu0 %v2300
        %3335 = vmatmul.bf16.gmra.mxu0 %v1217
        %v3336 = vpop.f32.mrf.mxu0
        %v3337 = vadd.f32 %v3324, %v3336
        %v3338 = vpop.f32.mrf.mxu0
        %3339 = vdwg.mxu0
        %3340 = vmatpush.bf16.msra.mxu0 %v2480
        %3341 = vmatpush.bf16.msra.mxu0 %v2468
        %3342 = vmatpush.bf16.msra.mxu0 %v2456
        %3343 = vmatpush.bf16.msra.mxu0 %v2444
        %3344 = vmatpush.bf16.msra.mxu0 %v2432
        %3345 = vmatpush.bf16.msra.mxu0 %v2420
        %3346 = vmatpush.bf16.msra.mxu0 %v2408
        %3347 = vmatpush.bf16.msra.mxu0 %v2396
        %3348 = vmatmul.bf16.gmra.mxu0 %v1218
        %v3349 = vpop.f32.mrf.mxu0
        %v3350 = vadd.f32 %v3337, %v3349
        %v3351 = vpop.f32.mrf.mxu0
        %3352 = vdwg.mxu0
        %3353 = vmatpush.bf16.msra.mxu0 0
        %3354 = vmatpush.bf16.msra.mxu0 0
        %3355 = vmatpush.bf16.msra.mxu0 0
        %3356 = vmatpush.bf16.msra.mxu0 0
        %3357 = vmatpush.bf16.msra.mxu0 0
        %3358 = vmatpush.bf16.msra.mxu0 %v2516
        %3359 = vmatpush.bf16.msra.mxu0 %v2504
        %3360 = vmatpush.bf16.msra.mxu0 %v2492
        %3361 = vmatmul.bf16.gmra.mxu0 %v2844
        %v3362 = vpop.f32.mrf.mxu0
        %v3363 = vadd.f32 %v3350, %v3362
        %v3364 = vpop.f32.mrf.mxu0
        %3365 = vdwg.mxu0
        %3366 = vmatpush.bf16.msra.mxu0 %v2289
        %3367 = vmatpush.bf16.msra.mxu0 %v2277
        %3368 = vmatpush.bf16.msra.mxu0 %v2265
        %3369 = vmatpush.bf16.msra.mxu0 %v2253
        %3370 = vmatpush.bf16.msra.mxu0 %v2241
        %3371 = vmatpush.bf16.msra.mxu0 %v2229
        %3372 = vmatpush.bf16.msra.mxu0 %v2217
        %3373 = vmatpush.bf16.msra.mxu0 %v2205
        %3374 = vmatmul.bf16.gmra.mxu0 %v1216
        %v3375 = vpop.f32.mrf.mxu0
        %v3376 = vadd.f32 %v1212, %v3375
        %v3377 = vpop.f32.mrf.mxu0
        %3378 = vdwg.mxu0
        %3379 = vmatpush.bf16.msra.mxu0 %v2385
        %3380 = vmatpush.bf16.msra.mxu0 %v2373
        %3381 = vmatpush.bf16.msra.mxu0 %v2361
        %3382 = vmatpush.bf16.msra.mxu0 %v2349
        %3383 = vmatpush.bf16.msra.mxu0 %v2337
        %3384 = vmatpush.bf16.msra.mxu0 %v2325
        %3385 = vmatpush.bf16.msra.mxu0 %v2313
        %3386 = vmatpush.bf16.msra.mxu0 %v2301
        %3387 = vmatmul.bf16.gmra.mxu0 %v1217
        %v3388 = vpop.f32.mrf.mxu0
        %v3389 = vadd.f32 %v3376, %v3388
        %v3390 = vpop.f32.mrf.mxu0
        %3391 = vdwg.mxu0
        %3392 = vmatpush.bf16.msra.mxu0 %v2481
        %3393 = vmatpush.bf16.msra.mxu0 %v2469
        %3394 = vmatpush.bf16.msra.mxu0 %v2457
        %3395 = vmatpush.bf16.msra.mxu0 %v2445
        %3396 = vmatpush.bf16.msra.mxu0 %v2433
        %3397 = vmatpush.bf16.msra.mxu0 %v2421
        %3398 = vmatpush.bf16.msra.mxu0 %v2409
        %3399 = vmatpush.bf16.msra.mxu0 %v2397
        %3400 = vmatmul.bf16.gmra.mxu0 %v1218
        %v3401 = vpop.f32.mrf.mxu0
        %v3402 = vadd.f32 %v3389, %v3401
        %v3403 = vpop.f32.mrf.mxu0
        %3404 = vdwg.mxu0
        %3405 = vmatpush.bf16.msra.mxu0 0
        %3406 = vmatpush.bf16.msra.mxu0 0
        %3407 = vmatpush.bf16.msra.mxu0 0
        %3408 = vmatpush.bf16.msra.mxu0 0
        %3409 = vmatpush.bf16.msra.mxu0 0
        %3410 = vmatpush.bf16.msra.mxu0 %v2517
        %3411 = vmatpush.bf16.msra.mxu0 %v2505
        %3412 = vmatpush.bf16.msra.mxu0 %v2493
        %3413 = vmatmul.bf16.gmra.mxu0 %v2844
        %v3414 = vpop.f32.mrf.mxu0
        %v3415 = vadd.f32 %v3402, %v3414
        %v3416 = vpop.f32.mrf.mxu0
        %3417 = vdwg.mxu0
        %3418 = vmatpush.bf16.msra.mxu0 %v2290
        %3419 = vmatpush.bf16.msra.mxu0 %v2278
        %3420 = vmatpush.bf16.msra.mxu0 %v2266
        %3421 = vmatpush.bf16.msra.mxu0 %v2254
        %3422 = vmatpush.bf16.msra.mxu0 %v2242
        %3423 = vmatpush.bf16.msra.mxu0 %v2230
        %3424 = vmatpush.bf16.msra.mxu0 %v2218
        %3425 = vmatpush.bf16.msra.mxu0 %v2206
        %3426 = vmatmul.bf16.gmra.mxu0 %v1216
        %v3427 = vpop.f32.mrf.mxu0
        %v3428 = vadd.f32 %v1212, %v3427
        %v3429 = vpop.f32.mrf.mxu0
        %3430 = vdwg.mxu0
        %3431 = vmatpush.bf16.msra.mxu0 %v2386
        %3432 = vmatpush.bf16.msra.mxu0 %v2374
        %3433 = vmatpush.bf16.msra.mxu0 %v2362
        %3434 = vmatpush.bf16.msra.mxu0 %v2350
        %3435 = vmatpush.bf16.msra.mxu0 %v2338
        %3436 = vmatpush.bf16.msra.mxu0 %v2326
        %3437 = vmatpush.bf16.msra.mxu0 %v2314
        %3438 = vmatpush.bf16.msra.mxu0 %v2302
        %3439 = vmatmul.bf16.gmra.mxu0 %v1217
        %v3440 = vpop.f32.mrf.mxu0
        %v3441 = vadd.f32 %v3428, %v3440
        %v3442 = vpop.f32.mrf.mxu0
        %3443 = vdwg.mxu0
        %3444 = vmatpush.bf16.msra.mxu0 %v2482
        %3445 = vmatpush.bf16.msra.mxu0 %v2470
        %3446 = vmatpush.bf16.msra.mxu0 %v2458
        %3447 = vmatpush.bf16.msra.mxu0 %v2446
        %3448 = vmatpush.bf16.msra.mxu0 %v2434
        %3449 = vmatpush.bf16.msra.mxu0 %v2422
        %3450 = vmatpush.bf16.msra.mxu0 %v2410
        %3451 = vmatpush.bf16.msra.mxu0 %v2398
        %3452 = vmatmul.bf16.gmra.mxu0 %v1218
        %v3453 = vpop.f32.mrf.mxu0
        %v3454 = vadd.f32 %v3441, %v3453
        %v3455 = vpop.f32.mrf.mxu0
        %3456 = vdwg.mxu0
        %3457 = vmatpush.bf16.msra.mxu0 0
        %3458 = vmatpush.bf16.msra.mxu0 0
        %3459 = vmatpush.bf16.msra.mxu0 0
        %3460 = vmatpush.bf16.msra.mxu0 0
        %3461 = vmatpush.bf16.msra.mxu0 0
        %3462 = vmatpush.bf16.msra.mxu0 %v2518
        %3463 = vmatpush.bf16.msra.mxu0 %v2506
        %3464 = vmatpush.bf16.msra.mxu0 %v2494
        %3465 = vmatmul.bf16.gmra.mxu0 %v2844
        %v3466 = vpop.f32.mrf.mxu0
        %v3467 = vadd.f32 %v3454, %v3466
        %v3468 = vpop.f32.mrf.mxu0
        %3469 = vdwg.mxu0
        %v3482 = vrot.slane %v2947, 4
        %v3483 = vrot.slane %v3051, 4
        %v3484 = vrot.slane %v3155, 4
        %v3485 = vrot.slane %v3259, 4
        %v3486 = vrot.slane %v3363, 4
        %v3487 = vrot.slane %v3467, 4
        %vm3488 = vcmask 1043456
        %v3489 = vsel %vm3488, %v2895, %v3482
        %v3490 = vsel %vm3488, %v2999, %v3483
        %v3491 = vsel %vm3488, %v3103, %v3484
        %v3492 = vsel %vm3488, %v3207, %v3485
        %v3493 = vsel %vm3488, %v3311, %v3486
        %v3494 = vsel %vm3488, %v3415, %v3487
        %3501 = vst [vmem:[%s880] sm:$0xff] %v3489
        %3502 = vst [vmem:[%s880 + $0x8] sm:$0xff] %v3490
        %3503 = vst [vmem:[%s880 + $0x10] sm:$0xff] %v3491
        %3504 = vst [vmem:[%s880 + $0x18] sm:$0xff] %v3492
        %3505 = vst [vmem:[%s880 + $0x20] sm:$0xff] %v3493
        %3506 = vst [vmem:[%s880 + $0x28] sm:$0xff] %v3494
        %s3507 = smul.u32 12, %s19
        %p3508 = scmp.lt.s32.totalorder %s18, 1
        %s3509 = scalar_select %p3508, %s18, 1
        %p3510 = scmp.lt.s32.totalorder %s3507, 23
        %s3511 = scalar_select %p3510, %s3507, 23
        %s3512 = smul.addr %s3509, 24
        %s3513 = sadd.s32 %s3511, %s3512
        %s3514 = smul.addr %s3513, 4
        %s3515 = scalar_lea.vmem %s3, %s3514
        // Predicated region
        $region56: #{aspp_pallas.1} parent=50 // pred_check
          %p3516 = pneg %p121
        $region57: #{aspp_pallas.1} parent=50 // pred_check_branch
          %3518 = sbr.rel (%p3516) target = $region59
        $region58: #{aspp_pallas.1} parent=50 // pred_region
          %s3519 = smul.u32 12, %s19
        $region59: #{aspp_pallas.1} parent=50 // pred_fallthru
          _
      $region51: #{aspp_pallas.1} parent=5 // pred_fallthru
        _
      %p3520 = scmp.le.s32.totalorder 2, %s9
      // Predicated region
      $region60: #{aspp_pallas.1} parent=5 // pred_check
        %p3521 = pneg %p3520
      $region61: #{aspp_pallas.1} parent=5 // pred_check_branch
        %3523 = sbr.rel (%p3521) target = $region63
      $region62: #{aspp_pallas.1} parent=5 // pred_region
        %s3524 = ssub.s32 %s9, 2
        // Predicated region
        $region64: #{aspp_pallas.1} parent=62 // pred_check
          %p3525 = pneg %p127
        $region65: #{aspp_pallas.1} parent=62 // pred_check_branch
          %3527 = sbr.rel (%p3525) target = $region67
        $region66: #{aspp_pallas.1} parent=62 // pred_region
          %s3528 = smul.u32 12, %s21
          %p3529 = scmp.lt.s32.totalorder %s20, 1
          %s3530 = scalar_select %p3529, %s20, 1
          %p3531 = scmp.lt.s32.totalorder %s3528, 23
          %s3532 = scalar_select %p3531, %s3528, 23
          %s3533 = smul.addr %s3530, 24
          %s3534 = sadd.s32 %s3532, %s3533
          %s3535 = smul.addr %s3534, 4
          %s3536 = scalar_lea.vmem %s3, %s3535
        $region67: #{aspp_pallas.1} parent=62 // pred_fallthru
          _
      $region63: #{aspp_pallas.1} parent=5 // pred_fallthru
        _
    $region6: #{aspp_pallas.1} parent=1 // loop_footer
      %s13 = sadd.s32 1, %s9
    $region7: #{aspp_pallas.1} parent=1 // loop_footer_branch
      %8 = sbr.rel target = $region3
    $region8: #{aspp_pallas.1} parent=1 // loop_exit
      _

</llo_original>
